<compile_context>
chip_gen: v5e
topology: v5e:2x2
jax: 0.10.0
libtpu: 0.0.40
codegen_flags: <defaults>
</compile_context>

<pallas_src>
import functools
import math

import jax
import jax.numpy as jnp
from jax.experimental import pallas as pl
from jax.experimental.pallas import tpu as pltpu


# ----------------------------------------------------------------------------
# In-kernel building blocks (operate on loaded f32 arrays)
# ----------------------------------------------------------------------------
def _gelu(x):
    # tanh-approx GELU (EUP tanh)
    return 0.5 * x * (1.0 + jnp.tanh(0.7978845608028654 *
                                     (x + 0.044715 * x * x * x)))


def _layernorm(v, g, b):
    mean = jnp.mean(v, axis=-1, keepdims=True)
    c = v - mean
    var = jnp.mean(c * c, axis=-1, keepdims=True)
    return c * jax.lax.rsqrt(var + 1e-5) * g + b


def _attn_core(Q3, K3, V3, num_heads, qk_dim, v_dim):
    """Per-head attention; returns ctx (B*Lq, v_dim).

    Heads are a short static Python loop (Mosaic dot_general does not reliably
    support two batch dims); each head is one B-batched einsum.  Head contexts
    are concatenated once so the wo projection is a single K=v_dim matmul.
    """
    B, Lq, _ = Q3.shape
    hq = qk_dim // num_heads
    hv = v_dim // num_heads
    ctx_heads = []
    for h in range(num_heads):
        s = jnp.einsum("bqd,bkd->bqk",
                       Q3[:, :, h * hq:(h + 1) * hq],
                       K3[:, :, h * hq:(h + 1) * hq],
                       preferred_element_type=jnp.float32)
        s = s - jnp.max(s, axis=-1, keepdims=True)
        e = jnp.exp(s)
        p = e * pl.reciprocal(jnp.sum(e, axis=-1, keepdims=True), approx=True)
        ctx_heads.append(jnp.einsum("bqk,bkd->bqd", p,
                                    V3[:, :, h * hv:(h + 1) * hv],
                                    preferred_element_type=jnp.float32))
    ctx = ctx_heads[0] if num_heads == 1 else jnp.concatenate(ctx_heads, axis=-1)
    return ctx.reshape(B * Lq, v_dim)


def _post_attention(resid2, ctx2, wo, w1, w2, vecs, q_dim, ff_dim):
    """wo projection -> residual+LN -> FFN(GELU) -> residual+LN (2D rows)."""
    bo = vecs[1:2, :q_dim]
    ln1_g = vecs[2:3, :q_dim]
    ln1_b = vecs[3:4, :q_dim]
    b1 = vecs[4:5, :ff_dim]
    b2 = vecs[5:6, :q_dim]
    ln2_g = vecs[6:7, :q_dim]
    ln2_b = vecs[7:8, :q_dim]
    attn = jnp.dot(ctx2, wo, preferred_element_type=jnp.float32) + bo
    x1 = _layernorm(resid2 + attn, ln1_g, ln1_b)
    h = _gelu(jnp.dot(x1, w1, preferred_element_type=jnp.float32) + b1)
    f = jnp.dot(h, w2, preferred_element_type=jnp.float32) + b2
    return _layernorm(x1 + f, ln2_g, ln2_b)


def _cross_block(q2, kv3, wq, wkv, wo, w1, w2, vecs, num_heads, qk_dim, v_dim):
    """Cross-attention block.  q2 is the UN-broadcast (Lq, Dq) query."""
    Lq, Dq = q2.shape
    B, Lkv, Dkv = kv3.shape
    ff_dim = w1.shape[1]
    kv_width = qk_dim + v_dim

    # project the shared query once, broadcast across batch afterwards
    Q = jnp.dot(q2, wq, preferred_element_type=jnp.float32) + vecs[0:1, :qk_dim]
    Q3 = jnp.broadcast_to(Q[None], (B, Lq, qk_dim))
    # fused K|V projection
    KV = (jnp.dot(kv3.reshape(B * Lkv, Dkv), wkv,
                  preferred_element_type=jnp.float32)
          + vecs[0:1, qk_dim:qk_dim + kv_width])
    KV3 = KV.reshape(B, Lkv, kv_width)

    ctx2 = _attn_core(Q3, KV3[:, :, :qk_dim], KV3[:, :, qk_dim:],
                      num_heads, qk_dim, v_dim)
    resid2 = jnp.broadcast_to(q2[None], (B, Lq, Dq)).reshape(B * Lq, Dq)
    return _post_attention(resid2, ctx2, wo, w1, w2, vecs, Dq, ff_dim)


def _self_block(x3, wqkv, wo, w1, w2, vecs, num_heads, qk_dim, v_dim):
    """Self-attention block with fused Q|K|V projection."""
    B, L, D = x3.shape
    ff_dim = w1.shape[1]
    width = 2 * qk_dim + v_dim
    x2 = x3.reshape(B * L, D)
    QKV = (jnp.dot(x2, wqkv, preferred_element_type=jnp.float32)
           + vecs[0:1, :width])
    QKV3 = QKV.reshape(B, L, width)
    ctx2 = _attn_core(QKV3[:, :, :qk_dim],
                      QKV3[:, :, qk_dim:2 * qk_dim],
                      QKV3[:, :, 2 * qk_dim:],
                      num_heads, qk_dim, v_dim)
    out2 = _post_attention(x2, ctx2, wo, w1, w2, vecs, D, ff_dim)
    return out2.reshape(B, L, D)


# ----------------------------------------------------------------------------
# One fused Pallas kernel: encoder -> latent stack -> decoder -> projection
# ----------------------------------------------------------------------------
def _perceiver_kernel(x_ref, lq_ref, oq_ref,
                      e_wq_ref, e_wkv_ref, e_wo_ref, e_w1_ref, e_w2_ref, e_vec_ref,
                      l_wqkv_ref, l_wo_ref, l_w1_ref, l_w2_ref, l_vec_ref,
                      d_wq_ref, d_wkv_ref, d_wo_ref, d_w1_ref, d_w2_ref, d_vec_ref,
                      out_w_ref, out_ref,
                      *, num_cross_heads, num_latent_heads, num_latent_block,
                      qk_dim, v_dim):
    x = x_ref[...]
    lq = lq_ref[...]
    oq = oq_ref[...]
    B = x.shape[0]
    q_length, qlatent_dim = lq.shape

    # ---- encoder: latents cross-attend to the input ----
    enc2 = _cross_block(lq, x,
                        e_wq_ref[...], e_wkv_ref[...], e_wo_ref[...],
                        e_w1_ref[...], e_w2_ref[...], e_vec_ref[...],
                        num_cross_heads, qk_dim, v_dim)
    lat3 = enc2.reshape(B, q_length, qlatent_dim)

    # ---- weight-shared latent transformer stack: rolled in-kernel loop ----
    l_wqkv = l_wqkv_ref[...]
    l_wo = l_wo_ref[...]
    l_w1 = l_w1_ref[...]
    l_w2 = l_w2_ref[...]
    l_vec = l_vec_ref[...]

    def latent_body(_, cur):
        return _self_block(cur, l_wqkv, l_wo, l_w1, l_w2, l_vec,
                           num_latent_heads, qk_dim, v_dim)

    lat3 = jax.lax.fori_loop(0, num_latent_block, latent_body, lat3)

    # ---- decoder: output queries cross-attend to latents + final proj ----
    d_vec = d_vec_ref[...]
    dec2 = _cross_block(oq, lat3,
                        d_wq_ref[...], d_wkv_ref[...], d_wo_ref[...],
                        d_w1_ref[...], d_w2_ref[...], d_vec,
                        num_cross_heads, qk_dim, v_dim)
    out_w = out_w_ref[...]
    out_b = d_vec[8:9, :out_w.shape[1]]
    out_ref[...] = (jnp.dot(dec2, out_w, preferred_element_type=jnp.float32)
                    + out_b)


# ----------------------------------------------------------------------------
# Parameter construction (deterministic, synthetic) with wrapper-side packing
# ----------------------------------------------------------------------------
def init_perceiver_io(key, *, in_dim, qlatent_dim, q_length, qout_dim,
                      qout_length, qk_dim, v_dim, out_dim, dim_feedforward,
                      num_cross_heads, num_latent_heads):
    ks = jax.random.split(key, 6)
    s = 0.02
    vec_width = max(2 * qk_dim + v_dim, qlatent_dim, qout_dim,
                    dim_feedforward, out_dim)

    def _raw(k, q_dim, kv_dim):
        ka = jax.random.split(k, 6)
        return dict(
            wq=s * jax.random.normal(ka[0], (q_dim, qk_dim), jnp.float32),
            bq=jnp.zeros((qk_dim,), jnp.float32),
            wk=s * jax.random.normal(ka[1], (kv_dim, qk_dim), jnp.float32),
            bk=jnp.zeros((qk_dim,), jnp.float32),
            wv=s * jax.random.normal(ka[2], (kv_dim, v_dim), jnp.float32),
            bv=jnp.zeros((v_dim,), jnp.float32),
            wo=s * jax.random.normal(ka[3], (v_dim, q_dim), jnp.float32),
            bo=jnp.zeros((q_dim,), jnp.float32),
            w1=s * jax.random.normal(ka[4], (q_dim, dim_feedforward), jnp.float32),
            b1=jnp.zeros((dim_feedforward,), jnp.float32),
            w2=s * jax.random.normal(ka[5], (dim_feedforward, q_dim), jnp.float32),
            b2=jnp.zeros((q_dim,), jnp.float32),
            ln1_g=jnp.ones((q_dim,), jnp.float32),
            ln1_b=jnp.zeros((q_dim,), jnp.float32),
            ln2_g=jnp.ones((q_dim,), jnp.float32),
            ln2_b=jnp.zeros((q_dim,), jnp.float32),
        )

    def _pack_vecs(r, q_scale, extra_rows=()):
        # row 0: [bq*scale | bk | bv]; rows 1..7: bo, ln1_g, ln1_b, b1, b2,
        # ln2_g, ln2_b; optional extra rows (decoder: out_b).  Zero padded.
        rows = [jnp.concatenate([r["bq"] * q_scale, r["bk"], r["bv"]]),
                r["bo"], r["ln1_g"], r["ln1_b"], r["b1"], r["b2"],
                r["ln2_g"], r["ln2_b"], *extra_rows]
        packed = jnp.zeros((len(rows), vec_width), jnp.float32)
        for i, v in enumerate(rows):
            packed = packed.at[i, :v.shape[0]].set(v)
        return packed

    def _cross(k, q_dim, kv_dim, num_heads, extra_rows=()):
        q_scale = 1.0 / math.sqrt(qk_dim // num_heads)  # softmax scale folded
        r = _raw(k, q_dim, kv_dim)
        return dict(
            wq=r["wq"] * q_scale,
            wkv=jnp.concatenate([r["wk"], r["wv"]], axis=1),
            wo=r["wo"], w1=r["w1"], w2=r["w2"],
            vec=_pack_vecs(r, q_scale, extra_rows))

    def _self(k, q_dim, num_heads):
        q_scale = 1.0 / math.sqrt(qk_dim // num_heads)
        r = _raw(k, q_dim, q_dim)
        return dict(
            wqkv=jnp.concatenate([r["wq"] * q_scale, r["wk"], r["wv"]], axis=1),
            wo=r["wo"], w1=r["w1"], w2=r["w2"],
            vec=_pack_vecs(r, q_scale))

    out_b = jnp.zeros((out_dim,), jnp.float32)
    return {
        "latent_q": jax.random.normal(ks[0], (q_length, qlatent_dim), jnp.float32),
        "output_q": jax.random.normal(ks[1], (qout_length, qout_dim), jnp.float32),
        "enc": _cross(ks[2], qlatent_dim, in_dim, num_cross_heads),
        "lat": _self(ks[3], qlatent_dim, num_latent_heads),
        "dec": _cross(ks[4], qout_dim, qlatent_dim, num_cross_heads,
                      extra_rows=(out_b,)),
        "out_w": s * jax.random.normal(ks[5], (qout_dim, out_dim), jnp.float32),
    }


# ----------------------------------------------------------------------------
# Forward pass: one fused pallas_call
# ----------------------------------------------------------------------------
def perceiver_io_forward(params, x, *, num_cross_heads, num_latent_heads,
                         num_latent_block):
    B = x.shape[0]
    qout_length, _ = params["output_q"].shape
    out_dim = params["out_w"].shape[1]
    qk_dim = params["enc"]["wq"].shape[1]
    v_dim = params["enc"]["wkv"].shape[1] - qk_dim

    enc, lat, dec = params["enc"], params["lat"], params["dec"]
    inputs = (
        x, params["latent_q"], params["output_q"],
        enc["wq"], enc["wkv"], enc["wo"], enc["w1"], enc["w2"], enc["vec"],
        lat["wqkv"], lat["wo"], lat["w1"], lat["w2"], lat["vec"],
        dec["wq"], dec["wkv"], dec["wo"], dec["w1"], dec["w2"], dec["vec"],
        params["out_w"],
    )
    kernel = functools.partial(
        _perceiver_kernel,
        num_cross_heads=num_cross_heads, num_latent_heads=num_latent_heads,
        num_latent_block=num_latent_block, qk_dim=qk_dim, v_dim=v_dim)

    out2 = pl.pallas_call(
        kernel,
        out_shape=jax.ShapeDtypeStruct((B * qout_length, out_dim), jnp.float32),
        in_specs=[pl.BlockSpec(memory_space=pltpu.MemorySpace.VMEM)] * len(inputs),
        out_specs=pl.BlockSpec(memory_space=pltpu.MemorySpace.VMEM),
    )(*inputs)
    return out2.reshape(B, qout_length, out_dim)


# ----------------------------------------------------------------------------
# Pure-JAX reference (same packed params) for numeric validation
# ----------------------------------------------------------------------------
def _reference_forward(params, x, *, num_cross_heads, num_latent_heads,
                       num_latent_block):
    qk_dim = params["enc"]["wq"].shape[1]
    v_dim = params["enc"]["wkv"].shape[1] - qk_dim

    def layernorm(v, g, b):
        m = jnp.mean(v, -1, keepdims=True)
        c = v - m
        return c / jnp.sqrt(jnp.mean(c * c, -1, keepdims=True) + 1e-5) * g + b

    def gelu(v):
        return 0.5 * v * (1.0 + jnp.tanh(0.7978845608028654 *
                                         (v + 0.044715 * v ** 3)))

    def attn_core(Q3, K3, V3, H):
        hq, hv = qk_dim // H, v_dim // H
        ctx = []
        for h in range(H):
            s = jnp.einsum("bqd,bkd->bqk", Q3[..., h * hq:(h + 1) * hq],
                           K3[..., h * hq:(h + 1) * hq])
            p = jax.nn.softmax(s, axis=-1)
            ctx.append(jnp.einsum("bqk,bkd->bqd", p, V3[..., h * hv:(h + 1) * hv]))
        return jnp.concatenate(ctx, -1)

    def post(resid3, ctx3, blk, q_dim, ff):
        v = blk["vec"]
        attn = ctx3 @ blk["wo"] + v[1, :q_dim]
        x1 = layernorm(resid3 + attn, v[2, :q_dim], v[3, :q_dim])
        hdn = gelu(x1 @ blk["w1"] + v[4, :ff])
        f = hdn @ blk["w2"] + v[5, :q_dim]
        return layernorm(x1 + f, v[6, :q_dim], v[7, :q_dim])

    def cross(q2, kv3, blk, H):
        B = kv3.shape[0]
        Lq, q_dim = q2.shape
        ff = blk["w1"].shape[1]
        v = blk["vec"]
        Q = q2 @ blk["wq"] + v[0, :qk_dim]
        KV = kv3 @ blk["wkv"] + v[0, qk_dim:2 * qk_dim + v_dim]
        Q3 = jnp.broadcast_to(Q[None], (B, Lq, qk_dim))
        ctx = attn_core(Q3, KV[..., :qk_dim], KV[..., qk_dim:], H)
        resid = jnp.broadcast_to(q2[None], (B, Lq, q_dim))
        return post(resid, ctx, blk, q_dim, ff)

    def selfb(x3, blk, H):
        q_dim = x3.shape[-1]
        ff = blk["w1"].shape[1]
        v = blk["vec"]
        QKV = x3 @ blk["wqkv"] + v[0, :2 * qk_dim + v_dim]
        ctx = attn_core(QKV[..., :qk_dim], QKV[..., qk_dim:2 * qk_dim],
                        QKV[..., 2 * qk_dim:], H)
        return post(x3, ctx, blk, q_dim, ff)

    lat = cross(params["latent_q"], x, params["enc"], num_cross_heads)
    for _ in range(num_latent_block):
        lat = selfb(lat, params["lat"], num_latent_heads)
    dec = cross(params["output_q"], lat, params["dec"], num_cross_heads)
    out_dim = params["out_w"].shape[1]
    return dec @ params["out_w"] + params["dec"]["vec"][8, :out_dim]


# ----------------------------------------------------------------------------
if __name__ == "__main__":
    # model hyper-parameters (small, consistent with the module signature)
    num_latent_heads = 4
    num_cross_heads = 4
    in_dim = 32
    qlatent_dim = 32
    q_length = 8
    num_latent_block = 2
    qout_dim = 32
    qout_length = 8
    qk_dim = 32
    v_dim = 32
    out_dim = 16
    dim_feedforward = 64
    dropout_prob = 0.0          # eval mode -> dropout is identity
    structure_output = False    # TODO(synk): semantics unknown, ignored

    batch = 2
    seq = 16

    key = jax.random.PRNGKey(0)
    k_param, k_x = jax.random.split(key)

    params = init_perceiver_io(
        k_param, in_dim=in_dim, qlatent_dim=qlatent_dim, q_length=q_length,
        qout_dim=qout_dim, qout_length=qout_length, qk_dim=qk_dim, v_dim=v_dim,
        out_dim=out_dim, dim_feedforward=dim_feedforward,
        num_cross_heads=num_cross_heads, num_latent_heads=num_latent_heads)

    x = jax.random.normal(k_x, (batch, seq, in_dim), jnp.float32)

    fwd = jax.jit(functools.partial(
        perceiver_io_forward,
        num_cross_heads=num_cross_heads,
        num_latent_heads=num_latent_heads,
        num_latent_block=num_latent_block))

    out = fwd(params, x)
    jax.block_until_ready(out)

    assert out.shape == (batch, qout_length, out_dim), out.shape
    assert bool(jnp.all(jnp.isfinite(out)))

    ref = _reference_forward(
        params, x, num_cross_heads=num_cross_heads,
        num_latent_heads=num_latent_heads, num_latent_block=num_latent_block)
    # approx reciprocal in the kernel softmax -> loose tolerance
    assert bool(jnp.allclose(out, ref, atol=1e-2, rtol=1e-2)), \
        float(jnp.max(jnp.abs(out - ref)))

    print("KERNEL_OK")
</pallas_src>

<mosaic_0001>
module attributes {stable_mosaic.version = 11 : i64} {
  func.func @_perceiver_kernel(%arg0: memref<2x16x32xf32, #tpu.memory_space<vmem>>, %arg1: memref<8x32xf32, #tpu.memory_space<vmem>>, %arg2: memref<8x32xf32, #tpu.memory_space<vmem>>, %arg3: memref<32x32xf32, #tpu.memory_space<vmem>>, %arg4: memref<32x64xf32, #tpu.memory_space<vmem>>, %arg5: memref<32x32xf32, #tpu.memory_space<vmem>>, %arg6: memref<32x64xf32, #tpu.memory_space<vmem>>, %arg7: memref<64x32xf32, #tpu.memory_space<vmem>>, %arg8: memref<8x96xf32, #tpu.memory_space<vmem>>, %arg9: memref<32x96xf32, #tpu.memory_space<vmem>>, %arg10: memref<32x32xf32, #tpu.memory_space<vmem>>, %arg11: memref<32x64xf32, #tpu.memory_space<vmem>>, %arg12: memref<64x32xf32, #tpu.memory_space<vmem>>, %arg13: memref<8x96xf32, #tpu.memory_space<vmem>>, %arg14: memref<32x32xf32, #tpu.memory_space<vmem>>, %arg15: memref<32x64xf32, #tpu.memory_space<vmem>>, %arg16: memref<32x32xf32, #tpu.memory_space<vmem>>, %arg17: memref<32x64xf32, #tpu.memory_space<vmem>>, %arg18: memref<64x32xf32, #tpu.memory_space<vmem>>, %arg19: memref<9x96xf32, #tpu.memory_space<vmem>>, %arg20: memref<32x16xf32, #tpu.memory_space<vmem>>, %arg21: memref<16x16xf32, #tpu.memory_space<vmem>>) attributes {dimension_semantics = [], scalar_prefetch = 0 : i64, scratch_operands = 0 : i64, tpu.core_type = #tpu.core_type<tc>} {
    %c0 = arith.constant 0 : index
    %c0_0 = arith.constant 0 : index
    %c0_1 = arith.constant 0 : index
    %0 = vector.load %arg0[%c0, %c0_0, %c0_1] : memref<2x16x32xf32, #tpu.memory_space<vmem>>, vector<2x16x32xf32>
    %c0_2 = arith.constant 0 : index
    %c0_3 = arith.constant 0 : index
    %1 = vector.load %arg1[%c0_2, %c0_3] : memref<8x32xf32, #tpu.memory_space<vmem>>, vector<8x32xf32>
    %c0_4 = arith.constant 0 : index
    %c0_5 = arith.constant 0 : index
    %2 = vector.load %arg2[%c0_4, %c0_5] : memref<8x32xf32, #tpu.memory_space<vmem>>, vector<8x32xf32>
    %c0_6 = arith.constant 0 : index
    %c0_7 = arith.constant 0 : index
    %3 = vector.load %arg3[%c0_6, %c0_7] : memref<32x32xf32, #tpu.memory_space<vmem>>, vector<32x32xf32>
    %c0_8 = arith.constant 0 : index
    %c0_9 = arith.constant 0 : index
    %4 = vector.load %arg4[%c0_8, %c0_9] : memref<32x64xf32, #tpu.memory_space<vmem>>, vector<32x64xf32>
    %c0_10 = arith.constant 0 : index
    %c0_11 = arith.constant 0 : index
    %5 = vector.load %arg5[%c0_10, %c0_11] : memref<32x32xf32, #tpu.memory_space<vmem>>, vector<32x32xf32>
    %c0_12 = arith.constant 0 : index
    %c0_13 = arith.constant 0 : index
    %6 = vector.load %arg6[%c0_12, %c0_13] : memref<32x64xf32, #tpu.memory_space<vmem>>, vector<32x64xf32>
    %c0_14 = arith.constant 0 : index
    %c0_15 = arith.constant 0 : index
    %7 = vector.load %arg7[%c0_14, %c0_15] : memref<64x32xf32, #tpu.memory_space<vmem>>, vector<64x32xf32>
    %c0_16 = arith.constant 0 : index
    %c0_17 = arith.constant 0 : index
    %8 = vector.load %arg8[%c0_16, %c0_17] : memref<8x96xf32, #tpu.memory_space<vmem>>, vector<8x96xf32>
    %cst = arith.constant dense<0.000000e+00> : vector<8x32xf32>
    %9 = tpu.matmul %1, %3, %cst {dimension_numbers = #tpu.dot_dimension_numbers<[1], [0], [0], [1], [0, 0, 1, 1], [], []>} : vector<8x32xf32>, vector<32x32xf32>, vector<8x32xf32> -> vector<8x32xf32>
    %10 = vector.extract_strided_slice %8 {offsets = [0, 0], sizes = [1, 32], strides = [1, 1]} : vector<8x96xf32> to vector<1x32xf32>
    %11 = vector.broadcast %10 : vector<1x32xf32> to vector<8x32xf32>
    %12 = arith.addf %9, %11 : vector<8x32xf32>
    %13 = vector.shape_cast %12 : vector<8x32xf32> to vector<1x8x32xf32>
    %14 = vector.shape_cast %13 : vector<1x8x32xf32> to vector<1x8x32xf32>
    %15 = vector.broadcast %14 : vector<1x8x32xf32> to vector<2x8x32xf32>
    %16 = vector.shape_cast %0 : vector<2x16x32xf32> to vector<32x32xf32>
    %cst_18 = arith.constant dense<0.000000e+00> : vector<32x64xf32>
    %17 = tpu.matmul %16, %4, %cst_18 {dimension_numbers = #tpu.dot_dimension_numbers<[1], [0], [0], [1], [0, 0, 1, 1], [], []>} : vector<32x32xf32>, vector<32x64xf32>, vector<32x64xf32> -> vector<32x64xf32>
    %18 = vector.extract_strided_slice %8 {offsets = [0, 32], sizes = [1, 64], strides = [1, 1]} : vector<8x96xf32> to vector<1x64xf32>
    %19 = vector.broadcast %18 : vector<1x64xf32> to vector<32x64xf32>
    %20 = arith.addf %17, %19 : vector<32x64xf32>
    %21 = vector.shape_cast %20 : vector<32x64xf32> to vector<2x16x64xf32>
    %22 = vector.extract_strided_slice %21 {offsets = [0, 0, 0], sizes = [2, 16, 32], strides = [1, 1, 1]} : vector<2x16x64xf32> to vector<2x16x32xf32>
    %23 = vector.extract_strided_slice %21 {offsets = [0, 0, 32], sizes = [2, 16, 32], strides = [1, 1, 1]} : vector<2x16x64xf32> to vector<2x16x32xf32>
    %24 = vector.extract_strided_slice %15 {offsets = [0, 0, 0], sizes = [2, 8, 8], strides = [1, 1, 1]} : vector<2x8x32xf32> to vector<2x8x8xf32>
    %25 = vector.extract_strided_slice %22 {offsets = [0, 0, 0], sizes = [2, 16, 8], strides = [1, 1, 1]} : vector<2x16x32xf32> to vector<2x16x8xf32>
    "tpu.trace_start"() <{level = 10 : i32, message = "bqd,bkd->bqk"}> : () -> ()
    %cst_19 = arith.constant dense<0.000000e+00> : vector<2x8x16xf32>
    %26 = tpu.matmul %24, %25, %cst_19 {dimension_numbers = #tpu.dot_dimension_numbers<[2], [2], [1], [1], [0, 0, 0, 1, 1, 1], [0], [0]>} : vector<2x8x8xf32>, vector<2x16x8xf32>, vector<2x8x16xf32> -> vector<2x8x16xf32>
    "tpu.trace_stop"() : () -> ()
    %cst_20 = arith.constant dense<0xFF800000> : vector<2x8xf32>
    %27 = vector.multi_reduction <maximumf>, %26, %cst_20 [2] : vector<2x8x16xf32> to vector<2x8xf32>
    %28 = vector.shape_cast %27 : vector<2x8xf32> to vector<2x8x1xf32>
    %29 = vector.broadcast %28 : vector<2x8x1xf32> to vector<2x8x16xf32>
    %30 = arith.subf %26, %29 : vector<2x8x16xf32>
    %31 = math.exp %30 : vector<2x8x16xf32>
    %cst_21 = arith.constant dense<0.000000e+00> : vector<2x8xf32>
    %32 = vector.multi_reduction <add>, %31, %cst_21 [2] : vector<2x8x16xf32> to vector<2x8xf32>
    %33 = vector.shape_cast %32 : vector<2x8xf32> to vector<2x8x1xf32>
    %34 = tpu.reciprocal %33 {approx = true} : vector<2x8x1xf32> -> vector<2x8x1xf32>
    %35 = vector.broadcast %34 : vector<2x8x1xf32> to vector<2x8x16xf32>
    %36 = arith.mulf %31, %35 : vector<2x8x16xf32>
    %37 = vector.extract_strided_slice %23 {offsets = [0, 0, 0], sizes = [2, 16, 8], strides = [1, 1, 1]} : vector<2x16x32xf32> to vector<2x16x8xf32>
    "tpu.trace_start"() <{level = 10 : i32, message = "bqk,bkd->bqd"}> : () -> ()
    %cst_22 = arith.constant dense<0.000000e+00> : vector<2x8x8xf32>
    %38 = tpu.matmul %36, %37, %cst_22 {dimension_numbers = #tpu.dot_dimension_numbers<[2], [1], [1], [2], [0, 0, 0, 1, 1, 2], [0], [0]>} : vector<2x8x16xf32>, vector<2x16x8xf32>, vector<2x8x8xf32> -> vector<2x8x8xf32>
    "tpu.trace_stop"() : () -> ()
    %39 = vector.extract_strided_slice %15 {offsets = [0, 0, 8], sizes = [2, 8, 8], strides = [1, 1, 1]} : vector<2x8x32xf32> to vector<2x8x8xf32>
    %40 = vector.extract_strided_slice %22 {offsets = [0, 0, 8], sizes = [2, 16, 8], strides = [1, 1, 1]} : vector<2x16x32xf32> to vector<2x16x8xf32>
    "tpu.trace_start"() <{level = 10 : i32, message = "bqd,bkd->bqk"}> : () -> ()
    %cst_23 = arith.constant dense<0.000000e+00> : vector<2x8x16xf32>
    %41 = tpu.matmul %39, %40, %cst_23 {dimension_numbers = #tpu.dot_dimension_numbers<[2], [2], [1], [1], [0, 0, 0, 1, 1, 1], [0], [0]>} : vector<2x8x8xf32>, vector<2x16x8xf32>, vector<2x8x16xf32> -> vector<2x8x16xf32>
    "tpu.trace_stop"() : () -> ()
    %cst_24 = arith.constant dense<0xFF800000> : vector<2x8xf32>
    %42 = vector.multi_reduction <maximumf>, %41, %cst_24 [2] : vector<2x8x16xf32> to vector<2x8xf32>
    %43 = vector.shape_cast %42 : vector<2x8xf32> to vector<2x8x1xf32>
    %44 = vector.broadcast %43 : vector<2x8x1xf32> to vector<2x8x16xf32>
    %45 = arith.subf %41, %44 : vector<2x8x16xf32>
    %46 = math.exp %45 : vector<2x8x16xf32>
    %cst_25 = arith.constant dense<0.000000e+00> : vector<2x8xf32>
    %47 = vector.multi_reduction <add>, %46, %cst_25 [2] : vector<2x8x16xf32> to vector<2x8xf32>
    %48 = vector.shape_cast %47 : vector<2x8xf32> to vector<2x8x1xf32>
    %49 = tpu.reciprocal %48 {approx = true} : vector<2x8x1xf32> -> vector<2x8x1xf32>
    %50 = vector.broadcast %49 : vector<2x8x1xf32> to vector<2x8x16xf32>
    %51 = arith.mulf %46, %50 : vector<2x8x16xf32>
    %52 = vector.extract_strided_slice %23 {offsets = [0, 0, 8], sizes = [2, 16, 8], strides = [1, 1, 1]} : vector<2x16x32xf32> to vector<2x16x8xf32>
    "tpu.trace_start"() <{level = 10 : i32, message = "bqk,bkd->bqd"}> : () -> ()
    %cst_26 = arith.constant dense<0.000000e+00> : vector<2x8x8xf32>
    %53 = tpu.matmul %51, %52, %cst_26 {dimension_numbers = #tpu.dot_dimension_numbers<[2], [1], [1], [2], [0, 0, 0, 1, 1, 2], [0], [0]>} : vector<2x8x16xf32>, vector<2x16x8xf32>, vector<2x8x8xf32> -> vector<2x8x8xf32>
    "tpu.trace_stop"() : () -> ()
    %54 = vector.extract_strided_slice %15 {offsets = [0, 0, 16], sizes = [2, 8, 8], strides = [1, 1, 1]} : vector<2x8x32xf32> to vector<2x8x8xf32>
    %55 = vector.extract_strided_slice %22 {offsets = [0, 0, 16], sizes = [2, 16, 8], strides = [1, 1, 1]} : vector<2x16x32xf32> to vector<2x16x8xf32>
    "tpu.trace_start"() <{level = 10 : i32, message = "bqd,bkd->bqk"}> : () -> ()
    %cst_27 = arith.constant dense<0.000000e+00> : vector<2x8x16xf32>
    %56 = tpu.matmul %54, %55, %cst_27 {dimension_numbers = #tpu.dot_dimension_numbers<[2], [2], [1], [1], [0, 0, 0, 1, 1, 1], [0], [0]>} : vector<2x8x8xf32>, vector<2x16x8xf32>, vector<2x8x16xf32> -> vector<2x8x16xf32>
    "tpu.trace_stop"() : () -> ()
    %cst_28 = arith.constant dense<0xFF800000> : vector<2x8xf32>
    %57 = vector.multi_reduction <maximumf>, %56, %cst_28 [2] : vector<2x8x16xf32> to vector<2x8xf32>
    %58 = vector.shape_cast %57 : vector<2x8xf32> to vector<2x8x1xf32>
    %59 = vector.broadcast %58 : vector<2x8x1xf32> to vector<2x8x16xf32>
    %60 = arith.subf %56, %59 : vector<2x8x16xf32>
    %61 = math.exp %60 : vector<2x8x16xf32>
    %cst_29 = arith.constant dense<0.000000e+00> : vector<2x8xf32>
    %62 = vector.multi_reduction <add>, %61, %cst_29 [2] : vector<2x8x16xf32> to vector<2x8xf32>
    %63 = vector.shape_cast %62 : vector<2x8xf32> to vector<2x8x1xf32>
    %64 = tpu.reciprocal %63 {approx = true} : vector<2x8x1xf32> -> vector<2x8x1xf32>
    %65 = vector.broadcast %64 : vector<2x8x1xf32> to vector<2x8x16xf32>
    %66 = arith.mulf %61, %65 : vector<2x8x16xf32>
    %67 = vector.extract_strided_slice %23 {offsets = [0, 0, 16], sizes = [2, 16, 8], strides = [1, 1, 1]} : vector<2x16x32xf32> to vector<2x16x8xf32>
    "tpu.trace_start"() <{level = 10 : i32, message = "bqk,bkd->bqd"}> : () -> ()
    %cst_30 = arith.constant dense<0.000000e+00> : vector<2x8x8xf32>
    %68 = tpu.matmul %66, %67, %cst_30 {dimension_numbers = #tpu.dot_dimension_numbers<[2], [1], [1], [2], [0, 0, 0, 1, 1, 2], [0], [0]>} : vector<2x8x16xf32>, vector<2x16x8xf32>, vector<2x8x8xf32> -> vector<2x8x8xf32>
    "tpu.trace_stop"() : () -> ()
    %69 = vector.extract_strided_slice %15 {offsets = [0, 0, 24], sizes = [2, 8, 8], strides = [1, 1, 1]} : vector<2x8x32xf32> to vector<2x8x8xf32>
    %70 = vector.extract_strided_slice %22 {offsets = [0, 0, 24], sizes = [2, 16, 8], strides = [1, 1, 1]} : vector<2x16x32xf32> to vector<2x16x8xf32>
    "tpu.trace_start"() <{level = 10 : i32, message = "bqd,bkd->bqk"}> : () -> ()
    %cst_31 = arith.constant dense<0.000000e+00> : vector<2x8x16xf32>
    %71 = tpu.matmul %69, %70, %cst_31 {dimension_numbers = #tpu.dot_dimension_numbers<[2], [2], [1], [1], [0, 0, 0, 1, 1, 1], [0], [0]>} : vector<2x8x8xf32>, vector<2x16x8xf32>, vector<2x8x16xf32> -> vector<2x8x16xf32>
    "tpu.trace_stop"() : () -> ()
    %cst_32 = arith.constant dense<0xFF800000> : vector<2x8xf32>
    %72 = vector.multi_reduction <maximumf>, %71, %cst_32 [2] : vector<2x8x16xf32> to vector<2x8xf32>
    %73 = vector.shape_cast %72 : vector<2x8xf32> to vector<2x8x1xf32>
    %74 = vector.broadcast %73 : vector<2x8x1xf32> to vector<2x8x16xf32>
    %75 = arith.subf %71, %74 : vector<2x8x16xf32>
    %76 = math.exp %75 : vector<2x8x16xf32>
    %cst_33 = arith.constant dense<0.000000e+00> : vector<2x8xf32>
    %77 = vector.multi_reduction <add>, %76, %cst_33 [2] : vector<2x8x16xf32> to vector<2x8xf32>
    %78 = vector.shape_cast %77 : vector<2x8xf32> to vector<2x8x1xf32>
    %79 = tpu.reciprocal %78 {approx = true} : vector<2x8x1xf32> -> vector<2x8x1xf32>
    %80 = vector.broadcast %79 : vector<2x8x1xf32> to vector<2x8x16xf32>
    %81 = arith.mulf %76, %80 : vector<2x8x16xf32>
    %82 = vector.extract_strided_slice %23 {offsets = [0, 0, 24], sizes = [2, 16, 8], strides = [1, 1, 1]} : vector<2x16x32xf32> to vector<2x16x8xf32>
    "tpu.trace_start"() <{level = 10 : i32, message = "bqk,bkd->bqd"}> : () -> ()
    %cst_34 = arith.constant dense<0.000000e+00> : vector<2x8x8xf32>
    %83 = tpu.matmul %81, %82, %cst_34 {dimension_numbers = #tpu.dot_dimension_numbers<[2], [1], [1], [2], [0, 0, 0, 1, 1, 2], [0], [0]>} : vector<2x8x16xf32>, vector<2x16x8xf32>, vector<2x8x8xf32> -> vector<2x8x8xf32>
    "tpu.trace_stop"() : () -> ()
    %84 = tpu.concatenate %38, %53, %68, %83 in 2 : vector<2x8x8xf32>, vector<2x8x8xf32>, vector<2x8x8xf32>, vector<2x8x8xf32> -> vector<2x8x32xf32>
    %85 = vector.shape_cast %84 : vector<2x8x32xf32> to vector<16x32xf32>
    %86 = vector.shape_cast %1 : vector<8x32xf32> to vector<1x8x32xf32>
    %87 = vector.shape_cast %86 : vector<1x8x32xf32> to vector<1x8x32xf32>
    %88 = vector.broadcast %87 : vector<1x8x32xf32> to vector<2x8x32xf32>
    %89 = vector.shape_cast %88 : vector<2x8x32xf32> to vector<16x32xf32>
    %90 = vector.extract_strided_slice %8 {offsets = [1, 0], sizes = [1, 32], strides = [1, 1]} : vector<8x96xf32> to vector<1x32xf32>
    %91 = vector.extract_strided_slice %8 {offsets = [2, 0], sizes = [1, 32], strides = [1, 1]} : vector<8x96xf32> to vector<1x32xf32>
    %92 = vector.extract_strided_slice %8 {offsets = [3, 0], sizes = [1, 32], strides = [1, 1]} : vector<8x96xf32> to vector<1x32xf32>
    %93 = vector.extract_strided_slice %8 {offsets = [4, 0], sizes = [1, 64], strides = [1, 1]} : vector<8x96xf32> to vector<1x64xf32>
    %94 = vector.extract_strided_slice %8 {offsets = [5, 0], sizes = [1, 32], strides = [1, 1]} : vector<8x96xf32> to vector<1x32xf32>
    %95 = vector.extract_strided_slice %8 {offsets = [6, 0], sizes = [1, 32], strides = [1, 1]} : vector<8x96xf32> to vector<1x32xf32>
    %96 = vector.extract_strided_slice %8 {offsets = [7, 0], sizes = [1, 32], strides = [1, 1]} : vector<8x96xf32> to vector<1x32xf32>
    %cst_35 = arith.constant dense<0.000000e+00> : vector<16x32xf32>
    %97 = tpu.matmul %85, %5, %cst_35 {dimension_numbers = #tpu.dot_dimension_numbers<[1], [0], [0], [1], [0, 0, 1, 1], [], []>} : vector<16x32xf32>, vector<32x32xf32>, vector<16x32xf32> -> vector<16x32xf32>
    %98 = vector.broadcast %90 : vector<1x32xf32> to vector<16x32xf32>
    %99 = arith.addf %97, %98 : vector<16x32xf32>
    %100 = arith.addf %89, %99 : vector<16x32xf32>
    %cst_36 = arith.constant dense<0.000000e+00> : vector<16xf32>
    %101 = vector.multi_reduction <add>, %100, %cst_36 [1] : vector<16x32xf32> to vector<16xf32>
    %102 = vector.shape_cast %101 : vector<16xf32> to vector<16x1xf32>
    %cst_37 = arith.constant 3.200000e+01 : f32
    %103 = vector.broadcast %cst_37 : f32 to vector<16x1xf32>
    %104 = arith.divf %102, %103 : vector<16x1xf32>
    %105 = vector.broadcast %104 : vector<16x1xf32> to vector<16x32xf32>
    %106 = arith.subf %100, %105 : vector<16x32xf32>
    %107 = arith.mulf %106, %106 : vector<16x32xf32>
    %cst_38 = arith.constant dense<0.000000e+00> : vector<16xf32>
    %108 = vector.multi_reduction <add>, %107, %cst_38 [1] : vector<16x32xf32> to vector<16xf32>
    %109 = vector.shape_cast %108 : vector<16xf32> to vector<16x1xf32>
    %cst_39 = arith.constant 3.200000e+01 : f32
    %110 = vector.broadcast %cst_39 : f32 to vector<16x1xf32>
    %111 = arith.divf %109, %110 : vector<16x1xf32>
    %cst_40 = arith.constant 9.99999974E-6 : f32
    %112 = vector.broadcast %cst_40 : f32 to vector<16x1xf32>
    %113 = arith.addf %111, %112 : vector<16x1xf32>
    %114 = math.rsqrt %113 : vector<16x1xf32>
    %115 = vector.broadcast %114 : vector<16x1xf32> to vector<16x32xf32>
    %116 = arith.mulf %106, %115 : vector<16x32xf32>
    %117 = vector.broadcast %91 : vector<1x32xf32> to vector<16x32xf32>
    %118 = arith.mulf %116, %117 : vector<16x32xf32>
    %119 = vector.broadcast %92 : vector<1x32xf32> to vector<16x32xf32>
    %120 = arith.addf %118, %119 : vector<16x32xf32>
    %cst_41 = arith.constant dense<0.000000e+00> : vector<16x64xf32>
    %121 = tpu.matmul %120, %6, %cst_41 {dimension_numbers = #tpu.dot_dimension_numbers<[1], [0], [0], [1], [0, 0, 1, 1], [], []>} : vector<16x32xf32>, vector<32x64xf32>, vector<16x64xf32> -> vector<16x64xf32>
    %122 = vector.broadcast %93 : vector<1x64xf32> to vector<16x64xf32>
    %123 = arith.addf %121, %122 : vector<16x64xf32>
    %cst_42 = arith.constant 5.000000e-01 : f32
    %124 = vector.broadcast %cst_42 : f32 to vector<16x64xf32>
    %125 = arith.mulf %124, %123 : vector<16x64xf32>
    %cst_43 = arith.constant 4.471500e-02 : f32
    %126 = vector.broadcast %cst_43 : f32 to vector<16x64xf32>
    %127 = arith.mulf %126, %123 : vector<16x64xf32>
    %128 = arith.mulf %127, %123 : vector<16x64xf32>
    %129 = arith.mulf %128, %123 : vector<16x64xf32>
    %130 = arith.addf %123, %129 : vector<16x64xf32>
    %cst_44 = arith.constant 0.797884583 : f32
    %131 = vector.broadcast %cst_44 : f32 to vector<16x64xf32>
    %132 = arith.mulf %131, %130 : vector<16x64xf32>
    %133 = math.tanh %132 : vector<16x64xf32>
    %cst_45 = arith.constant 1.000000e+00 : f32
    %134 = vector.broadcast %cst_45 : f32 to vector<16x64xf32>
    %135 = arith.addf %134, %133 : vector<16x64xf32>
    %136 = arith.mulf %125, %135 : vector<16x64xf32>
    %cst_46 = arith.constant dense<0.000000e+00> : vector<16x32xf32>
    %137 = tpu.matmul %136, %7, %cst_46 {dimension_numbers = #tpu.dot_dimension_numbers<[1], [0], [0], [1], [0, 0, 1, 1], [], []>} : vector<16x64xf32>, vector<64x32xf32>, vector<16x32xf32> -> vector<16x32xf32>
    %138 = vector.broadcast %94 : vector<1x32xf32> to vector<16x32xf32>
    %139 = arith.addf %137, %138 : vector<16x32xf32>
    %140 = arith.addf %120, %139 : vector<16x32xf32>
    %cst_47 = arith.constant dense<0.000000e+00> : vector<16xf32>
    %141 = vector.multi_reduction <add>, %140, %cst_47 [1] : vector<16x32xf32> to vector<16xf32>
    %142 = vector.shape_cast %141 : vector<16xf32> to vector<16x1xf32>
    %cst_48 = arith.constant 3.200000e+01 : f32
    %143 = vector.broadcast %cst_48 : f32 to vector<16x1xf32>
    %144 = arith.divf %142, %143 : vector<16x1xf32>
    %145 = vector.broadcast %144 : vector<16x1xf32> to vector<16x32xf32>
    %146 = arith.subf %140, %145 : vector<16x32xf32>
    %147 = arith.mulf %146, %146 : vector<16x32xf32>
    %cst_49 = arith.constant dense<0.000000e+00> : vector<16xf32>
    %148 = vector.multi_reduction <add>, %147, %cst_49 [1] : vector<16x32xf32> to vector<16xf32>
    %149 = vector.shape_cast %148 : vector<16xf32> to vector<16x1xf32>
    %cst_50 = arith.constant 3.200000e+01 : f32
    %150 = vector.broadcast %cst_50 : f32 to vector<16x1xf32>
    %151 = arith.divf %149, %150 : vector<16x1xf32>
    %cst_51 = arith.constant 9.99999974E-6 : f32
    %152 = vector.broadcast %cst_51 : f32 to vector<16x1xf32>
    %153 = arith.addf %151, %152 : vector<16x1xf32>
    %154 = math.rsqrt %153 : vector<16x1xf32>
    %155 = vector.broadcast %154 : vector<16x1xf32> to vector<16x32xf32>
    %156 = arith.mulf %146, %155 : vector<16x32xf32>
    %157 = vector.broadcast %95 : vector<1x32xf32> to vector<16x32xf32>
    %158 = arith.mulf %156, %157 : vector<16x32xf32>
    %159 = vector.broadcast %96 : vector<1x32xf32> to vector<16x32xf32>
    %160 = arith.addf %158, %159 : vector<16x32xf32>
    %161 = vector.shape_cast %160 : vector<16x32xf32> to vector<2x8x32xf32>
    %c0_52 = arith.constant 0 : index
    %c0_53 = arith.constant 0 : index
    %162 = vector.load %arg9[%c0_52, %c0_53] : memref<32x96xf32, #tpu.memory_space<vmem>>, vector<32x96xf32>
    %c0_54 = arith.constant 0 : index
    %c0_55 = arith.constant 0 : index
    %163 = vector.load %arg10[%c0_54, %c0_55] : memref<32x32xf32, #tpu.memory_space<vmem>>, vector<32x32xf32>
    %c0_56 = arith.constant 0 : index
    %c0_57 = arith.constant 0 : index
    %164 = vector.load %arg11[%c0_56, %c0_57] : memref<32x64xf32, #tpu.memory_space<vmem>>, vector<32x64xf32>
    %c0_58 = arith.constant 0 : index
    %c0_59 = arith.constant 0 : index
    %165 = vector.load %arg12[%c0_58, %c0_59] : memref<64x32xf32, #tpu.memory_space<vmem>>, vector<64x32xf32>
    %c0_60 = arith.constant 0 : index
    %c0_61 = arith.constant 0 : index
    %166 = vector.load %arg13[%c0_60, %c0_61] : memref<8x96xf32, #tpu.memory_space<vmem>>, vector<8x96xf32>
    %c0_i32 = arith.constant 0 : i32
    %c2_i32 = arith.constant 2 : i32
    %167 = arith.addi %c0_i32, %c2_i32 : i32
    %c1_i32 = arith.constant 1 : i32
    %168 = scf.for %arg22 = %c0_i32 to %167 step %c1_i32 iter_args(%arg23 = %161) -> (vector<2x8x32xf32>)  : i32 {
      %333 = vector.shape_cast %arg23 : vector<2x8x32xf32> to vector<16x32xf32>
      %cst_114 = arith.constant dense<0.000000e+00> : vector<16x96xf32>
      %334 = tpu.matmul %333, %162, %cst_114 {dimension_numbers = #tpu.dot_dimension_numbers<[1], [0], [0], [1], [0, 0, 1, 1], [], []>} : vector<16x32xf32>, vector<32x96xf32>, vector<16x96xf32> -> vector<16x96xf32>
      %335 = vector.extract_strided_slice %166 {offsets = [0, 0], sizes = [1, 96], strides = [1, 1]} : vector<8x96xf32> to vector<1x96xf32>
      %336 = vector.broadcast %335 : vector<1x96xf32> to vector<16x96xf32>
      %337 = arith.addf %334, %336 : vector<16x96xf32>
      %338 = vector.shape_cast %337 : vector<16x96xf32> to vector<2x8x96xf32>
      %339 = vector.extract_strided_slice %338 {offsets = [0, 0, 0], sizes = [2, 8, 32], strides = [1, 1, 1]} : vector<2x8x96xf32> to vector<2x8x32xf32>
      %340 = vector.extract_strided_slice %338 {offsets = [0, 0, 32], sizes = [2, 8, 32], strides = [1, 1, 1]} : vector<2x8x96xf32> to vector<2x8x32xf32>
      %341 = vector.extract_strided_slice %338 {offsets = [0, 0, 64], sizes = [2, 8, 32], strides = [1, 1, 1]} : vector<2x8x96xf32> to vector<2x8x32xf32>
      %342 = vector.extract_strided_slice %339 {offsets = [0, 0, 0], sizes = [2, 8, 8], strides = [1, 1, 1]} : vector<2x8x32xf32> to vector<2x8x8xf32>
      %343 = vector.extract_strided_slice %340 {offsets = [0, 0, 0], sizes = [2, 8, 8], strides = [1, 1, 1]} : vector<2x8x32xf32> to vector<2x8x8xf32>
      "tpu.trace_start"() <{level = 10 : i32, message = "bqd,bkd->bqk"}> : () -> ()
      %cst_115 = arith.constant dense<0.000000e+00> : vector<2x8x8xf32>
      %344 = tpu.matmul %342, %343, %cst_115 {dimension_numbers = #tpu.dot_dimension_numbers<[2], [2], [1], [1], [0, 0, 0, 1, 1, 1], [0], [0]>} : vector<2x8x8xf32>, vector<2x8x8xf32>, vector<2x8x8xf32> -> vector<2x8x8xf32>
      "tpu.trace_stop"() : () -> ()
      %cst_116 = arith.constant dense<0xFF800000> : vector<2x8xf32>
      %345 = vector.multi_reduction <maximumf>, %344, %cst_116 [2] : vector<2x8x8xf32> to vector<2x8xf32>
      %346 = vector.shape_cast %345 : vector<2x8xf32> to vector<2x8x1xf32>
      %347 = vector.broadcast %346 : vector<2x8x1xf32> to vector<2x8x8xf32>
      %348 = arith.subf %344, %347 : vector<2x8x8xf32>
      %349 = math.exp %348 : vector<2x8x8xf32>
      %cst_117 = arith.constant dense<0.000000e+00> : vector<2x8xf32>
      %350 = vector.multi_reduction <add>, %349, %cst_117 [2] : vector<2x8x8xf32> to vector<2x8xf32>
      %351 = vector.shape_cast %350 : vector<2x8xf32> to vector<2x8x1xf32>
      %352 = tpu.reciprocal %351 {approx = true} : vector<2x8x1xf32> -> vector<2x8x1xf32>
      %353 = vector.broadcast %352 : vector<2x8x1xf32> to vector<2x8x8xf32>
      %354 = arith.mulf %349, %353 : vector<2x8x8xf32>
      %355 = vector.extract_strided_slice %341 {offsets = [0, 0, 0], sizes = [2, 8, 8], strides = [1, 1, 1]} : vector<2x8x32xf32> to vector<2x8x8xf32>
      "tpu.trace_start"() <{level = 10 : i32, message = "bqk,bkd->bqd"}> : () -> ()
      %cst_118 = arith.constant dense<0.000000e+00> : vector<2x8x8xf32>
      %356 = tpu.matmul %354, %355, %cst_118 {dimension_numbers = #tpu.dot_dimension_numbers<[2], [1], [1], [2], [0, 0, 0, 1, 1, 2], [0], [0]>} : vector<2x8x8xf32>, vector<2x8x8xf32>, vector<2x8x8xf32> -> vector<2x8x8xf32>
      "tpu.trace_stop"() : () -> ()
      %357 = vector.extract_strided_slice %339 {offsets = [0, 0, 8], sizes = [2, 8, 8], strides = [1, 1, 1]} : vector<2x8x32xf32> to vector<2x8x8xf32>
      %358 = vector.extract_strided_slice %340 {offsets = [0, 0, 8], sizes = [2, 8, 8], strides = [1, 1, 1]} : vector<2x8x32xf32> to vector<2x8x8xf32>
      "tpu.trace_start"() <{level = 10 : i32, message = "bqd,bkd->bqk"}> : () -> ()
      %cst_119 = arith.constant dense<0.000000e+00> : vector<2x8x8xf32>
      %359 = tpu.matmul %357, %358, %cst_119 {dimension_numbers = #tpu.dot_dimension_numbers<[2], [2], [1], [1], [0, 0, 0, 1, 1, 1], [0], [0]>} : vector<2x8x8xf32>, vector<2x8x8xf32>, vector<2x8x8xf32> -> vector<2x8x8xf32>
      "tpu.trace_stop"() : () -> ()
      %cst_120 = arith.constant dense<0xFF800000> : vector<2x8xf32>
      %360 = vector.multi_reduction <maximumf>, %359, %cst_120 [2] : vector<2x8x8xf32> to vector<2x8xf32>
      %361 = vector.shape_cast %360 : vector<2x8xf32> to vector<2x8x1xf32>
      %362 = vector.broadcast %361 : vector<2x8x1xf32> to vector<2x8x8xf32>
      %363 = arith.subf %359, %362 : vector<2x8x8xf32>
      %364 = math.exp %363 : vector<2x8x8xf32>
      %cst_121 = arith.constant dense<0.000000e+00> : vector<2x8xf32>
      %365 = vector.multi_reduction <add>, %364, %cst_121 [2] : vector<2x8x8xf32> to vector<2x8xf32>
      %366 = vector.shape_cast %365 : vector<2x8xf32> to vector<2x8x1xf32>
      %367 = tpu.reciprocal %366 {approx = true} : vector<2x8x1xf32> -> vector<2x8x1xf32>
      %368 = vector.broadcast %367 : vector<2x8x1xf32> to vector<2x8x8xf32>
      %369 = arith.mulf %364, %368 : vector<2x8x8xf32>
      %370 = vector.extract_strided_slice %341 {offsets = [0, 0, 8], sizes = [2, 8, 8], strides = [1, 1, 1]} : vector<2x8x32xf32> to vector<2x8x8xf32>
      "tpu.trace_start"() <{level = 10 : i32, message = "bqk,bkd->bqd"}> : () -> ()
      %cst_122 = arith.constant dense<0.000000e+00> : vector<2x8x8xf32>
      %371 = tpu.matmul %369, %370, %cst_122 {dimension_numbers = #tpu.dot_dimension_numbers<[2], [1], [1], [2], [0, 0, 0, 1, 1, 2], [0], [0]>} : vector<2x8x8xf32>, vector<2x8x8xf32>, vector<2x8x8xf32> -> vector<2x8x8xf32>
      "tpu.trace_stop"() : () -> ()
      %372 = vector.extract_strided_slice %339 {offsets = [0, 0, 16], sizes = [2, 8, 8], strides = [1, 1, 1]} : vector<2x8x32xf32> to vector<2x8x8xf32>
      %373 = vector.extract_strided_slice %340 {offsets = [0, 0, 16], sizes = [2, 8, 8], strides = [1, 1, 1]} : vector<2x8x32xf32> to vector<2x8x8xf32>
      "tpu.trace_start"() <{level = 10 : i32, message = "bqd,bkd->bqk"}> : () -> ()
      %cst_123 = arith.constant dense<0.000000e+00> : vector<2x8x8xf32>
      %374 = tpu.matmul %372, %373, %cst_123 {dimension_numbers = #tpu.dot_dimension_numbers<[2], [2], [1], [1], [0, 0, 0, 1, 1, 1], [0], [0]>} : vector<2x8x8xf32>, vector<2x8x8xf32>, vector<2x8x8xf32> -> vector<2x8x8xf32>
      "tpu.trace_stop"() : () -> ()
      %cst_124 = arith.constant dense<0xFF800000> : vector<2x8xf32>
      %375 = vector.multi_reduction <maximumf>, %374, %cst_124 [2] : vector<2x8x8xf32> to vector<2x8xf32>
      %376 = vector.shape_cast %375 : vector<2x8xf32> to vector<2x8x1xf32>
      %377 = vector.broadcast %376 : vector<2x8x1xf32> to vector<2x8x8xf32>
      %378 = arith.subf %374, %377 : vector<2x8x8xf32>
      %379 = math.exp %378 : vector<2x8x8xf32>
      %cst_125 = arith.constant dense<0.000000e+00> : vector<2x8xf32>
      %380 = vector.multi_reduction <add>, %379, %cst_125 [2] : vector<2x8x8xf32> to vector<2x8xf32>
      %381 = vector.shape_cast %380 : vector<2x8xf32> to vector<2x8x1xf32>
      %382 = tpu.reciprocal %381 {approx = true} : vector<2x8x1xf32> -> vector<2x8x1xf32>
      %383 = vector.broadcast %382 : vector<2x8x1xf32> to vector<2x8x8xf32>
      %384 = arith.mulf %379, %383 : vector<2x8x8xf32>
      %385 = vector.extract_strided_slice %341 {offsets = [0, 0, 16], sizes = [2, 8, 8], strides = [1, 1, 1]} : vector<2x8x32xf32> to vector<2x8x8xf32>
      "tpu.trace_start"() <{level = 10 : i32, message = "bqk,bkd->bqd"}> : () -> ()
      %cst_126 = arith.constant dense<0.000000e+00> : vector<2x8x8xf32>
      %386 = tpu.matmul %384, %385, %cst_126 {dimension_numbers = #tpu.dot_dimension_numbers<[2], [1], [1], [2], [0, 0, 0, 1, 1, 2], [0], [0]>} : vector<2x8x8xf32>, vector<2x8x8xf32>, vector<2x8x8xf32> -> vector<2x8x8xf32>
      "tpu.trace_stop"() : () -> ()
      %387 = vector.extract_strided_slice %339 {offsets = [0, 0, 24], sizes = [2, 8, 8], strides = [1, 1, 1]} : vector<2x8x32xf32> to vector<2x8x8xf32>
      %388 = vector.extract_strided_slice %340 {offsets = [0, 0, 24], sizes = [2, 8, 8], strides = [1, 1, 1]} : vector<2x8x32xf32> to vector<2x8x8xf32>
      "tpu.trace_start"() <{level = 10 : i32, message = "bqd,bkd->bqk"}> : () -> ()
      %cst_127 = arith.constant dense<0.000000e+00> : vector<2x8x8xf32>
      %389 = tpu.matmul %387, %388, %cst_127 {dimension_numbers = #tpu.dot_dimension_numbers<[2], [2], [1], [1], [0, 0, 0, 1, 1, 1], [0], [0]>} : vector<2x8x8xf32>, vector<2x8x8xf32>, vector<2x8x8xf32> -> vector<2x8x8xf32>
      "tpu.trace_stop"() : () -> ()
      %cst_128 = arith.constant dense<0xFF800000> : vector<2x8xf32>
      %390 = vector.multi_reduction <maximumf>, %389, %cst_128 [2] : vector<2x8x8xf32> to vector<2x8xf32>
      %391 = vector.shape_cast %390 : vector<2x8xf32> to vector<2x8x1xf32>
      %392 = vector.broadcast %391 : vector<2x8x1xf32> to vector<2x8x8xf32>
      %393 = arith.subf %389, %392 : vector<2x8x8xf32>
      %394 = math.exp %393 : vector<2x8x8xf32>
      %cst_129 = arith.constant dense<0.000000e+00> : vector<2x8xf32>
      %395 = vector.multi_reduction <add>, %394, %cst_129 [2] : vector<2x8x8xf32> to vector<2x8xf32>
      %396 = vector.shape_cast %395 : vector<2x8xf32> to vector<2x8x1xf32>
      %397 = tpu.reciprocal %396 {approx = true} : vector<2x8x1xf32> -> vector<2x8x1xf32>
      %398 = vector.broadcast %397 : vector<2x8x1xf32> to vector<2x8x8xf32>
      %399 = arith.mulf %394, %398 : vector<2x8x8xf32>
      %400 = vector.extract_strided_slice %341 {offsets = [0, 0, 24], sizes = [2, 8, 8], strides = [1, 1, 1]} : vector<2x8x32xf32> to vector<2x8x8xf32>
      "tpu.trace_start"() <{level = 10 : i32, message = "bqk,bkd->bqd"}> : () -> ()
      %cst_130 = arith.constant dense<0.000000e+00> : vector<2x8x8xf32>
      %401 = tpu.matmul %399, %400, %cst_130 {dimension_numbers = #tpu.dot_dimension_numbers<[2], [1], [1], [2], [0, 0, 0, 1, 1, 2], [0], [0]>} : vector<2x8x8xf32>, vector<2x8x8xf32>, vector<2x8x8xf32> -> vector<2x8x8xf32>
      "tpu.trace_stop"() : () -> ()
      %402 = tpu.concatenate %356, %371, %386, %401 in 2 : vector<2x8x8xf32>, vector<2x8x8xf32>, vector<2x8x8xf32>, vector<2x8x8xf32> -> vector<2x8x32xf32>
      %403 = vector.shape_cast %402 : vector<2x8x32xf32> to vector<16x32xf32>
      %404 = vector.extract_strided_slice %166 {offsets = [1, 0], sizes = [1, 32], strides = [1, 1]} : vector<8x96xf32> to vector<1x32xf32>
      %405 = vector.extract_strided_slice %166 {offsets = [2, 0], sizes = [1, 32], strides = [1, 1]} : vector<8x96xf32> to vector<1x32xf32>
      %406 = vector.extract_strided_slice %166 {offsets = [3, 0], sizes = [1, 32], strides = [1, 1]} : vector<8x96xf32> to vector<1x32xf32>
      %407 = vector.extract_strided_slice %166 {offsets = [4, 0], sizes = [1, 64], strides = [1, 1]} : vector<8x96xf32> to vector<1x64xf32>
      %408 = vector.extract_strided_slice %166 {offsets = [5, 0], sizes = [1, 32], strides = [1, 1]} : vector<8x96xf32> to vector<1x32xf32>
      %409 = vector.extract_strided_slice %166 {offsets = [6, 0], sizes = [1, 32], strides = [1, 1]} : vector<8x96xf32> to vector<1x32xf32>
      %410 = vector.extract_strided_slice %166 {offsets = [7, 0], sizes = [1, 32], strides = [1, 1]} : vector<8x96xf32> to vector<1x32xf32>
      %cst_131 = arith.constant dense<0.000000e+00> : vector<16x32xf32>
      %411 = tpu.matmul %403, %163, %cst_131 {dimension_numbers = #tpu.dot_dimension_numbers<[1], [0], [0], [1], [0, 0, 1, 1], [], []>} : vector<16x32xf32>, vector<32x32xf32>, vector<16x32xf32> -> vector<16x32xf32>
      %412 = vector.broadcast %404 : vector<1x32xf32> to vector<16x32xf32>
      %413 = arith.addf %411, %412 : vector<16x32xf32>
      %414 = arith.addf %333, %413 : vector<16x32xf32>
      %cst_132 = arith.constant dense<0.000000e+00> : vector<16xf32>
      %415 = vector.multi_reduction <add>, %414, %cst_132 [1] : vector<16x32xf32> to vector<16xf32>
      %416 = vector.shape_cast %415 : vector<16xf32> to vector<16x1xf32>
      %cst_133 = arith.constant 3.200000e+01 : f32
      %417 = vector.broadcast %cst_133 : f32 to vector<16x1xf32>
      %418 = arith.divf %416, %417 : vector<16x1xf32>
      %419 = vector.broadcast %418 : vector<16x1xf32> to vector<16x32xf32>
      %420 = arith.subf %414, %419 : vector<16x32xf32>
      %421 = arith.mulf %420, %420 : vector<16x32xf32>
      %cst_134 = arith.constant dense<0.000000e+00> : vector<16xf32>
      %422 = vector.multi_reduction <add>, %421, %cst_134 [1] : vector<16x32xf32> to vector<16xf32>
      %423 = vector.shape_cast %422 : vector<16xf32> to vector<16x1xf32>
      %cst_135 = arith.constant 3.200000e+01 : f32
      %424 = vector.broadcast %cst_135 : f32 to vector<16x1xf32>
      %425 = arith.divf %423, %424 : vector<16x1xf32>
      %cst_136 = arith.constant 9.99999974E-6 : f32
      %426 = vector.broadcast %cst_136 : f32 to vector<16x1xf32>
      %427 = arith.addf %425, %426 : vector<16x1xf32>
      %428 = math.rsqrt %427 : vector<16x1xf32>
      %429 = vector.broadcast %428 : vector<16x1xf32> to vector<16x32xf32>
      %430 = arith.mulf %420, %429 : vector<16x32xf32>
      %431 = vector.broadcast %405 : vector<1x32xf32> to vector<16x32xf32>
      %432 = arith.mulf %430, %431 : vector<16x32xf32>
      %433 = vector.broadcast %406 : vector<1x32xf32> to vector<16x32xf32>
      %434 = arith.addf %432, %433 : vector<16x32xf32>
      %cst_137 = arith.constant dense<0.000000e+00> : vector<16x64xf32>
      %435 = tpu.matmul %434, %164, %cst_137 {dimension_numbers = #tpu.dot_dimension_numbers<[1], [0], [0], [1], [0, 0, 1, 1], [], []>} : vector<16x32xf32>, vector<32x64xf32>, vector<16x64xf32> -> vector<16x64xf32>
      %436 = vector.broadcast %407 : vector<1x64xf32> to vector<16x64xf32>
      %437 = arith.addf %435, %436 : vector<16x64xf32>
      %cst_138 = arith.constant 5.000000e-01 : f32
      %438 = vector.broadcast %cst_138 : f32 to vector<16x64xf32>
      %439 = arith.mulf %438, %437 : vector<16x64xf32>
      %cst_139 = arith.constant 4.471500e-02 : f32
      %440 = vector.broadcast %cst_139 : f32 to vector<16x64xf32>
      %441 = arith.mulf %440, %437 : vector<16x64xf32>
      %442 = arith.mulf %441, %437 : vector<16x64xf32>
      %443 = arith.mulf %442, %437 : vector<16x64xf32>
      %444 = arith.addf %437, %443 : vector<16x64xf32>
      %cst_140 = arith.constant 0.797884583 : f32
      %445 = vector.broadcast %cst_140 : f32 to vector<16x64xf32>
      %446 = arith.mulf %445, %444 : vector<16x64xf32>
      %447 = math.tanh %446 : vector<16x64xf32>
      %cst_141 = arith.constant 1.000000e+00 : f32
      %448 = vector.broadcast %cst_141 : f32 to vector<16x64xf32>
      %449 = arith.addf %448, %447 : vector<16x64xf32>
      %450 = arith.mulf %439, %449 : vector<16x64xf32>
      %cst_142 = arith.constant dense<0.000000e+00> : vector<16x32xf32>
      %451 = tpu.matmul %450, %165, %cst_142 {dimension_numbers = #tpu.dot_dimension_numbers<[1], [0], [0], [1], [0, 0, 1, 1], [], []>} : vector<16x64xf32>, vector<64x32xf32>, vector<16x32xf32> -> vector<16x32xf32>
      %452 = vector.broadcast %408 : vector<1x32xf32> to vector<16x32xf32>
      %453 = arith.addf %451, %452 : vector<16x32xf32>
      %454 = arith.addf %434, %453 : vector<16x32xf32>
      %cst_143 = arith.constant dense<0.000000e+00> : vector<16xf32>
      %455 = vector.multi_reduction <add>, %454, %cst_143 [1] : vector<16x32xf32> to vector<16xf32>
      %456 = vector.shape_cast %455 : vector<16xf32> to vector<16x1xf32>
      %cst_144 = arith.constant 3.200000e+01 : f32
      %457 = vector.broadcast %cst_144 : f32 to vector<16x1xf32>
      %458 = arith.divf %456, %457 : vector<16x1xf32>
      %459 = vector.broadcast %458 : vector<16x1xf32> to vector<16x32xf32>
      %460 = arith.subf %454, %459 : vector<16x32xf32>
      %461 = arith.mulf %460, %460 : vector<16x32xf32>
      %cst_145 = arith.constant dense<0.000000e+00> : vector<16xf32>
      %462 = vector.multi_reduction <add>, %461, %cst_145 [1] : vector<16x32xf32> to vector<16xf32>
      %463 = vector.shape_cast %462 : vector<16xf32> to vector<16x1xf32>
      %cst_146 = arith.constant 3.200000e+01 : f32
      %464 = vector.broadcast %cst_146 : f32 to vector<16x1xf32>
      %465 = arith.divf %463, %464 : vector<16x1xf32>
      %cst_147 = arith.constant 9.99999974E-6 : f32
      %466 = vector.broadcast %cst_147 : f32 to vector<16x1xf32>
      %467 = arith.addf %465, %466 : vector<16x1xf32>
      %468 = math.rsqrt %467 : vector<16x1xf32>
      %469 = vector.broadcast %468 : vector<16x1xf32> to vector<16x32xf32>
      %470 = arith.mulf %460, %469 : vector<16x32xf32>
      %471 = vector.broadcast %409 : vector<1x32xf32> to vector<16x32xf32>
      %472 = arith.mulf %470, %471 : vector<16x32xf32>
      %473 = vector.broadcast %410 : vector<1x32xf32> to vector<16x32xf32>
      %474 = arith.addf %472, %473 : vector<16x32xf32>
      %475 = vector.shape_cast %474 : vector<16x32xf32> to vector<2x8x32xf32>
      scf.yield %475 : vector<2x8x32xf32>
    }
    %c0_62 = arith.constant 0 : index
    %c0_63 = arith.constant 0 : index
    %169 = vector.load %arg19[%c0_62, %c0_63] : memref<9x96xf32, #tpu.memory_space<vmem>>, vector<9x96xf32>
    %c0_64 = arith.constant 0 : index
    %c0_65 = arith.constant 0 : index
    %170 = vector.load %arg14[%c0_64, %c0_65] : memref<32x32xf32, #tpu.memory_space<vmem>>, vector<32x32xf32>
    %c0_66 = arith.constant 0 : index
    %c0_67 = arith.constant 0 : index
    %171 = vector.load %arg15[%c0_66, %c0_67] : memref<32x64xf32, #tpu.memory_space<vmem>>, vector<32x64xf32>
    %c0_68 = arith.constant 0 : index
    %c0_69 = arith.constant 0 : index
    %172 = vector.load %arg16[%c0_68, %c0_69] : memref<32x32xf32, #tpu.memory_space<vmem>>, vector<32x32xf32>
    %c0_70 = arith.constant 0 : index
    %c0_71 = arith.constant 0 : index
    %173 = vector.load %arg17[%c0_70, %c0_71] : memref<32x64xf32, #tpu.memory_space<vmem>>, vector<32x64xf32>
    %c0_72 = arith.constant 0 : index
    %c0_73 = arith.constant 0 : index
    %174 = vector.load %arg18[%c0_72, %c0_73] : memref<64x32xf32, #tpu.memory_space<vmem>>, vector<64x32xf32>
    %cst_74 = arith.constant dense<0.000000e+00> : vector<8x32xf32>
    %175 = tpu.matmul %2, %170, %cst_74 {dimension_numbers = #tpu.dot_dimension_numbers<[1], [0], [0], [1], [0, 0, 1, 1], [], []>} : vector<8x32xf32>, vector<32x32xf32>, vector<8x32xf32> -> vector<8x32xf32>
    %176 = vector.extract_strided_slice %169 {offsets = [0, 0], sizes = [1, 32], strides = [1, 1]} : vector<9x96xf32> to vector<1x32xf32>
    %177 = vector.broadcast %176 : vector<1x32xf32> to vector<8x32xf32>
    %178 = arith.addf %175, %177 : vector<8x32xf32>
    %179 = vector.shape_cast %178 : vector<8x32xf32> to vector<1x8x32xf32>
    %180 = vector.shape_cast %179 : vector<1x8x32xf32> to vector<1x8x32xf32>
    %181 = vector.broadcast %180 : vector<1x8x32xf32> to vector<2x8x32xf32>
    %182 = vector.shape_cast %168 : vector<2x8x32xf32> to vector<16x32xf32>
    %cst_75 = arith.constant dense<0.000000e+00> : vector<16x64xf32>
    %183 = tpu.matmul %182, %171, %cst_75 {dimension_numbers = #tpu.dot_dimension_numbers<[1], [0], [0], [1], [0, 0, 1, 1], [], []>} : vector<16x32xf32>, vector<32x64xf32>, vector<16x64xf32> -> vector<16x64xf32>
    %184 = vector.extract_strided_slice %169 {offsets = [0, 32], sizes = [1, 64], strides = [1, 1]} : vector<9x96xf32> to vector<1x64xf32>
    %185 = vector.broadcast %184 : vector<1x64xf32> to vector<16x64xf32>
    %186 = arith.addf %183, %185 : vector<16x64xf32>
    %187 = vector.shape_cast %186 : vector<16x64xf32> to vector<2x8x64xf32>
    %188 = vector.extract_strided_slice %187 {offsets = [0, 0, 0], sizes = [2, 8, 32], strides = [1, 1, 1]} : vector<2x8x64xf32> to vector<2x8x32xf32>
    %189 = vector.extract_strided_slice %187 {offsets = [0, 0, 32], sizes = [2, 8, 32], strides = [1, 1, 1]} : vector<2x8x64xf32> to vector<2x8x32xf32>
    %190 = vector.extract_strided_slice %181 {offsets = [0, 0, 0], sizes = [2, 8, 8], strides = [1, 1, 1]} : vector<2x8x32xf32> to vector<2x8x8xf32>
    %191 = vector.extract_strided_slice %188 {offsets = [0, 0, 0], sizes = [2, 8, 8], strides = [1, 1, 1]} : vector<2x8x32xf32> to vector<2x8x8xf32>
    "tpu.trace_start"() <{level = 10 : i32, message = "bqd,bkd->bqk"}> : () -> ()
    %cst_76 = arith.constant dense<0.000000e+00> : vector<2x8x8xf32>
    %192 = tpu.matmul %190, %191, %cst_76 {dimension_numbers = #tpu.dot_dimension_numbers<[2], [2], [1], [1], [0, 0, 0, 1, 1, 1], [0], [0]>} : vector<2x8x8xf32>, vector<2x8x8xf32>, vector<2x8x8xf32> -> vector<2x8x8xf32>
    "tpu.trace_stop"() : () -> ()
    %cst_77 = arith.constant dense<0xFF800000> : vector<2x8xf32>
    %193 = vector.multi_reduction <maximumf>, %192, %cst_77 [2] : vector<2x8x8xf32> to vector<2x8xf32>
    %194 = vector.shape_cast %193 : vector<2x8xf32> to vector<2x8x1xf32>
    %195 = vector.broadcast %194 : vector<2x8x1xf32> to vector<2x8x8xf32>
    %196 = arith.subf %192, %195 : vector<2x8x8xf32>
    %197 = math.exp %196 : vector<2x8x8xf32>
    %cst_78 = arith.constant dense<0.000000e+00> : vector<2x8xf32>
    %198 = vector.multi_reduction <add>, %197, %cst_78 [2] : vector<2x8x8xf32> to vector<2x8xf32>
    %199 = vector.shape_cast %198 : vector<2x8xf32> to vector<2x8x1xf32>
    %200 = tpu.reciprocal %199 {approx = true} : vector<2x8x1xf32> -> vector<2x8x1xf32>
    %201 = vector.broadcast %200 : vector<2x8x1xf32> to vector<2x8x8xf32>
    %202 = arith.mulf %197, %201 : vector<2x8x8xf32>
    %203 = vector.extract_strided_slice %189 {offsets = [0, 0, 0], sizes = [2, 8, 8], strides = [1, 1, 1]} : vector<2x8x32xf32> to vector<2x8x8xf32>
    "tpu.trace_start"() <{level = 10 : i32, message = "bqk,bkd->bqd"}> : () -> ()
    %cst_79 = arith.constant dense<0.000000e+00> : vector<2x8x8xf32>
    %204 = tpu.matmul %202, %203, %cst_79 {dimension_numbers = #tpu.dot_dimension_numbers<[2], [1], [1], [2], [0, 0, 0, 1, 1, 2], [0], [0]>} : vector<2x8x8xf32>, vector<2x8x8xf32>, vector<2x8x8xf32> -> vector<2x8x8xf32>
    "tpu.trace_stop"() : () -> ()
    %205 = vector.extract_strided_slice %181 {offsets = [0, 0, 8], sizes = [2, 8, 8], strides = [1, 1, 1]} : vector<2x8x32xf32> to vector<2x8x8xf32>
    %206 = vector.extract_strided_slice %188 {offsets = [0, 0, 8], sizes = [2, 8, 8], strides = [1, 1, 1]} : vector<2x8x32xf32> to vector<2x8x8xf32>
    "tpu.trace_start"() <{level = 10 : i32, message = "bqd,bkd->bqk"}> : () -> ()
    %cst_80 = arith.constant dense<0.000000e+00> : vector<2x8x8xf32>
    %207 = tpu.matmul %205, %206, %cst_80 {dimension_numbers = #tpu.dot_dimension_numbers<[2], [2], [1], [1], [0, 0, 0, 1, 1, 1], [0], [0]>} : vector<2x8x8xf32>, vector<2x8x8xf32>, vector<2x8x8xf32> -> vector<2x8x8xf32>
    "tpu.trace_stop"() : () -> ()
    %cst_81 = arith.constant dense<0xFF800000> : vector<2x8xf32>
    %208 = vector.multi_reduction <maximumf>, %207, %cst_81 [2] : vector<2x8x8xf32> to vector<2x8xf32>
    %209 = vector.shape_cast %208 : vector<2x8xf32> to vector<2x8x1xf32>
    %210 = vector.broadcast %209 : vector<2x8x1xf32> to vector<2x8x8xf32>
    %211 = arith.subf %207, %210 : vector<2x8x8xf32>
    %212 = math.exp %211 : vector<2x8x8xf32>
    %cst_82 = arith.constant dense<0.000000e+00> : vector<2x8xf32>
    %213 = vector.multi_reduction <add>, %212, %cst_82 [2] : vector<2x8x8xf32> to vector<2x8xf32>
    %214 = vector.shape_cast %213 : vector<2x8xf32> to vector<2x8x1xf32>
    %215 = tpu.reciprocal %214 {approx = true} : vector<2x8x1xf32> -> vector<2x8x1xf32>
    %216 = vector.broadcast %215 : vector<2x8x1xf32> to vector<2x8x8xf32>
    %217 = arith.mulf %212, %216 : vector<2x8x8xf32>
    %218 = vector.extract_strided_slice %189 {offsets = [0, 0, 8], sizes = [2, 8, 8], strides = [1, 1, 1]} : vector<2x8x32xf32> to vector<2x8x8xf32>
    "tpu.trace_start"() <{level = 10 : i32, message = "bqk,bkd->bqd"}> : () -> ()
    %cst_83 = arith.constant dense<0.000000e+00> : vector<2x8x8xf32>
    %219 = tpu.matmul %217, %218, %cst_83 {dimension_numbers = #tpu.dot_dimension_numbers<[2], [1], [1], [2], [0, 0, 0, 1, 1, 2], [0], [0]>} : vector<2x8x8xf32>, vector<2x8x8xf32>, vector<2x8x8xf32> -> vector<2x8x8xf32>
    "tpu.trace_stop"() : () -> ()
    %220 = vector.extract_strided_slice %181 {offsets = [0, 0, 16], sizes = [2, 8, 8], strides = [1, 1, 1]} : vector<2x8x32xf32> to vector<2x8x8xf32>
    %221 = vector.extract_strided_slice %188 {offsets = [0, 0, 16], sizes = [2, 8, 8], strides = [1, 1, 1]} : vector<2x8x32xf32> to vector<2x8x8xf32>
    "tpu.trace_start"() <{level = 10 : i32, message = "bqd,bkd->bqk"}> : () -> ()
    %cst_84 = arith.constant dense<0.000000e+00> : vector<2x8x8xf32>
    %222 = tpu.matmul %220, %221, %cst_84 {dimension_numbers = #tpu.dot_dimension_numbers<[2], [2], [1], [1], [0, 0, 0, 1, 1, 1], [0], [0]>} : vector<2x8x8xf32>, vector<2x8x8xf32>, vector<2x8x8xf32> -> vector<2x8x8xf32>
    "tpu.trace_stop"() : () -> ()
    %cst_85 = arith.constant dense<0xFF800000> : vector<2x8xf32>
    %223 = vector.multi_reduction <maximumf>, %222, %cst_85 [2] : vector<2x8x8xf32> to vector<2x8xf32>
    %224 = vector.shape_cast %223 : vector<2x8xf32> to vector<2x8x1xf32>
    %225 = vector.broadcast %224 : vector<2x8x1xf32> to vector<2x8x8xf32>
    %226 = arith.subf %222, %225 : vector<2x8x8xf32>
    %227 = math.exp %226 : vector<2x8x8xf32>
    %cst_86 = arith.constant dense<0.000000e+00> : vector<2x8xf32>
    %228 = vector.multi_reduction <add>, %227, %cst_86 [2] : vector<2x8x8xf32> to vector<2x8xf32>
    %229 = vector.shape_cast %228 : vector<2x8xf32> to vector<2x8x1xf32>
    %230 = tpu.reciprocal %229 {approx = true} : vector<2x8x1xf32> -> vector<2x8x1xf32>
    %231 = vector.broadcast %230 : vector<2x8x1xf32> to vector<2x8x8xf32>
    %232 = arith.mulf %227, %231 : vector<2x8x8xf32>
    %233 = vector.extract_strided_slice %189 {offsets = [0, 0, 16], sizes = [2, 8, 8], strides = [1, 1, 1]} : vector<2x8x32xf32> to vector<2x8x8xf32>
    "tpu.trace_start"() <{level = 10 : i32, message = "bqk,bkd->bqd"}> : () -> ()
    %cst_87 = arith.constant dense<0.000000e+00> : vector<2x8x8xf32>
    %234 = tpu.matmul %232, %233, %cst_87 {dimension_numbers = #tpu.dot_dimension_numbers<[2], [1], [1], [2], [0, 0, 0, 1, 1, 2], [0], [0]>} : vector<2x8x8xf32>, vector<2x8x8xf32>, vector<2x8x8xf32> -> vector<2x8x8xf32>
    "tpu.trace_stop"() : () -> ()
    %235 = vector.extract_strided_slice %181 {offsets = [0, 0, 24], sizes = [2, 8, 8], strides = [1, 1, 1]} : vector<2x8x32xf32> to vector<2x8x8xf32>
    %236 = vector.extract_strided_slice %188 {offsets = [0, 0, 24], sizes = [2, 8, 8], strides = [1, 1, 1]} : vector<2x8x32xf32> to vector<2x8x8xf32>
    "tpu.trace_start"() <{level = 10 : i32, message = "bqd,bkd->bqk"}> : () -> ()
    %cst_88 = arith.constant dense<0.000000e+00> : vector<2x8x8xf32>
    %237 = tpu.matmul %235, %236, %cst_88 {dimension_numbers = #tpu.dot_dimension_numbers<[2], [2], [1], [1], [0, 0, 0, 1, 1, 1], [0], [0]>} : vector<2x8x8xf32>, vector<2x8x8xf32>, vector<2x8x8xf32> -> vector<2x8x8xf32>
    "tpu.trace_stop"() : () -> ()
    %cst_89 = arith.constant dense<0xFF800000> : vector<2x8xf32>
    %238 = vector.multi_reduction <maximumf>, %237, %cst_89 [2] : vector<2x8x8xf32> to vector<2x8xf32>
    %239 = vector.shape_cast %238 : vector<2x8xf32> to vector<2x8x1xf32>
    %240 = vector.broadcast %239 : vector<2x8x1xf32> to vector<2x8x8xf32>
    %241 = arith.subf %237, %240 : vector<2x8x8xf32>
    %242 = math.exp %241 : vector<2x8x8xf32>
    %cst_90 = arith.constant dense<0.000000e+00> : vector<2x8xf32>
    %243 = vector.multi_reduction <add>, %242, %cst_90 [2] : vector<2x8x8xf32> to vector<2x8xf32>
    %244 = vector.shape_cast %243 : vector<2x8xf32> to vector<2x8x1xf32>
    %245 = tpu.reciprocal %244 {approx = true} : vector<2x8x1xf32> -> vector<2x8x1xf32>
    %246 = vector.broadcast %245 : vector<2x8x1xf32> to vector<2x8x8xf32>
    %247 = arith.mulf %242, %246 : vector<2x8x8xf32>
    %248 = vector.extract_strided_slice %189 {offsets = [0, 0, 24], sizes = [2, 8, 8], strides = [1, 1, 1]} : vector<2x8x32xf32> to vector<2x8x8xf32>
    "tpu.trace_start"() <{level = 10 : i32, message = "bqk,bkd->bqd"}> : () -> ()
    %cst_91 = arith.constant dense<0.000000e+00> : vector<2x8x8xf32>
    %249 = tpu.matmul %247, %248, %cst_91 {dimension_numbers = #tpu.dot_dimension_numbers<[2], [1], [1], [2], [0, 0, 0, 1, 1, 2], [0], [0]>} : vector<2x8x8xf32>, vector<2x8x8xf32>, vector<2x8x8xf32> -> vector<2x8x8xf32>
    "tpu.trace_stop"() : () -> ()
    %250 = tpu.concatenate %204, %219, %234, %249 in 2 : vector<2x8x8xf32>, vector<2x8x8xf32>, vector<2x8x8xf32>, vector<2x8x8xf32> -> vector<2x8x32xf32>
    %251 = vector.shape_cast %250 : vector<2x8x32xf32> to vector<16x32xf32>
    %252 = vector.shape_cast %2 : vector<8x32xf32> to vector<1x8x32xf32>
    %253 = vector.shape_cast %252 : vector<1x8x32xf32> to vector<1x8x32xf32>
    %254 = vector.broadcast %253 : vector<1x8x32xf32> to vector<2x8x32xf32>
    %255 = vector.shape_cast %254 : vector<2x8x32xf32> to vector<16x32xf32>
    %256 = vector.extract_strided_slice %169 {offsets = [1, 0], sizes = [1, 32], strides = [1, 1]} : vector<9x96xf32> to vector<1x32xf32>
    %257 = vector.extract_strided_slice %169 {offsets = [2, 0], sizes = [1, 32], strides = [1, 1]} : vector<9x96xf32> to vector<1x32xf32>
    %258 = vector.extract_strided_slice %169 {offsets = [3, 0], sizes = [1, 32], strides = [1, 1]} : vector<9x96xf32> to vector<1x32xf32>
    %259 = vector.extract_strided_slice %169 {offsets = [4, 0], sizes = [1, 64], strides = [1, 1]} : vector<9x96xf32> to vector<1x64xf32>
    %260 = vector.extract_strided_slice %169 {offsets = [5, 0], sizes = [1, 32], strides = [1, 1]} : vector<9x96xf32> to vector<1x32xf32>
    %261 = vector.extract_strided_slice %169 {offsets = [6, 0], sizes = [1, 32], strides = [1, 1]} : vector<9x96xf32> to vector<1x32xf32>
    %262 = vector.extract_strided_slice %169 {offsets = [7, 0], sizes = [1, 32], strides = [1, 1]} : vector<9x96xf32> to vector<1x32xf32>
    %cst_92 = arith.constant dense<0.000000e+00> : vector<16x32xf32>
    %263 = tpu.matmul %251, %172, %cst_92 {dimension_numbers = #tpu.dot_dimension_numbers<[1], [0], [0], [1], [0, 0, 1, 1], [], []>} : vector<16x32xf32>, vector<32x32xf32>, vector<16x32xf32> -> vector<16x32xf32>
    %264 = vector.broadcast %256 : vector<1x32xf32> to vector<16x32xf32>
    %265 = arith.addf %263, %264 : vector<16x32xf32>
    %266 = arith.addf %255, %265 : vector<16x32xf32>
    %cst_93 = arith.constant dense<0.000000e+00> : vector<16xf32>
    %267 = vector.multi_reduction <add>, %266, %cst_93 [1] : vector<16x32xf32> to vector<16xf32>
    %268 = vector.shape_cast %267 : vector<16xf32> to vector<16x1xf32>
    %cst_94 = arith.constant 3.200000e+01 : f32
    %269 = vector.broadcast %cst_94 : f32 to vector<16x1xf32>
    %270 = arith.divf %268, %269 : vector<16x1xf32>
    %271 = vector.broadcast %270 : vector<16x1xf32> to vector<16x32xf32>
    %272 = arith.subf %266, %271 : vector<16x32xf32>
    %273 = arith.mulf %272, %272 : vector<16x32xf32>
    %cst_95 = arith.constant dense<0.000000e+00> : vector<16xf32>
    %274 = vector.multi_reduction <add>, %273, %cst_95 [1] : vector<16x32xf32> to vector<16xf32>
    %275 = vector.shape_cast %274 : vector<16xf32> to vector<16x1xf32>
    %cst_96 = arith.constant 3.200000e+01 : f32
    %276 = vector.broadcast %cst_96 : f32 to vector<16x1xf32>
    %277 = arith.divf %275, %276 : vector<16x1xf32>
    %cst_97 = arith.constant 9.99999974E-6 : f32
    %278 = vector.broadcast %cst_97 : f32 to vector<16x1xf32>
    %279 = arith.addf %277, %278 : vector<16x1xf32>
    %280 = math.rsqrt %279 : vector<16x1xf32>
    %281 = vector.broadcast %280 : vector<16x1xf32> to vector<16x32xf32>
    %282 = arith.mulf %272, %281 : vector<16x32xf32>
    %283 = vector.broadcast %257 : vector<1x32xf32> to vector<16x32xf32>
    %284 = arith.mulf %282, %283 : vector<16x32xf32>
    %285 = vector.broadcast %258 : vector<1x32xf32> to vector<16x32xf32>
    %286 = arith.addf %284, %285 : vector<16x32xf32>
    %cst_98 = arith.constant dense<0.000000e+00> : vector<16x64xf32>
    %287 = tpu.matmul %286, %173, %cst_98 {dimension_numbers = #tpu.dot_dimension_numbers<[1], [0], [0], [1], [0, 0, 1, 1], [], []>} : vector<16x32xf32>, vector<32x64xf32>, vector<16x64xf32> -> vector<16x64xf32>
    %288 = vector.broadcast %259 : vector<1x64xf32> to vector<16x64xf32>
    %289 = arith.addf %287, %288 : vector<16x64xf32>
    %cst_99 = arith.constant 5.000000e-01 : f32
    %290 = vector.broadcast %cst_99 : f32 to vector<16x64xf32>
    %291 = arith.mulf %290, %289 : vector<16x64xf32>
    %cst_100 = arith.constant 4.471500e-02 : f32
    %292 = vector.broadcast %cst_100 : f32 to vector<16x64xf32>
    %293 = arith.mulf %292, %289 : vector<16x64xf32>
    %294 = arith.mulf %293, %289 : vector<16x64xf32>
    %295 = arith.mulf %294, %289 : vector<16x64xf32>
    %296 = arith.addf %289, %295 : vector<16x64xf32>
    %cst_101 = arith.constant 0.797884583 : f32
    %297 = vector.broadcast %cst_101 : f32 to vector<16x64xf32>
    %298 = arith.mulf %297, %296 : vector<16x64xf32>
    %299 = math.tanh %298 : vector<16x64xf32>
    %cst_102 = arith.constant 1.000000e+00 : f32
    %300 = vector.broadcast %cst_102 : f32 to vector<16x64xf32>
    %301 = arith.addf %300, %299 : vector<16x64xf32>
    %302 = arith.mulf %291, %301 : vector<16x64xf32>
    %cst_103 = arith.constant dense<0.000000e+00> : vector<16x32xf32>
    %303 = tpu.matmul %302, %174, %cst_103 {dimension_numbers = #tpu.dot_dimension_numbers<[1], [0], [0], [1], [0, 0, 1, 1], [], []>} : vector<16x64xf32>, vector<64x32xf32>, vector<16x32xf32> -> vector<16x32xf32>
    %304 = vector.broadcast %260 : vector<1x32xf32> to vector<16x32xf32>
    %305 = arith.addf %303, %304 : vector<16x32xf32>
    %306 = arith.addf %286, %305 : vector<16x32xf32>
    %cst_104 = arith.constant dense<0.000000e+00> : vector<16xf32>
    %307 = vector.multi_reduction <add>, %306, %cst_104 [1] : vector<16x32xf32> to vector<16xf32>
    %308 = vector.shape_cast %307 : vector<16xf32> to vector<16x1xf32>
    %cst_105 = arith.constant 3.200000e+01 : f32
    %309 = vector.broadcast %cst_105 : f32 to vector<16x1xf32>
    %310 = arith.divf %308, %309 : vector<16x1xf32>
    %311 = vector.broadcast %310 : vector<16x1xf32> to vector<16x32xf32>
    %312 = arith.subf %306, %311 : vector<16x32xf32>
    %313 = arith.mulf %312, %312 : vector<16x32xf32>
    %cst_106 = arith.constant dense<0.000000e+00> : vector<16xf32>
    %314 = vector.multi_reduction <add>, %313, %cst_106 [1] : vector<16x32xf32> to vector<16xf32>
    %315 = vector.shape_cast %314 : vector<16xf32> to vector<16x1xf32>
    %cst_107 = arith.constant 3.200000e+01 : f32
    %316 = vector.broadcast %cst_107 : f32 to vector<16x1xf32>
    %317 = arith.divf %315, %316 : vector<16x1xf32>
    %cst_108 = arith.constant 9.99999974E-6 : f32
    %318 = vector.broadcast %cst_108 : f32 to vector<16x1xf32>
    %319 = arith.addf %317, %318 : vector<16x1xf32>
    %320 = math.rsqrt %319 : vector<16x1xf32>
    %321 = vector.broadcast %320 : vector<16x1xf32> to vector<16x32xf32>
    %322 = arith.mulf %312, %321 : vector<16x32xf32>
    %323 = vector.broadcast %261 : vector<1x32xf32> to vector<16x32xf32>
    %324 = arith.mulf %322, %323 : vector<16x32xf32>
    %325 = vector.broadcast %262 : vector<1x32xf32> to vector<16x32xf32>
    %326 = arith.addf %324, %325 : vector<16x32xf32>
    %c0_109 = arith.constant 0 : index
    %c0_110 = arith.constant 0 : index
    %327 = vector.load %arg20[%c0_109, %c0_110] : memref<32x16xf32, #tpu.memory_space<vmem>>, vector<32x16xf32>
    %328 = vector.extract_strided_slice %169 {offsets = [8, 0], sizes = [1, 16], strides = [1, 1]} : vector<9x96xf32> to vector<1x16xf32>
    %cst_111 = arith.constant dense<0.000000e+00> : vector<16x16xf32>
    %329 = tpu.matmul %326, %327, %cst_111 {dimension_numbers = #tpu.dot_dimension_numbers<[1], [0], [0], [1], [0, 0, 1, 1], [], []>} : vector<16x32xf32>, vector<32x16xf32>, vector<16x16xf32> -> vector<16x16xf32>
    %330 = vector.broadcast %328 : vector<1x16xf32> to vector<16x16xf32>
    %331 = arith.addf %329, %330 : vector<16x16xf32>
    %c0_112 = arith.constant 0 : index
    %c0_113 = arith.constant 0 : index
    %332 = vector.load %arg21[%c0_112, %c0_113] : memref<16x16xf32, #tpu.memory_space<vmem>>, vector<16x16xf32>
    tpu.vector_store %arg21[%c0_112, %c0_113], %331 {strides = array<i32>} : memref<16x16xf32, #tpu.memory_space<vmem>>, vector<16x16xf32>,
    return
  }
}

</mosaic_0001>

<llo_original>
// kernel: perceiver_io_forward.1
$region0: #{perceiver_io_forward.1}
  #allocation0 [shape = 'u32[]', space=smem, size = 0x4, offset = 0x4, fixed_abs, tag = 'smem constant byte address 0x4 - core index']
  #allocation1 [shape = 'u32[72,128]{1,0:T(1,128)}', space=vmem, size = 0x9000, scoped, tag = 'internal scratch']
  %s0 = inlined_call_operand.vmem [shape: f32[2,16,32], index: 0, kind: input, shape index: {}]
  %s1 = inlined_call_operand.hbm [shape: f32[8,32], index: 1, kind: input, shape index: {}]
  %s2 = inlined_call_operand.hbm [shape: f32[8,32], index: 2, kind: input, shape index: {}]
  %s3 = inlined_call_operand.vmem [shape: f32[32,32], index: 3, kind: input, shape index: {}]
  %s4 = inlined_call_operand.vmem [shape: f32[32,64], index: 4, kind: input, shape index: {}]
  %s5 = inlined_call_operand.vmem [shape: f32[32,32], index: 5, kind: input, shape index: {}]
  %s6 = inlined_call_operand.vmem [shape: f32[32,64], index: 6, kind: input, shape index: {}]
  %s7 = inlined_call_operand.vmem [shape: f32[64,32], index: 7, kind: input, shape index: {}]
  %s8 = inlined_call_operand.hbm [shape: f32[8,96], index: 8, kind: input, shape index: {}]
  %s9 = inlined_call_operand.vmem [shape: f32[32,96], index: 9, kind: input, shape index: {}]
  %s10 = inlined_call_operand.vmem [shape: f32[32,32], index: 10, kind: input, shape index: {}]
  %s11 = inlined_call_operand.hbm [shape: f32[32,64], index: 11, kind: input, shape index: {}]
  %s12 = inlined_call_operand.vmem [shape: f32[64,32], index: 12, kind: input, shape index: {}]
  %s13 = inlined_call_operand.hbm [shape: f32[8,96], index: 13, kind: input, shape index: {}]
  %s14 = inlined_call_operand.hbm [shape: f32[32,32], index: 14, kind: input, shape index: {}]
  %s15 = inlined_call_operand.hbm [shape: f32[32,64], index: 15, kind: input, shape index: {}]
  %s16 = inlined_call_operand.hbm [shape: f32[32,32], index: 16, kind: input, shape index: {}]
  %s17 = inlined_call_operand.hbm [shape: f32[32,64], index: 17, kind: input, shape index: {}]
  %s18 = inlined_call_operand.vmem [shape: f32[64,32], index: 18, kind: input, shape index: {}]
  %s19 = inlined_call_operand.vmem [shape: f32[9,96], index: 19, kind: input, shape index: {}]
  %s20 = inlined_call_operand.vmem [shape: f32[32,16], index: 20, kind: input, shape index: {}]
  %s21 = inlined_call_operand.hbm [shape: f32[16,16], index: 21, kind: output, shape index: {}]
  %s22 = sld [smem:[#allocation0]]
  $region137: #{perceiver_io_forward.1} parent=0
    _
  %s24 = ssub.s32 1, %s22
  %s25 = scalar_select 0, %s24, %s22
  $region1: #{perceiver_io_forward.1} parent=0
    #allocation2 [shape = 'u8[4096]{0}', space=vmem, size = 0x1000, scoped, tag = 'input window, operand 1, single buffered']
    #allocation3 [shape = 's32[1]{0}', space=sflag, size = 0x4, scoped, tag = 'scoped memory for perceiver_io_forward.1']
    #allocation4 [shape = 's32[1]{0}', space=sflag, size = 0x4, scoped, tag = 'scoped memory for perceiver_io_forward.1']
    #allocation5 [shape = 'u8[4096]{0}', space=vmem, size = 0x1000, scoped, tag = 'input window, operand 2, single buffered']
    #allocation6 [shape = 's32[1]{0}', space=sflag, size = 0x4, scoped, tag = 'scoped memory for perceiver_io_forward.1']
    #allocation7 [shape = 'u8[4096]{0}', space=vmem, size = 0x1000, scoped, tag = 'input window, operand 8, single buffered']
    #allocation8 [shape = 'u8[16384]{0}', space=vmem, size = 0x4000, scoped, tag = 'input window, operand 11, single buffered']
    #allocation9 [shape = 's32[1]{0}', space=sflag, size = 0x4, scoped, tag = 'scoped memory for perceiver_io_forward.1']
    #allocation10 [shape = 'u8[4096]{0}', space=vmem, size = 0x1000, scoped, tag = 'input window, operand 13, single buffered']
    #allocation11 [shape = 'u8[16384]{0}', space=vmem, size = 0x4000, scoped, tag = 'input window, operand 14, single buffered']
    #allocation12 [shape = 's32[1]{0}', space=sflag, size = 0x4, scoped, tag = 'scoped memory for perceiver_io_forward.1']
    #allocation13 [shape = 'u8[16384]{0}', space=vmem, size = 0x4000, scoped, tag = 'input window, operand 15, single buffered']
    #allocation14 [shape = 'u8[16384]{0}', space=vmem, size = 0x4000, scoped, tag = 'input window, operand 16, single buffered']
    #allocation15 [shape = 's32[1]{0}', space=sflag, size = 0x4, scoped, tag = 'scoped memory for perceiver_io_forward.1']
    #allocation16 [shape = 'u8[16384]{0}', space=vmem, size = 0x4000, scoped, tag = 'input window, operand 17, single buffered']
    #allocation17 [shape = 'u8[8192]{0}', space=vmem, size = 0x2000, scoped, tag = 'output window, operand 0, single buffered']
    %26 = vsyncpa [#allocation3], 0
    %27 = vsyncpa [#allocation6], 0
    %28 = vsyncpa [#allocation9], 0
    %29 = vsyncpa [#allocation12], 0
    %30 = vsyncpa [#allocation15], 0
    %31 = vsyncpa [#allocation4], 0
    // Predicated region
    $region2: #{perceiver_io_forward.1} parent=1 // pred_check
      _
    $region3: #{perceiver_io_forward.1} parent=1 // pred_check_branch
      %33 = sbr.rel (0) target = $region5
    $region4: #{perceiver_io_forward.1} parent=1 // pred_region
      _
    $region5: #{perceiver_io_forward.1} parent=1 // pred_fallthru
      _
    // Predicated region
    $region6: #{perceiver_io_forward.1} parent=1 // pred_check
      _
    $region7: #{perceiver_io_forward.1} parent=1 // pred_check_branch
      %35 = sbr.rel (0) target = $region9
    $region8: #{perceiver_io_forward.1} parent=1 // pred_region
      %37 = vsyncadd [#allocation3], 0
      %s39 = sshll.u32 %s1, 4
      %s40 = int_to_ptr.hbm [resolvable:$true] %s39
      %s41 = sshll.u32 [#allocation2], 4
      %s42 = int_to_ptr.vmem [resolvable:$true] %s41
      %44 = dma.hbm_to_vmem [thread:$0]  %s40, 128, %s42, [#allocation3]
    $region9: #{perceiver_io_forward.1} parent=1 // pred_fallthru
      _
    // Predicated region
    $region10: #{perceiver_io_forward.1} parent=1 // pred_check
      _
    $region11: #{perceiver_io_forward.1} parent=1 // pred_check_branch
      %46 = sbr.rel (0) target = $region13
    $region12: #{perceiver_io_forward.1} parent=1 // pred_region
      %48 = vsyncadd [#allocation6], 0
      %s50 = sshll.u32 %s2, 4
      %s51 = int_to_ptr.hbm [resolvable:$true] %s50
      %s52 = sshll.u32 [#allocation5], 4
      %s53 = int_to_ptr.vmem [resolvable:$true] %s52
      %55 = dma.hbm_to_vmem [thread:$0]  %s51, 128, %s53, [#allocation6]
    $region13: #{perceiver_io_forward.1} parent=1 // pred_fallthru
      _
    // Predicated region
    $region14: #{perceiver_io_forward.1} parent=1 // pred_check
      _
    $region15: #{perceiver_io_forward.1} parent=1 // pred_check_branch
      %57 = sbr.rel (0) target = $region17
    $region16: #{perceiver_io_forward.1} parent=1 // pred_region
      _
    $region17: #{perceiver_io_forward.1} parent=1 // pred_fallthru
      _
    // Predicated region
    $region18: #{perceiver_io_forward.1} parent=1 // pred_check
      _
    $region19: #{perceiver_io_forward.1} parent=1 // pred_check_branch
      %59 = sbr.rel (0) target = $region21
    $region20: #{perceiver_io_forward.1} parent=1 // pred_region
      _
    $region21: #{perceiver_io_forward.1} parent=1 // pred_fallthru
      _
    // Predicated region
    $region22: #{perceiver_io_forward.1} parent=1 // pred_check
      _
    $region23: #{perceiver_io_forward.1} parent=1 // pred_check_branch
      %61 = sbr.rel (0) target = $region25
    $region24: #{perceiver_io_forward.1} parent=1 // pred_region
      _
    $region25: #{perceiver_io_forward.1} parent=1 // pred_fallthru
      _
    // Predicated region
    $region26: #{perceiver_io_forward.1} parent=1 // pred_check
      _
    $region27: #{perceiver_io_forward.1} parent=1 // pred_check_branch
      %63 = sbr.rel (0) target = $region29
    $region28: #{perceiver_io_forward.1} parent=1 // pred_region
      _
    $region29: #{perceiver_io_forward.1} parent=1 // pred_fallthru
      _
    // Predicated region
    $region30: #{perceiver_io_forward.1} parent=1 // pred_check
      _
    $region31: #{perceiver_io_forward.1} parent=1 // pred_check_branch
      %65 = sbr.rel (0) target = $region33
    $region32: #{perceiver_io_forward.1} parent=1 // pred_region
      _
    $region33: #{perceiver_io_forward.1} parent=1 // pred_fallthru
      _
    // Predicated region
    $region34: #{perceiver_io_forward.1} parent=1 // pred_check
      _
    $region35: #{perceiver_io_forward.1} parent=1 // pred_check_branch
      %67 = sbr.rel (0) target = $region37
    $region36: #{perceiver_io_forward.1} parent=1 // pred_region
      %69 = vsyncadd [#allocation6], 0
      %s71 = sshll.u32 %s8, 4
      %s72 = int_to_ptr.hbm [resolvable:$true] %s71
      %s73 = sshll.u32 [#allocation7], 4
      %s74 = int_to_ptr.vmem [resolvable:$true] %s73
      %76 = dma.hbm_to_vmem [thread:$0]  %s72, 128, %s74, [#allocation6]
    $region37: #{perceiver_io_forward.1} parent=1 // pred_fallthru
      _
    // Predicated region
    $region38: #{perceiver_io_forward.1} parent=1 // pred_check
      _
    $region39: #{perceiver_io_forward.1} parent=1 // pred_check_branch
      %78 = sbr.rel (0) target = $region41
    $region40: #{perceiver_io_forward.1} parent=1 // pred_region
      _
    $region41: #{perceiver_io_forward.1} parent=1 // pred_fallthru
      _
    // Predicated region
    $region42: #{perceiver_io_forward.1} parent=1 // pred_check
      _
    $region43: #{perceiver_io_forward.1} parent=1 // pred_check_branch
      %80 = sbr.rel (0) target = $region45
    $region44: #{perceiver_io_forward.1} parent=1 // pred_region
      _
    $region45: #{perceiver_io_forward.1} parent=1 // pred_fallthru
      _
    // Predicated region
    $region46: #{perceiver_io_forward.1} parent=1 // pred_check
      _
    $region47: #{perceiver_io_forward.1} parent=1 // pred_check_branch
      %82 = sbr.rel (0) target = $region49
    $region48: #{perceiver_io_forward.1} parent=1 // pred_region
      %84 = vsyncadd [#allocation9], 0
      %s85 = sshll.u32 %s11, 4
      %s86 = int_to_ptr.hbm [resolvable:$true] %s85
      %s87 = sshll.u32 [#allocation8], 4
      %s88 = int_to_ptr.vmem [resolvable:$true] %s87
      %93 = dma.hbm_to_vmem [thread:$0]  %s86, 512, %s88, [#allocation9], 128, 128, 8
    $region49: #{perceiver_io_forward.1} parent=1 // pred_fallthru
      _
    // Predicated region
    $region50: #{perceiver_io_forward.1} parent=1 // pred_check
      _
    $region51: #{perceiver_io_forward.1} parent=1 // pred_check_branch
      %95 = sbr.rel (0) target = $region53
    $region52: #{perceiver_io_forward.1} parent=1 // pred_region
      _
    $region53: #{perceiver_io_forward.1} parent=1 // pred_fallthru
      _
    // Predicated region
    $region54: #{perceiver_io_forward.1} parent=1 // pred_check
      _
    $region55: #{perceiver_io_forward.1} parent=1 // pred_check_branch
      %97 = sbr.rel (0) target = $region57
    $region56: #{perceiver_io_forward.1} parent=1 // pred_region
      %99 = vsyncadd [#allocation9], 0
      %s101 = sshll.u32 %s13, 4
      %s102 = int_to_ptr.hbm [resolvable:$true] %s101
      %s103 = sshll.u32 [#allocation10], 4
      %s104 = int_to_ptr.vmem [resolvable:$true] %s103
      %106 = dma.hbm_to_vmem [thread:$0]  %s102, 128, %s104, [#allocation9]
    $region57: #{perceiver_io_forward.1} parent=1 // pred_fallthru
      _
    // Predicated region
    $region58: #{perceiver_io_forward.1} parent=1 // pred_check
      _
    $region59: #{perceiver_io_forward.1} parent=1 // pred_check_branch
      %108 = sbr.rel (0) target = $region61
    $region60: #{perceiver_io_forward.1} parent=1 // pred_region
      %110 = vsyncadd [#allocation12], 0
      %s111 = sshll.u32 %s14, 4
      %s112 = int_to_ptr.hbm [resolvable:$true] %s111
      %s113 = sshll.u32 [#allocation11], 4
      %s114 = int_to_ptr.vmem [resolvable:$true] %s113
      %119 = dma.hbm_to_vmem [thread:$0]  %s112, 512, %s114, [#allocation12], 128, 128, 8
    $region61: #{perceiver_io_forward.1} parent=1 // pred_fallthru
      _
    // Predicated region
    $region62: #{perceiver_io_forward.1} parent=1 // pred_check
      _
    $region63: #{perceiver_io_forward.1} parent=1 // pred_check_branch
      %121 = sbr.rel (0) target = $region65
    $region64: #{perceiver_io_forward.1} parent=1 // pred_region
      %123 = vsyncadd [#allocation12], 0
      %s124 = sshll.u32 %s15, 4
      %s125 = int_to_ptr.hbm [resolvable:$true] %s124
      %s126 = sshll.u32 [#allocation13], 4
      %s127 = int_to_ptr.vmem [resolvable:$true] %s126
      %132 = dma.hbm_to_vmem [thread:$0]  %s125, 512, %s127, [#allocation12], 128, 128, 8
    $region65: #{perceiver_io_forward.1} parent=1 // pred_fallthru
      _
    // Predicated region
    $region66: #{perceiver_io_forward.1} parent=1 // pred_check
      _
    $region67: #{perceiver_io_forward.1} parent=1 // pred_check_branch
      %134 = sbr.rel (0) target = $region69
    $region68: #{perceiver_io_forward.1} parent=1 // pred_region
      %136 = vsyncadd [#allocation15], 0
      %s137 = sshll.u32 %s16, 4
      %s138 = int_to_ptr.hbm [resolvable:$true] %s137
      %s139 = sshll.u32 [#allocation14], 4
      %s140 = int_to_ptr.vmem [resolvable:$true] %s139
      %145 = dma.hbm_to_vmem [thread:$0]  %s138, 512, %s140, [#allocation15], 128, 128, 8
    $region69: #{perceiver_io_forward.1} parent=1 // pred_fallthru
      _
    // Predicated region
    $region70: #{perceiver_io_forward.1} parent=1 // pred_check
      _
    $region71: #{perceiver_io_forward.1} parent=1 // pred_check_branch
      %147 = sbr.rel (0) target = $region73
    $region72: #{perceiver_io_forward.1} parent=1 // pred_region
      %149 = vsyncadd [#allocation15], 0
      %s150 = sshll.u32 %s17, 4
      %s151 = int_to_ptr.hbm [resolvable:$true] %s150
      %s152 = sshll.u32 [#allocation16], 4
      %s153 = int_to_ptr.vmem [resolvable:$true] %s152
      %158 = dma.hbm_to_vmem [thread:$0]  %s151, 512, %s153, [#allocation15], 128, 128, 8
    $region73: #{perceiver_io_forward.1} parent=1 // pred_fallthru
      _
    // Predicated region
    $region74: #{perceiver_io_forward.1} parent=1 // pred_check
      _
    $region75: #{perceiver_io_forward.1} parent=1 // pred_check_branch
      %160 = sbr.rel (0) target = $region77
    $region76: #{perceiver_io_forward.1} parent=1 // pred_region
      _
    $region77: #{perceiver_io_forward.1} parent=1 // pred_fallthru
      _
    // Predicated region
    $region78: #{perceiver_io_forward.1} parent=1 // pred_check
      _
    $region79: #{perceiver_io_forward.1} parent=1 // pred_check_branch
      %162 = sbr.rel (0) target = $region81
    $region80: #{perceiver_io_forward.1} parent=1 // pred_region
      _
    $region81: #{perceiver_io_forward.1} parent=1 // pred_fallthru
      _
    // Predicated region
    $region82: #{perceiver_io_forward.1} parent=1 // pred_check
      _
    $region83: #{perceiver_io_forward.1} parent=1 // pred_check_branch
      %164 = sbr.rel (0) target = $region85
    $region84: #{perceiver_io_forward.1} parent=1 // pred_region
      _
    $region85: #{perceiver_io_forward.1} parent=1 // pred_fallthru
      _
    // Predicated region
    $region86: #{perceiver_io_forward.1} parent=1 // pred_check
      _
    $region87: #{perceiver_io_forward.1} parent=1 // pred_check_branch
      %166 = sbr.rel (0) target = $region89
    $region88: #{perceiver_io_forward.1} parent=1 // pred_region
      %168 = dma.done [#allocation3], 128
    $region89: #{perceiver_io_forward.1} parent=1 // pred_fallthru
      _
    // Predicated region
    $region90: #{perceiver_io_forward.1} parent=1 // pred_check
      _
    $region91: #{perceiver_io_forward.1} parent=1 // pred_check_branch
      %170 = sbr.rel (0) target = $region93
    $region92: #{perceiver_io_forward.1} parent=1 // pred_region
      %172 = dma.done [#allocation6], 128
    $region93: #{perceiver_io_forward.1} parent=1 // pred_fallthru
      _
    // Predicated region
    $region94: #{perceiver_io_forward.1} parent=1 // pred_check
      _
    $region95: #{perceiver_io_forward.1} parent=1 // pred_check_branch
      %174 = sbr.rel (0) target = $region97
    $region96: #{perceiver_io_forward.1} parent=1 // pred_region
      %176 = dma.done [#allocation6], 128
    $region97: #{perceiver_io_forward.1} parent=1 // pred_fallthru
      _
    // Predicated region
    $region98: #{perceiver_io_forward.1} parent=1 // pred_check
      _
    $region99: #{perceiver_io_forward.1} parent=1 // pred_check_branch
      %178 = sbr.rel (0) target = $region101
    $region100: #{perceiver_io_forward.1} parent=1 // pred_region
      %180 = dma.done [#allocation9], 512
    $region101: #{perceiver_io_forward.1} parent=1 // pred_fallthru
      _
    // Predicated region
    $region102: #{perceiver_io_forward.1} parent=1 // pred_check
      _
    $region103: #{perceiver_io_forward.1} parent=1 // pred_check_branch
      %182 = sbr.rel (0) target = $region105
    $region104: #{perceiver_io_forward.1} parent=1 // pred_region
      %184 = dma.done [#allocation9], 128
    $region105: #{perceiver_io_forward.1} parent=1 // pred_fallthru
      _
    // Predicated region
    $region106: #{perceiver_io_forward.1} parent=1 // pred_check
      _
    $region107: #{perceiver_io_forward.1} parent=1 // pred_check_branch
      %186 = sbr.rel (0) target = $region109
    $region108: #{perceiver_io_forward.1} parent=1 // pred_region
      %188 = dma.done [#allocation12], 512
    $region109: #{perceiver_io_forward.1} parent=1 // pred_fallthru
      _
    // Predicated region
    $region110: #{perceiver_io_forward.1} parent=1 // pred_check
      _
    $region111: #{perceiver_io_forward.1} parent=1 // pred_check_branch
      %190 = sbr.rel (0) target = $region113
    $region112: #{perceiver_io_forward.1} parent=1 // pred_region
      %192 = dma.done [#allocation12], 512
    $region113: #{perceiver_io_forward.1} parent=1 // pred_fallthru
      _
    // Predicated region
    $region114: #{perceiver_io_forward.1} parent=1 // pred_check
      _
    $region115: #{perceiver_io_forward.1} parent=1 // pred_check_branch
      %194 = sbr.rel (0) target = $region117
    $region116: #{perceiver_io_forward.1} parent=1 // pred_region
      %196 = dma.done [#allocation15], 512
    $region117: #{perceiver_io_forward.1} parent=1 // pred_fallthru
      _
    // Predicated region
    $region118: #{perceiver_io_forward.1} parent=1 // pred_check
      _
    $region119: #{perceiver_io_forward.1} parent=1 // pred_check_branch
      %198 = sbr.rel (0) target = $region121
    $region120: #{perceiver_io_forward.1} parent=1 // pred_region
      %200 = dma.done [#allocation15], 512
    $region121: #{perceiver_io_forward.1} parent=1 // pred_fallthru
      _
    %v201 = vld [vmem:[%s0] sm:$0xff]
    %v202 = vld [vmem:[%s0 + $0x8] sm:$0xff]
    %v203 = vld [vmem:[%s0 + $0x10] sm:$0xff]
    %v204 = vld [vmem:[%s0 + $0x18] sm:$0xff]
    %v205 = vld [vmem:[#allocation2] sm:$0xff]
    %v206 = vld [vmem:[#allocation5] sm:$0xff]
    %v207 = vld [vmem:[%s3] sm:$0xff]
    %v208 = vld [vmem:[%s3 + $0x8] sm:$0xff]
    %v209 = vld [vmem:[%s3 + $0x10] sm:$0xff]
    %v210 = vld [vmem:[%s3 + $0x18] sm:$0xff]
    %v211 = vld [vmem:[%s4] sm:$0xff]
    %v212 = vld [vmem:[%s4 + $0x8] sm:$0xff]
    %v213 = vld [vmem:[%s4 + $0x10] sm:$0xff]
    %v214 = vld [vmem:[%s4 + $0x18] sm:$0xff]
    %v215 = vld [vmem:[%s5] sm:$0xff]
    %v216 = vld [vmem:[%s5 + $0x8] sm:$0xff]
    %v217 = vld [vmem:[%s5 + $0x10] sm:$0xff]
    %v218 = vld [vmem:[%s5 + $0x18] sm:$0xff]
    %v219 = vld [vmem:[%s6] sm:$0xff]
    %v220 = vld [vmem:[%s6 + $0x8] sm:$0xff]
    %v221 = vld [vmem:[%s6 + $0x10] sm:$0xff]
    %v222 = vld [vmem:[%s6 + $0x18] sm:$0xff]
    %v223 = vld [vmem:[%s7] sm:$0xff]
    %v224 = vld [vmem:[%s7 + $0x8] sm:$0xff]
    %v225 = vld [vmem:[%s7 + $0x10] sm:$0xff]
    %v226 = vld [vmem:[%s7 + $0x18] sm:$0xff]
    %v227 = vld [vmem:[%s7 + $0x20] sm:$0xff]
    %v228 = vld [vmem:[%s7 + $0x28] sm:$0xff]
    %v229 = vld [vmem:[%s7 + $0x30] sm:$0xff]
    %v230 = vld [vmem:[%s7 + $0x38] sm:$0xff]
    %v231 = vld [vmem:[#allocation7] sm:$0xff]
    %v232 = vperm.slane %v231, 0
    %vm233 = vcmask 261120
    %v235 = vsel %vm233, %v205, 0
    %237 = vmatpush.msra.mxu0 0.0
    %238 = vmatpush.msra.mxu0 0.0
    %239 = vmatpush.msra.mxu0 0.0
    %240 = vmatpush.msra.mxu0 0.0
    %241 = vmatpush.msra.mxu0 0.0
    %242 = vmatpush.msra.mxu0 0.0
    %243 = vmatpush.msra.mxu0 0.0
    %244 = vmatpush.msra.mxu0 0.0
    %245 = vmatpush.msra.mxu0 0.0
    %246 = vmatpush.msra.mxu0 0.0
    %247 = vmatpush.msra.mxu0 0.0
    %248 = vmatpush.msra.mxu0 0.0
    %249 = vmatpush.msra.mxu0 %v210
    %250 = vmatpush.msra.mxu0 %v209
    %251 = vmatpush.msra.mxu0 %v208
    %252 = vmatpush.msra.mxu0 %v207
    %253 = vmatmul.f32.gmra.mxu0 %v235
    %v254 = vpop.f32.mrf.mxu0
    %v255 = vadd.f32 %v232, %v254
    %256 = vdwg.mxu0
    %258 = vrot.lane.b32.xlu0 %v232, 96
    %v259 = vpop.permute.xlu0 %258
    %v262 = vsel %vm233, %v201, 0
    %v265 = vsel %vm233, %v202, 0
    %v268 = vsel %vm233, %v203, 0
    %v271 = vsel %vm233, %v204, 0
    %273 = vmatpush.msra.mxu0 0.0
    %274 = vmatpush.msra.mxu0 0.0
    %275 = vmatpush.msra.mxu0 0.0
    %276 = vmatpush.msra.mxu0 0.0
    %277 = vmatpush.msra.mxu0 0.0
    %278 = vmatpush.msra.mxu0 0.0
    %279 = vmatpush.msra.mxu0 0.0
    %280 = vmatpush.msra.mxu0 0.0
    %281 = vmatpush.msra.mxu0 0.0
    %282 = vmatpush.msra.mxu0 0.0
    %283 = vmatpush.msra.mxu0 0.0
    %284 = vmatpush.msra.mxu0 0.0
    %285 = vmatpush.msra.mxu0 %v214
    %286 = vmatpush.msra.mxu0 %v213
    %287 = vmatpush.msra.mxu0 %v212
    %288 = vmatpush.msra.mxu0 %v211
    %289 = vmatmul.f32.gmra.mxu0 %v262
    %v290 = vpop.f32.mrf.mxu0
    %v291 = vadd.f32 %v259, %v290
    %292 = vmatmul.f32.gmra.mxu0 %v265
    %v293 = vpop.f32.mrf.mxu0
    %v294 = vadd.f32 %v259, %v293
    %295 = vmatmul.f32.gmra.mxu0 %v268
    %v296 = vpop.f32.mrf.mxu0
    %v297 = vadd.f32 %v259, %v296
    %298 = vmatmul.f32.gmra.mxu0 %v271
    %v299 = vpop.f32.mrf.mxu0
    %v300 = vadd.f32 %v259, %v299
    %301 = vdwg.mxu0
    %vm302 = vcmask 64512
    %v304 = vsel %vm302, %v255, 0
    %v307 = vsel %vm302, %v291, 0
    %v310 = vsel %vm302, %v294, 0
    %312 = vmatpush.xpose.msra.mxu0 0.0
    %313 = vmatpush.xpose.msra.mxu0 0.0
    %314 = vmatpush.xpose.msra.mxu0 0.0
    %315 = vmatpush.xpose.msra.mxu0 0.0
    %316 = vmatpush.xpose.msra.mxu0 0.0
    %317 = vmatpush.xpose.msra.mxu0 0.0
    %318 = vmatpush.xpose.msra.mxu0 0.0
    %319 = vmatpush.xpose.msra.mxu0 0.0
    %320 = vmatpush.xpose.msra.mxu0 0.0
    %321 = vmatpush.xpose.msra.mxu0 0.0
    %322 = vmatpush.xpose.msra.mxu0 0.0
    %323 = vmatpush.xpose.msra.mxu0 0.0
    %324 = vmatpush.xpose.msra.mxu0 0.0
    %325 = vmatpush.xpose.msra.mxu0 0.0
    %326 = vmatpush.xpose.msra.mxu0 %v310
    %327 = vmatpush.xpose.msra.mxu0 %v307
    %328 = vmatmul.f32.gmra.mxu0 %v304
    %v329 = vpop.f32.mrf.mxu0
    %v330 = vadd.f32 0.0, %v329
    %331 = vdwg.mxu0
    %v333 = vsel %vm302, %v297, 0
    %v336 = vsel %vm302, %v300, 0
    %338 = vmatpush.xpose.msra.mxu0 0.0
    %339 = vmatpush.xpose.msra.mxu0 0.0
    %340 = vmatpush.xpose.msra.mxu0 0.0
    %341 = vmatpush.xpose.msra.mxu0 0.0
    %342 = vmatpush.xpose.msra.mxu0 0.0
    %343 = vmatpush.xpose.msra.mxu0 0.0
    %344 = vmatpush.xpose.msra.mxu0 0.0
    %345 = vmatpush.xpose.msra.mxu0 0.0
    %346 = vmatpush.xpose.msra.mxu0 0.0
    %347 = vmatpush.xpose.msra.mxu0 0.0
    %348 = vmatpush.xpose.msra.mxu0 0.0
    %349 = vmatpush.xpose.msra.mxu0 0.0
    %350 = vmatpush.xpose.msra.mxu0 0.0
    %351 = vmatpush.xpose.msra.mxu0 0.0
    %352 = vmatpush.xpose.msra.mxu0 %v336
    %353 = vmatpush.xpose.msra.mxu0 %v333
    %354 = vmatmul.f32.gmra.mxu0 %v304
    %v355 = vpop.f32.mrf.mxu0
    %v356 = vadd.f32 0.0, %v355
    %357 = vdwg.mxu0
    %vm358 = vcmask 130048
    %v359 = vsel %vm358, %v330, -inf
    %360 = vmax.xlane.f32.xlu0 %v359
    %v361 = vpop.xlane.xlu0 %360
    %v362 = vsel %vm358, %v356, -inf
    %363 = vmax.xlane.f32.xlu0 %v362
    %v364 = vpop.xlane.xlu0 %363
    %v365 = vsub.f32 %v330, %v361
    %v366 = vsub.f32 %v356, %v364
    %v367 = vmul.f32 %v365, 1.442695
    %v368 = vpow.pop %v367
    %v369 = vmul.f32 %v366, 1.442695
    %v370 = vpow.pop %v369
    %v371 = vsel %vm358, %v368, 0.0
    %372 = vadd.xlane.f32.xlu0 %v371
    %v373 = vpop.xlane.xlu0 %372
    %v374 = vsel %vm358, %v370, 0.0
    %375 = vadd.xlane.f32.xlu0 %v374
    %v376 = vpop.xlane.xlu0 %375
    %v377 = vrcp.pop %v373
    %v378 = vrcp.pop %v376
    %v379 = vmul.f32 %v368, %v377
    %v380 = vmul.f32 %v370, %v378
    %381 = vrot.lane.b32.xlu0 %v291, 96
    %v382 = vpop.permute.xlu0 %381
    %383 = vrot.lane.b32.xlu0 %v294, 96
    %v384 = vpop.permute.xlu0 %383
    %v388 = vsel %vm358, %v379, 0
    %390 = vmatpush.msra.mxu0 0.0
    %391 = vmatpush.msra.mxu0 0.0
    %392 = vmatpush.msra.mxu0 0.0
    %393 = vmatpush.msra.mxu0 0.0
    %394 = vmatpush.msra.mxu0 0.0
    %395 = vmatpush.msra.mxu0 0.0
    %396 = vmatpush.msra.mxu0 0.0
    %397 = vmatpush.msra.mxu0 0.0
    %398 = vmatpush.msra.mxu0 0.0
    %399 = vmatpush.msra.mxu0 0.0
    %400 = vmatpush.msra.mxu0 0.0
    %401 = vmatpush.msra.mxu0 0.0
    %402 = vmatpush.msra.mxu0 0.0
    %403 = vmatpush.msra.mxu0 0.0
    %404 = vmatpush.msra.mxu0 %v384
    %405 = vmatpush.msra.mxu0 %v382
    %406 = vmatmul.f32.gmra.mxu0 %v388
    %v407 = vpop.f32.mrf.mxu0
    %v408 = vadd.f32 0.0, %v407
    %409 = vdwg.mxu0
    %410 = vrot.lane.b32.xlu0 %v297, 96
    %v411 = vpop.permute.xlu0 %410
    %412 = vrot.lane.b32.xlu0 %v300, 96
    %v413 = vpop.permute.xlu0 %412
    %v417 = vsel %vm358, %v380, 0
    %419 = vmatpush.msra.mxu0 0.0
    %420 = vmatpush.msra.mxu0 0.0
    %421 = vmatpush.msra.mxu0 0.0
    %422 = vmatpush.msra.mxu0 0.0
    %423 = vmatpush.msra.mxu0 0.0
    %424 = vmatpush.msra.mxu0 0.0
    %425 = vmatpush.msra.mxu0 0.0
    %426 = vmatpush.msra.mxu0 0.0
    %427 = vmatpush.msra.mxu0 0.0
    %428 = vmatpush.msra.mxu0 0.0
    %429 = vmatpush.msra.mxu0 0.0
    %430 = vmatpush.msra.mxu0 0.0
    %431 = vmatpush.msra.mxu0 0.0
    %432 = vmatpush.msra.mxu0 0.0
    %433 = vmatpush.msra.mxu0 %v413
    %434 = vmatpush.msra.mxu0 %v411
    %435 = vmatmul.f32.gmra.mxu0 %v417
    %v436 = vpop.f32.mrf.mxu0
    %v437 = vadd.f32 0.0, %v436
    %438 = vdwg.mxu0
    %439 = vrot.lane.b32.xlu0 %v255, 120
    %v440 = vpop.permute.xlu0 %439
    %441 = vrot.lane.b32.xlu0 %v291, 120
    %v442 = vpop.permute.xlu0 %441
    %443 = vrot.lane.b32.xlu0 %v294, 120
    %v444 = vpop.permute.xlu0 %443
    %v445 = vsel %vm302, %v440, 0
    %v447 = vsel %vm302, %v442, 0
    %v449 = vsel %vm302, %v444, 0
    %451 = vmatpush.xpose.msra.mxu0 0.0
    %452 = vmatpush.xpose.msra.mxu0 0.0
    %453 = vmatpush.xpose.msra.mxu0 0.0
    %454 = vmatpush.xpose.msra.mxu0 0.0
    %455 = vmatpush.xpose.msra.mxu0 0.0
    %456 = vmatpush.xpose.msra.mxu0 0.0
    %457 = vmatpush.xpose.msra.mxu0 0.0
    %458 = vmatpush.xpose.msra.mxu0 0.0
    %459 = vmatpush.xpose.msra.mxu0 0.0
    %460 = vmatpush.xpose.msra.mxu0 0.0
    %461 = vmatpush.xpose.msra.mxu0 0.0
    %462 = vmatpush.xpose.msra.mxu0 0.0
    %463 = vmatpush.xpose.msra.mxu0 0.0
    %464 = vmatpush.xpose.msra.mxu0 0.0
    %465 = vmatpush.xpose.msra.mxu0 %v449
    %466 = vmatpush.xpose.msra.mxu0 %v447
    %467 = vmatmul.f32.gmra.mxu0 %v445
    %v468 = vpop.f32.mrf.mxu0
    %v469 = vadd.f32 0.0, %v468
    %470 = vdwg.mxu0
    %471 = vrot.lane.b32.xlu0 %v297, 120
    %v472 = vpop.permute.xlu0 %471
    %473 = vrot.lane.b32.xlu0 %v300, 120
    %v474 = vpop.permute.xlu0 %473
    %v475 = vsel %vm302, %v472, 0
    %v477 = vsel %vm302, %v474, 0
    %479 = vmatpush.xpose.msra.mxu0 0.0
    %480 = vmatpush.xpose.msra.mxu0 0.0
    %481 = vmatpush.xpose.msra.mxu0 0.0
    %482 = vmatpush.xpose.msra.mxu0 0.0
    %483 = vmatpush.xpose.msra.mxu0 0.0
    %484 = vmatpush.xpose.msra.mxu0 0.0
    %485 = vmatpush.xpose.msra.mxu0 0.0
    %486 = vmatpush.xpose.msra.mxu0 0.0
    %487 = vmatpush.xpose.msra.mxu0 0.0
    %488 = vmatpush.xpose.msra.mxu0 0.0
    %489 = vmatpush.xpose.msra.mxu0 0.0
    %490 = vmatpush.xpose.msra.mxu0 0.0
    %491 = vmatpush.xpose.msra.mxu0 0.0
    %492 = vmatpush.xpose.msra.mxu0 0.0
    %493 = vmatpush.xpose.msra.mxu0 %v477
    %494 = vmatpush.xpose.msra.mxu0 %v475
    %495 = vmatmul.f32.gmra.mxu0 %v445
    %v496 = vpop.f32.mrf.mxu0
    %v497 = vadd.f32 0.0, %v496
    %498 = vdwg.mxu0
    %v499 = vsel %vm358, %v469, -inf
    %500 = vmax.xlane.f32.xlu0 %v499
    %v501 = vpop.xlane.xlu0 %500
    %v502 = vsel %vm358, %v497, -inf
    %503 = vmax.xlane.f32.xlu0 %v502
    %v504 = vpop.xlane.xlu0 %503
    %v505 = vsub.f32 %v469, %v501
    %v506 = vsub.f32 %v497, %v504
    %v507 = vmul.f32 %v505, 1.442695
    %v508 = vpow.pop %v507
    %v509 = vmul.f32 %v506, 1.442695
    %v510 = vpow.pop %v509
    %v511 = vsel %vm358, %v508, 0.0
    %512 = vadd.xlane.f32.xlu0 %v511
    %v513 = vpop.xlane.xlu0 %512
    %v514 = vsel %vm358, %v510, 0.0
    %515 = vadd.xlane.f32.xlu0 %v514
    %v516 = vpop.xlane.xlu0 %515
    %v517 = vrcp.pop %v513
    %v518 = vrcp.pop %v516
    %v519 = vmul.f32 %v508, %v517
    %v520 = vmul.f32 %v510, %v518
    %521 = vrot.lane.b32.xlu0 %v291, 88
    %v522 = vpop.permute.xlu0 %521
    %523 = vrot.lane.b32.xlu0 %v294, 88
    %v524 = vpop.permute.xlu0 %523
    %v528 = vsel %vm358, %v519, 0
    %530 = vmatpush.msra.mxu0 0.0
    %531 = vmatpush.msra.mxu0 0.0
    %532 = vmatpush.msra.mxu0 0.0
    %533 = vmatpush.msra.mxu0 0.0
    %534 = vmatpush.msra.mxu0 0.0
    %535 = vmatpush.msra.mxu0 0.0
    %536 = vmatpush.msra.mxu0 0.0
    %537 = vmatpush.msra.mxu0 0.0
    %538 = vmatpush.msra.mxu0 0.0
    %539 = vmatpush.msra.mxu0 0.0
    %540 = vmatpush.msra.mxu0 0.0
    %541 = vmatpush.msra.mxu0 0.0
    %542 = vmatpush.msra.mxu0 0.0
    %543 = vmatpush.msra.mxu0 0.0
    %544 = vmatpush.msra.mxu0 %v524
    %545 = vmatpush.msra.mxu0 %v522
    %546 = vmatmul.f32.gmra.mxu0 %v528
    %v547 = vpop.f32.mrf.mxu0
    %v548 = vadd.f32 0.0, %v547
    %549 = vdwg.mxu0
    %550 = vrot.lane.b32.xlu0 %v297, 88
    %v551 = vpop.permute.xlu0 %550
    %552 = vrot.lane.b32.xlu0 %v300, 88
    %v553 = vpop.permute.xlu0 %552
    %v557 = vsel %vm358, %v520, 0
    %559 = vmatpush.msra.mxu0 0.0
    %560 = vmatpush.msra.mxu0 0.0
    %561 = vmatpush.msra.mxu0 0.0
    %562 = vmatpush.msra.mxu0 0.0
    %563 = vmatpush.msra.mxu0 0.0
    %564 = vmatpush.msra.mxu0 0.0
    %565 = vmatpush.msra.mxu0 0.0
    %566 = vmatpush.msra.mxu0 0.0
    %567 = vmatpush.msra.mxu0 0.0
    %568 = vmatpush.msra.mxu0 0.0
    %569 = vmatpush.msra.mxu0 0.0
    %570 = vmatpush.msra.mxu0 0.0
    %571 = vmatpush.msra.mxu0 0.0
    %572 = vmatpush.msra.mxu0 0.0
    %573 = vmatpush.msra.mxu0 %v553
    %574 = vmatpush.msra.mxu0 %v551
    %575 = vmatmul.f32.gmra.mxu0 %v557
    %v576 = vpop.f32.mrf.mxu0
    %v577 = vadd.f32 0.0, %v576
    %578 = vdwg.mxu0
    %579 = vrot.lane.b32.xlu0 %v255, 112
    %v580 = vpop.permute.xlu0 %579
    %581 = vrot.lane.b32.xlu0 %v291, 112
    %v582 = vpop.permute.xlu0 %581
    %583 = vrot.lane.b32.xlu0 %v294, 112
    %v584 = vpop.permute.xlu0 %583
    %v585 = vsel %vm302, %v580, 0
    %v587 = vsel %vm302, %v582, 0
    %v589 = vsel %vm302, %v584, 0
    %591 = vmatpush.xpose.msra.mxu0 0.0
    %592 = vmatpush.xpose.msra.mxu0 0.0
    %593 = vmatpush.xpose.msra.mxu0 0.0
    %594 = vmatpush.xpose.msra.mxu0 0.0
    %595 = vmatpush.xpose.msra.mxu0 0.0
    %596 = vmatpush.xpose.msra.mxu0 0.0
    %597 = vmatpush.xpose.msra.mxu0 0.0
    %598 = vmatpush.xpose.msra.mxu0 0.0
    %599 = vmatpush.xpose.msra.mxu0 0.0
    %600 = vmatpush.xpose.msra.mxu0 0.0
    %601 = vmatpush.xpose.msra.mxu0 0.0
    %602 = vmatpush.xpose.msra.mxu0 0.0
    %603 = vmatpush.xpose.msra.mxu0 0.0
    %604 = vmatpush.xpose.msra.mxu0 0.0
    %605 = vmatpush.xpose.msra.mxu0 %v589
    %606 = vmatpush.xpose.msra.mxu0 %v587
    %607 = vmatmul.f32.gmra.mxu0 %v585
    %v608 = vpop.f32.mrf.mxu0
    %v609 = vadd.f32 0.0, %v608
    %610 = vdwg.mxu0
    %611 = vrot.lane.b32.xlu0 %v297, 112
    %v612 = vpop.permute.xlu0 %611
    %613 = vrot.lane.b32.xlu0 %v300, 112
    %v614 = vpop.permute.xlu0 %613
    %v615 = vsel %vm302, %v612, 0
    %v617 = vsel %vm302, %v614, 0
    %619 = vmatpush.xpose.msra.mxu0 0.0
    %620 = vmatpush.xpose.msra.mxu0 0.0
    %621 = vmatpush.xpose.msra.mxu0 0.0
    %622 = vmatpush.xpose.msra.mxu0 0.0
    %623 = vmatpush.xpose.msra.mxu0 0.0
    %624 = vmatpush.xpose.msra.mxu0 0.0
    %625 = vmatpush.xpose.msra.mxu0 0.0
    %626 = vmatpush.xpose.msra.mxu0 0.0
    %627 = vmatpush.xpose.msra.mxu0 0.0
    %628 = vmatpush.xpose.msra.mxu0 0.0
    %629 = vmatpush.xpose.msra.mxu0 0.0
    %630 = vmatpush.xpose.msra.mxu0 0.0
    %631 = vmatpush.xpose.msra.mxu0 0.0
    %632 = vmatpush.xpose.msra.mxu0 0.0
    %633 = vmatpush.xpose.msra.mxu0 %v617
    %634 = vmatpush.xpose.msra.mxu0 %v615
    %635 = vmatmul.f32.gmra.mxu0 %v585
    %v636 = vpop.f32.mrf.mxu0
    %v637 = vadd.f32 0.0, %v636
    %638 = vdwg.mxu0
    %v639 = vsel %vm358, %v609, -inf
    %640 = vmax.xlane.f32.xlu0 %v639
    %v641 = vpop.xlane.xlu0 %640
    %v642 = vsel %vm358, %v637, -inf
    %643 = vmax.xlane.f32.xlu0 %v642
    %v644 = vpop.xlane.xlu0 %643
    %v645 = vsub.f32 %v609, %v641
    %v646 = vsub.f32 %v637, %v644
    %v647 = vmul.f32 %v645, 1.442695
    %v648 = vpow.pop %v647
    %v649 = vmul.f32 %v646, 1.442695
    %v650 = vpow.pop %v649
    %v651 = vsel %vm358, %v648, 0.0
    %652 = vadd.xlane.f32.xlu0 %v651
    %v653 = vpop.xlane.xlu0 %652
    %v654 = vsel %vm358, %v650, 0.0
    %655 = vadd.xlane.f32.xlu0 %v654
    %v656 = vpop.xlane.xlu0 %655
    %v657 = vrcp.pop %v653
    %v658 = vrcp.pop %v656
    %v659 = vmul.f32 %v648, %v657
    %v660 = vmul.f32 %v650, %v658
    %661 = vrot.lane.b32.xlu0 %v291, 80
    %v662 = vpop.permute.xlu0 %661
    %663 = vrot.lane.b32.xlu0 %v294, 80
    %v664 = vpop.permute.xlu0 %663
    %v668 = vsel %vm358, %v659, 0
    %670 = vmatpush.msra.mxu0 0.0
    %671 = vmatpush.msra.mxu0 0.0
    %672 = vmatpush.msra.mxu0 0.0
    %673 = vmatpush.msra.mxu0 0.0
    %674 = vmatpush.msra.mxu0 0.0
    %675 = vmatpush.msra.mxu0 0.0
    %676 = vmatpush.msra.mxu0 0.0
    %677 = vmatpush.msra.mxu0 0.0
    %678 = vmatpush.msra.mxu0 0.0
    %679 = vmatpush.msra.mxu0 0.0
    %680 = vmatpush.msra.mxu0 0.0
    %681 = vmatpush.msra.mxu0 0.0
    %682 = vmatpush.msra.mxu0 0.0
    %683 = vmatpush.msra.mxu0 0.0
    %684 = vmatpush.msra.mxu0 %v664
    %685 = vmatpush.msra.mxu0 %v662
    %686 = vmatmul.f32.gmra.mxu0 %v668
    %v687 = vpop.f32.mrf.mxu0
    %v688 = vadd.f32 0.0, %v687
    %689 = vdwg.mxu0
    %690 = vrot.lane.b32.xlu0 %v297, 80
    %v691 = vpop.permute.xlu0 %690
    %692 = vrot.lane.b32.xlu0 %v300, 80
    %v693 = vpop.permute.xlu0 %692
    %v697 = vsel %vm358, %v660, 0
    %699 = vmatpush.msra.mxu0 0.0
    %700 = vmatpush.msra.mxu0 0.0
    %701 = vmatpush.msra.mxu0 0.0
    %702 = vmatpush.msra.mxu0 0.0
    %703 = vmatpush.msra.mxu0 0.0
    %704 = vmatpush.msra.mxu0 0.0
    %705 = vmatpush.msra.mxu0 0.0
    %706 = vmatpush.msra.mxu0 0.0
    %707 = vmatpush.msra.mxu0 0.0
    %708 = vmatpush.msra.mxu0 0.0
    %709 = vmatpush.msra.mxu0 0.0
    %710 = vmatpush.msra.mxu0 0.0
    %711 = vmatpush.msra.mxu0 0.0
    %712 = vmatpush.msra.mxu0 0.0
    %713 = vmatpush.msra.mxu0 %v693
    %714 = vmatpush.msra.mxu0 %v691
    %715 = vmatmul.f32.gmra.mxu0 %v697
    %v716 = vpop.f32.mrf.mxu0
    %v717 = vadd.f32 0.0, %v716
    %718 = vdwg.mxu0
    %719 = vrot.lane.b32.xlu0 %v255, 104
    %v720 = vpop.permute.xlu0 %719
    %721 = vrot.lane.b32.xlu0 %v291, 104
    %v722 = vpop.permute.xlu0 %721
    %723 = vrot.lane.b32.xlu0 %v294, 104
    %v724 = vpop.permute.xlu0 %723
    %v725 = vsel %vm302, %v720, 0
    %v727 = vsel %vm302, %v722, 0
    %v729 = vsel %vm302, %v724, 0
    %731 = vmatpush.xpose.msra.mxu0 0.0
    %732 = vmatpush.xpose.msra.mxu0 0.0
    %733 = vmatpush.xpose.msra.mxu0 0.0
    %734 = vmatpush.xpose.msra.mxu0 0.0
    %735 = vmatpush.xpose.msra.mxu0 0.0
    %736 = vmatpush.xpose.msra.mxu0 0.0
    %737 = vmatpush.xpose.msra.mxu0 0.0
    %738 = vmatpush.xpose.msra.mxu0 0.0
    %739 = vmatpush.xpose.msra.mxu0 0.0
    %740 = vmatpush.xpose.msra.mxu0 0.0
    %741 = vmatpush.xpose.msra.mxu0 0.0
    %742 = vmatpush.xpose.msra.mxu0 0.0
    %743 = vmatpush.xpose.msra.mxu0 0.0
    %744 = vmatpush.xpose.msra.mxu0 0.0
    %745 = vmatpush.xpose.msra.mxu0 %v729
    %746 = vmatpush.xpose.msra.mxu0 %v727
    %747 = vmatmul.f32.gmra.mxu0 %v725
    %v748 = vpop.f32.mrf.mxu0
    %v749 = vadd.f32 0.0, %v748
    %750 = vdwg.mxu0
    %751 = vrot.lane.b32.xlu0 %v297, 104
    %v752 = vpop.permute.xlu0 %751
    %753 = vrot.lane.b32.xlu0 %v300, 104
    %v754 = vpop.permute.xlu0 %753
    %v755 = vsel %vm302, %v752, 0
    %v757 = vsel %vm302, %v754, 0
    %759 = vmatpush.xpose.msra.mxu0 0.0
    %760 = vmatpush.xpose.msra.mxu0 0.0
    %761 = vmatpush.xpose.msra.mxu0 0.0
    %762 = vmatpush.xpose.msra.mxu0 0.0
    %763 = vmatpush.xpose.msra.mxu0 0.0
    %764 = vmatpush.xpose.msra.mxu0 0.0
    %765 = vmatpush.xpose.msra.mxu0 0.0
    %766 = vmatpush.xpose.msra.mxu0 0.0
    %767 = vmatpush.xpose.msra.mxu0 0.0
    %768 = vmatpush.xpose.msra.mxu0 0.0
    %769 = vmatpush.xpose.msra.mxu0 0.0
    %770 = vmatpush.xpose.msra.mxu0 0.0
    %771 = vmatpush.xpose.msra.mxu0 0.0
    %772 = vmatpush.xpose.msra.mxu0 0.0
    %773 = vmatpush.xpose.msra.mxu0 %v757
    %774 = vmatpush.xpose.msra.mxu0 %v755
    %775 = vmatmul.f32.gmra.mxu0 %v725
    %v776 = vpop.f32.mrf.mxu0
    %v777 = vadd.f32 0.0, %v776
    %778 = vdwg.mxu0
    %v779 = vsel %vm358, %v749, -inf
    %780 = vmax.xlane.f32.xlu0 %v779
    %v781 = vpop.xlane.xlu0 %780
    %v782 = vsel %vm358, %v777, -inf
    %783 = vmax.xlane.f32.xlu0 %v782
    %v784 = vpop.xlane.xlu0 %783
    %v785 = vsub.f32 %v749, %v781
    %v786 = vsub.f32 %v777, %v784
    %v787 = vmul.f32 %v785, 1.442695
    %v788 = vpow.pop %v787
    %v789 = vmul.f32 %v786, 1.442695
    %v790 = vpow.pop %v789
    %v791 = vsel %vm358, %v788, 0.0
    %792 = vadd.xlane.f32.xlu0 %v791
    %v793 = vpop.xlane.xlu0 %792
    %v794 = vsel %vm358, %v790, 0.0
    %795 = vadd.xlane.f32.xlu0 %v794
    %v796 = vpop.xlane.xlu0 %795
    %v797 = vrcp.pop %v793
    %v798 = vrcp.pop %v796
    %v799 = vmul.f32 %v788, %v797
    %v800 = vmul.f32 %v790, %v798
    %801 = vrot.lane.b32.xlu0 %v291, 72
    %v802 = vpop.permute.xlu0 %801
    %803 = vrot.lane.b32.xlu0 %v294, 72
    %v804 = vpop.permute.xlu0 %803
    %v808 = vsel %vm358, %v799, 0
    %810 = vmatpush.msra.mxu0 0.0
    %811 = vmatpush.msra.mxu0 0.0
    %812 = vmatpush.msra.mxu0 0.0
    %813 = vmatpush.msra.mxu0 0.0
    %814 = vmatpush.msra.mxu0 0.0
    %815 = vmatpush.msra.mxu0 0.0
    %816 = vmatpush.msra.mxu0 0.0
    %817 = vmatpush.msra.mxu0 0.0
    %818 = vmatpush.msra.mxu0 0.0
    %819 = vmatpush.msra.mxu0 0.0
    %820 = vmatpush.msra.mxu0 0.0
    %821 = vmatpush.msra.mxu0 0.0
    %822 = vmatpush.msra.mxu0 0.0
    %823 = vmatpush.msra.mxu0 0.0
    %824 = vmatpush.msra.mxu0 %v804
    %825 = vmatpush.msra.mxu0 %v802
    %826 = vmatmul.f32.gmra.mxu0 %v808
    %v827 = vpop.f32.mrf.mxu0
    %v828 = vadd.f32 0.0, %v827
    %829 = vdwg.mxu0
    %830 = vrot.lane.b32.xlu0 %v297, 72
    %v831 = vpop.permute.xlu0 %830
    %832 = vrot.lane.b32.xlu0 %v300, 72
    %v833 = vpop.permute.xlu0 %832
    %v837 = vsel %vm358, %v800, 0
    %839 = vmatpush.msra.mxu0 0.0
    %840 = vmatpush.msra.mxu0 0.0
    %841 = vmatpush.msra.mxu0 0.0
    %842 = vmatpush.msra.mxu0 0.0
    %843 = vmatpush.msra.mxu0 0.0
    %844 = vmatpush.msra.mxu0 0.0
    %845 = vmatpush.msra.mxu0 0.0
    %846 = vmatpush.msra.mxu0 0.0
    %847 = vmatpush.msra.mxu0 0.0
    %848 = vmatpush.msra.mxu0 0.0
    %849 = vmatpush.msra.mxu0 0.0
    %850 = vmatpush.msra.mxu0 0.0
    %851 = vmatpush.msra.mxu0 0.0
    %852 = vmatpush.msra.mxu0 0.0
    %853 = vmatpush.msra.mxu0 %v833
    %854 = vmatpush.msra.mxu0 %v831
    %855 = vmatmul.f32.gmra.mxu0 %v837
    %v856 = vpop.f32.mrf.mxu0
    %v857 = vadd.f32 0.0, %v856
    %858 = vdwg.mxu0
    %861 = vrot.lane.b32.xlu0 %v548, 8
    %v862 = vpop.permute.xlu0 %861
    %863 = vrot.lane.b32.xlu0 %v577, 8
    %v864 = vpop.permute.xlu0 %863
    %869 = vrot.lane.b32.xlu0 %v688, 16
    %v870 = vpop.permute.xlu0 %869
    %871 = vrot.lane.b32.xlu0 %v717, 16
    %v872 = vpop.permute.xlu0 %871
    %877 = vrot.lane.b32.xlu0 %v828, 24
    %v878 = vpop.permute.xlu0 %877
    %879 = vrot.lane.b32.xlu0 %v857, 24
    %v880 = vpop.permute.xlu0 %879
    %v883 = vsel %vm302, %v408, %v862
    %v884 = vsel %vm302, %v437, %v864
    %v885 = vsel %vm358, %v883, %v870
    %v886 = vsel %vm358, %v884, %v872
    %vm887 = vcmask 195584
    %v888 = vsel %vm887, %v885, %v878
    %v889 = vsel %vm887, %v886, %v880
    %v890 = vperm.slane %v231, 1
    %v892 = vsel %vm233, %v888, 0
    %v895 = vsel %vm233, %v889, 0
    %897 = vmatpush.msra.mxu0 0.0
    %898 = vmatpush.msra.mxu0 0.0
    %899 = vmatpush.msra.mxu0 0.0
    %900 = vmatpush.msra.mxu0 0.0
    %901 = vmatpush.msra.mxu0 0.0
    %902 = vmatpush.msra.mxu0 0.0
    %903 = vmatpush.msra.mxu0 0.0
    %904 = vmatpush.msra.mxu0 0.0
    %905 = vmatpush.msra.mxu0 0.0
    %906 = vmatpush.msra.mxu0 0.0
    %907 = vmatpush.msra.mxu0 0.0
    %908 = vmatpush.msra.mxu0 0.0
    %909 = vmatpush.msra.mxu0 %v218
    %910 = vmatpush.msra.mxu0 %v217
    %911 = vmatpush.msra.mxu0 %v216
    %912 = vmatpush.msra.mxu0 %v215
    %913 = vmatmul.f32.gmra.mxu0 %v892
    %v914 = vpop.f32.mrf.mxu0
    %v915 = vadd.f32 %v890, %v914
    %916 = vmatmul.f32.gmra.mxu0 %v895
    %v917 = vpop.f32.mrf.mxu0
    %v918 = vadd.f32 %v890, %v917
    %919 = vdwg.mxu0
    %v920 = vadd.f32 %v205, %v915
    %v921 = vadd.f32 %v205, %v918
    %v922 = vsel %vm233, %v920, 0.0
    %923 = vadd.xlane.f32.xlu0 %v922
    %v924 = vpop.xlane.xlu0 %923
    %v925 = vsel %vm233, %v921, 0.0
    %926 = vadd.xlane.f32.xlu0 %v925
    %v927 = vpop.xlane.xlu0 %926
    %v928 = vrcp.pop 32.0
    %v929 = vmul.f32 32.0, %v928
    %v930 = vsub.f32 1.0, %v929
    %v931 = vmul.f32 %v928, %v930
    %v932 = vadd.f32 %v928, %v931
    %vm933 = vweird.f32 %v928
    %v934 = vsel %vm933, %v928, %v932
    %v935 = vmul.f32 %v924, %v934
    %v936 = vmul.f32 %v927, %v934
    %v937 = vsub.f32 %v920, %v935
    %v938 = vsub.f32 %v921, %v936
    %v939 = vmul.f32 %v937, %v937
    %v940 = vmul.f32 %v938, %v938
    %v941 = vsel %vm233, %v939, 0.0
    %942 = vadd.xlane.f32.xlu0 %v941
    %v943 = vpop.xlane.xlu0 %942
    %v944 = vsel %vm233, %v940, 0.0
    %945 = vadd.xlane.f32.xlu0 %v944
    %v946 = vpop.xlane.xlu0 %945
    %v947 = vmul.f32 %v943, %v934
    %v948 = vmul.f32 %v946, %v934
    %v949 = vadd.f32 %v947, 1e-05
    %v950 = vadd.f32 %v948, 1e-05
    %v951 = vrsqrt.pop %v949
    %v952 = vmul.f32 %v951, %v949
    %v953 = vmul.f32 %v952, %v951
    %v954 = vmul.f32 0.5, %v953
    %v955 = vsub.f32 1.5, %v954
    %v956 = vmul.f32 %v951, %v955
    %vm957 = vweird.f32 %v949
    %vm958 = vweird.f32 %v951
    %vm959 = vmor %vm957, %vm958
    %v960 = vsel %vm959, %v951, %v956
    %v961 = vrsqrt.pop %v950
    %v962 = vmul.f32 %v961, %v950
    %v963 = vmul.f32 %v962, %v961
    %v964 = vmul.f32 0.5, %v963
    %v965 = vsub.f32 1.5, %v964
    %v966 = vmul.f32 %v961, %v965
    %vm967 = vweird.f32 %v950
    %vm968 = vweird.f32 %v961
    %vm969 = vmor %vm967, %vm968
    %v970 = vsel %vm969, %v961, %v966
    %v971 = vmul.f32 %v937, %v960
    %v972 = vmul.f32 %v938, %v970
    %v973 = vperm.slane %v231, 2
    %v974 = vmul.f32 %v971, %v973
    %v975 = vmul.f32 %v972, %v973
    %v976 = vperm.slane %v231, 3
    %v977 = vadd.f32 %v974, %v976
    %v978 = vadd.f32 %v975, %v976
    %v979 = vperm.slane %v231, 4
    %v981 = vsel %vm233, %v977, 0
    %v984 = vsel %vm233, %v978, 0
    %986 = vmatpush.msra.mxu0 0.0
    %987 = vmatpush.msra.mxu0 0.0
    %988 = vmatpush.msra.mxu0 0.0
    %989 = vmatpush.msra.mxu0 0.0
    %990 = vmatpush.msra.mxu0 0.0
    %991 = vmatpush.msra.mxu0 0.0
    %992 = vmatpush.msra.mxu0 0.0
    %993 = vmatpush.msra.mxu0 0.0
    %994 = vmatpush.msra.mxu0 0.0
    %995 = vmatpush.msra.mxu0 0.0
    %996 = vmatpush.msra.mxu0 0.0
    %997 = vmatpush.msra.mxu0 0.0
    %998 = vmatpush.msra.mxu0 %v222
    %999 = vmatpush.msra.mxu0 %v221
    %1000 = vmatpush.msra.mxu0 %v220
    %1001 = vmatpush.msra.mxu0 %v219
    %1002 = vmatmul.f32.gmra.mxu0 %v981
    %v1003 = vpop.f32.mrf.mxu0
    %v1004 = vadd.f32 %v979, %v1003
    %1005 = vmatmul.f32.gmra.mxu0 %v984
    %v1006 = vpop.f32.mrf.mxu0
    %v1007 = vadd.f32 %v979, %v1006
    %1008 = vdwg.mxu0
    %v1009 = vmul.f32 %v1004, 0.5
    %v1010 = vmul.f32 %v1007, 0.5
    %v1011 = vmul.f32 %v1004, 0.044715
    %v1012 = vmul.f32 %v1007, 0.044715
    %v1013 = vmul.f32 %v1011, %v1004
    %v1014 = vmul.f32 %v1012, %v1007
    %v1015 = vmul.f32 %v1013, %v1004
    %v1016 = vmul.f32 %v1014, %v1007
    %v1017 = vadd.f32 %v1004, %v1015
    %v1018 = vadd.f32 %v1007, %v1016
    %v1019 = vmul.f32 %v1017, 0.7978846
    %v1020 = vmul.f32 %v1018, 0.7978846
    %v1021 = vtanh.pop %v1019
    %v1022 = vtanh.pop %v1020
    %v1023 = vadd.f32 %v1021, 1.0
    %v1024 = vadd.f32 %v1022, 1.0
    %v1025 = vmul.f32 %v1009, %v1023
    %v1026 = vmul.f32 %v1010, %v1024
    %v1027 = vperm.slane %v231, 5
    %vm1028 = vcmask 523264
    %v1030 = vsel %vm1028, %v1025, 0
    %v1033 = vsel %vm1028, %v1026, 0
    %1035 = vmatpush.msra.mxu0 0.0
    %1036 = vmatpush.msra.mxu0 0.0
    %1037 = vmatpush.msra.mxu0 0.0
    %1038 = vmatpush.msra.mxu0 0.0
    %1039 = vmatpush.msra.mxu0 0.0
    %1040 = vmatpush.msra.mxu0 0.0
    %1041 = vmatpush.msra.mxu0 0.0
    %1042 = vmatpush.msra.mxu0 0.0
    %1043 = vmatpush.msra.mxu0 %v230
    %1044 = vmatpush.msra.mxu0 %v229
    %1045 = vmatpush.msra.mxu0 %v228
    %1046 = vmatpush.msra.mxu0 %v227
    %1047 = vmatpush.msra.mxu0 %v226
    %1048 = vmatpush.msra.mxu0 %v225
    %1049 = vmatpush.msra.mxu0 %v224
    %1050 = vmatpush.msra.mxu0 %v223
    %1051 = vmatmul.f32.gmra.mxu0 %v1030
    %v1052 = vpop.f32.mrf.mxu0
    %v1053 = vadd.f32 %v1027, %v1052
    %1054 = vmatmul.f32.gmra.mxu0 %v1033
    %v1055 = vpop.f32.mrf.mxu0
    %v1056 = vadd.f32 %v1027, %v1055
    %1057 = vdwg.mxu0
    %v1058 = vadd.f32 %v977, %v1053
    %v1059 = vadd.f32 %v978, %v1056
    %v1060 = vsel %vm233, %v1058, 0.0
    %1061 = vadd.xlane.f32.xlu0 %v1060
    %v1062 = vpop.xlane.xlu0 %1061
    %v1063 = vsel %vm233, %v1059, 0.0
    %1064 = vadd.xlane.f32.xlu0 %v1063
    %v1065 = vpop.xlane.xlu0 %1064
    %v1066 = vmul.f32 %v1062, %v934
    %v1067 = vmul.f32 %v1065, %v934
    %v1068 = vsub.f32 %v1058, %v1066
    %v1069 = vsub.f32 %v1059, %v1067
    %v1070 = vmul.f32 %v1068, %v1068
    %v1071 = vmul.f32 %v1069, %v1069
    %v1072 = vsel %vm233, %v1070, 0.0
    %1073 = vadd.xlane.f32.xlu0 %v1072
    %v1074 = vpop.xlane.xlu0 %1073
    %v1075 = vsel %vm233, %v1071, 0.0
    %1076 = vadd.xlane.f32.xlu0 %v1075
    %v1077 = vpop.xlane.xlu0 %1076
    %v1078 = vmul.f32 %v1074, %v934
    %v1079 = vmul.f32 %v1077, %v934
    %v1080 = vadd.f32 %v1078, 1e-05
    %v1081 = vadd.f32 %v1079, 1e-05
    %v1082 = vrsqrt.pop %v1080
    %v1083 = vmul.f32 %v1082, %v1080
    %v1084 = vmul.f32 %v1083, %v1082
    %v1085 = vmul.f32 0.5, %v1084
    %v1086 = vsub.f32 1.5, %v1085
    %v1087 = vmul.f32 %v1082, %v1086
    %vm1088 = vweird.f32 %v1080
    %vm1089 = vweird.f32 %v1082
    %vm1090 = vmor %vm1088, %vm1089
    %v1091 = vsel %vm1090, %v1082, %v1087
    %v1092 = vrsqrt.pop %v1081
    %v1093 = vmul.f32 %v1092, %v1081
    %v1094 = vmul.f32 %v1093, %v1092
    %v1095 = vmul.f32 0.5, %v1094
    %v1096 = vsub.f32 1.5, %v1095
    %v1097 = vmul.f32 %v1092, %v1096
    %vm1098 = vweird.f32 %v1081
    %vm1099 = vweird.f32 %v1092
    %vm1100 = vmor %vm1098, %vm1099
    %v1101 = vsel %vm1100, %v1092, %v1097
    %v1102 = vmul.f32 %v1068, %v1091
    %v1103 = vmul.f32 %v1069, %v1101
    %v1104 = vperm.slane %v231, 6
    %v1105 = vmul.f32 %v1102, %v1104
    %v1106 = vmul.f32 %v1103, %v1104
    %v1107 = vperm.slane %v231, 7
    %v1108 = vadd.f32 %v1105, %v1107
    %v1109 = vadd.f32 %v1106, %v1107
    %v1110 = vld [vmem:[%s9] sm:$0xff]
    %v1111 = vld [vmem:[%s9 + $0x8] sm:$0xff]
    %v1112 = vld [vmem:[%s9 + $0x10] sm:$0xff]
    %v1113 = vld [vmem:[%s9 + $0x18] sm:$0xff]
    %v1114 = vld [vmem:[%s10] sm:$0xff]
    %v1115 = vld [vmem:[%s10 + $0x8] sm:$0xff]
    %v1116 = vld [vmem:[%s10 + $0x10] sm:$0xff]
    %v1117 = vld [vmem:[%s10 + $0x18] sm:$0xff]
    %v1118 = vld [vmem:[#allocation8] sm:$0xff]
    %v1119 = vld [vmem:[#allocation8 + $0x8] sm:$0xff]
    %v1120 = vld [vmem:[#allocation8 + $0x10] sm:$0xff]
    %v1121 = vld [vmem:[#allocation8 + $0x18] sm:$0xff]
    %v1122 = vld [vmem:[%s12] sm:$0xff]
    %v1123 = vld [vmem:[%s12 + $0x8] sm:$0xff]
    %v1124 = vld [vmem:[%s12 + $0x10] sm:$0xff]
    %v1125 = vld [vmem:[%s12 + $0x18] sm:$0xff]
    %v1126 = vld [vmem:[%s12 + $0x20] sm:$0xff]
    %v1127 = vld [vmem:[%s12 + $0x28] sm:$0xff]
    %v1128 = vld [vmem:[%s12 + $0x30] sm:$0xff]
    %v1129 = vld [vmem:[%s12 + $0x38] sm:$0xff]
    %v1130 = vld [vmem:[#allocation10] sm:$0xff]
    loop: start=0, step=1, limit=2
    $region122: #{perceiver_io_forward.1} parent=1 // loop_pre_header
      _
    $region123: #{perceiver_io_forward.1} parent=1 // loop_header
      %s1132 = sphi 0, %s1136
      %p1133 = scmp.ge.s32.totalorder %s1132, 2
      %v1137 = vphi %v1108, %v1927
      %v1138 = vphi %v1109, %v1928
    $region124: #{perceiver_io_forward.1} parent=1 // loop_header_branch
      %1135 = sbr.rel (%p1133) target = $region128
    $region125: #{perceiver_io_forward.1} parent=1 // loop_body
      %v1139 = vperm.slane %v1130, 0
      %v1141 = vsel %vm233, %v1137, 0
      %v1144 = vsel %vm233, %v1138, 0
      %1146 = vmatpush.msra.mxu0 0.0
      %1147 = vmatpush.msra.mxu0 0.0
      %1148 = vmatpush.msra.mxu0 0.0
      %1149 = vmatpush.msra.mxu0 0.0
      %1150 = vmatpush.msra.mxu0 0.0
      %1151 = vmatpush.msra.mxu0 0.0
      %1152 = vmatpush.msra.mxu0 0.0
      %1153 = vmatpush.msra.mxu0 0.0
      %1154 = vmatpush.msra.mxu0 0.0
      %1155 = vmatpush.msra.mxu0 0.0
      %1156 = vmatpush.msra.mxu0 0.0
      %1157 = vmatpush.msra.mxu0 0.0
      %1158 = vmatpush.msra.mxu0 %v1113
      %1159 = vmatpush.msra.mxu0 %v1112
      %1160 = vmatpush.msra.mxu0 %v1111
      %1161 = vmatpush.msra.mxu0 %v1110
      %1162 = vmatmul.f32.gmra.mxu0 %v1141
      %v1163 = vpop.f32.mrf.mxu0
      %v1164 = vadd.f32 %v1139, %v1163
      %1165 = vmatmul.f32.gmra.mxu0 %v1144
      %v1166 = vpop.f32.mrf.mxu0
      %v1167 = vadd.f32 %v1139, %v1166
      %1168 = vdwg.mxu0
      %1170 = vrot.lane.b32.xlu0 %v1164, 96
      %v1171 = vpop.permute.xlu0 %1170
      %v1172 = vsel %vm302, %v1164, 0
      %v1174 = vsel %vm302, %v1171, 0
      %1176 = vmatpush.xpose.msra.mxu0 0.0
      %1177 = vmatpush.xpose.msra.mxu0 0.0
      %1178 = vmatpush.xpose.msra.mxu0 0.0
      %1179 = vmatpush.xpose.msra.mxu0 0.0
      %1180 = vmatpush.xpose.msra.mxu0 0.0
      %1181 = vmatpush.xpose.msra.mxu0 0.0
      %1182 = vmatpush.xpose.msra.mxu0 0.0
      %1183 = vmatpush.xpose.msra.mxu0 0.0
      %1184 = vmatpush.xpose.msra.mxu0 0.0
      %1185 = vmatpush.xpose.msra.mxu0 0.0
      %1186 = vmatpush.xpose.msra.mxu0 0.0
      %1187 = vmatpush.xpose.msra.mxu0 0.0
      %1188 = vmatpush.xpose.msra.mxu0 0.0
      %1189 = vmatpush.xpose.msra.mxu0 0.0
      %1190 = vmatpush.xpose.msra.mxu0 0.0
      %1191 = vmatpush.xpose.msra.mxu0 %v1174
      %1192 = vmatmul.f32.gmra.mxu0 %v1172
      %v1193 = vpop.f32.mrf.mxu0
      %v1194 = vadd.f32 0.0, %v1193
      %1195 = vdwg.mxu0
      %1197 = vrot.lane.b32.xlu0 %v1167, 96
      %v1198 = vpop.permute.xlu0 %1197
      %v1199 = vsel %vm302, %v1167, 0
      %v1201 = vsel %vm302, %v1198, 0
      %1203 = vmatpush.xpose.msra.mxu0 0.0
      %1204 = vmatpush.xpose.msra.mxu0 0.0
      %1205 = vmatpush.xpose.msra.mxu0 0.0
      %1206 = vmatpush.xpose.msra.mxu0 0.0
      %1207 = vmatpush.xpose.msra.mxu0 0.0
      %1208 = vmatpush.xpose.msra.mxu0 0.0
      %1209 = vmatpush.xpose.msra.mxu0 0.0
      %1210 = vmatpush.xpose.msra.mxu0 0.0
      %1211 = vmatpush.xpose.msra.mxu0 0.0
      %1212 = vmatpush.xpose.msra.mxu0 0.0
      %1213 = vmatpush.xpose.msra.mxu0 0.0
      %1214 = vmatpush.xpose.msra.mxu0 0.0
      %1215 = vmatpush.xpose.msra.mxu0 0.0
      %1216 = vmatpush.xpose.msra.mxu0 0.0
      %1217 = vmatpush.xpose.msra.mxu0 0.0
      %1218 = vmatpush.xpose.msra.mxu0 %v1201
      %1219 = vmatmul.f32.gmra.mxu0 %v1199
      %v1220 = vpop.f32.mrf.mxu0
      %v1221 = vadd.f32 0.0, %v1220
      %1222 = vdwg.mxu0
      %v1223 = vsel %vm302, %v1194, -inf
      %1224 = vmax.xlane.f32.xlu0 %v1223
      %v1225 = vpop.xlane.xlu0 %1224
      %v1226 = vsel %vm302, %v1221, -inf
      %1227 = vmax.xlane.f32.xlu0 %v1226
      %v1228 = vpop.xlane.xlu0 %1227
      %v1229 = vsub.f32 %v1194, %v1225
      %v1230 = vsub.f32 %v1221, %v1228
      %v1231 = vmul.f32 %v1229, 1.442695
      %v1232 = vpow.pop %v1231
      %v1233 = vmul.f32 %v1230, 1.442695
      %v1234 = vpow.pop %v1233
      %v1235 = vsel %vm302, %v1232, 0.0
      %1236 = vadd.xlane.f32.xlu0 %v1235
      %v1237 = vpop.xlane.xlu0 %1236
      %v1238 = vsel %vm302, %v1234, 0.0
      %1239 = vadd.xlane.f32.xlu0 %v1238
      %v1240 = vpop.xlane.xlu0 %1239
      %v1241 = vrcp.pop %v1237
      %v1242 = vrcp.pop %v1240
      %v1243 = vmul.f32 %v1232, %v1241
      %v1244 = vmul.f32 %v1234, %v1242
      %1245 = vrot.lane.b32.xlu0 %v1164, 64
      %v1246 = vpop.permute.xlu0 %1245
      %v1249 = vsel %vm302, %v1243, 0
      %1251 = vmatpush.msra.mxu0 0.0
      %1252 = vmatpush.msra.mxu0 0.0
      %1253 = vmatpush.msra.mxu0 0.0
      %1254 = vmatpush.msra.mxu0 0.0
      %1255 = vmatpush.msra.mxu0 0.0
      %1256 = vmatpush.msra.mxu0 0.0
      %1257 = vmatpush.msra.mxu0 0.0
      %1258 = vmatpush.msra.mxu0 0.0
      %1259 = vmatpush.msra.mxu0 0.0
      %1260 = vmatpush.msra.mxu0 0.0
      %1261 = vmatpush.msra.mxu0 0.0
      %1262 = vmatpush.msra.mxu0 0.0
      %1263 = vmatpush.msra.mxu0 0.0
      %1264 = vmatpush.msra.mxu0 0.0
      %1265 = vmatpush.msra.mxu0 0.0
      %1266 = vmatpush.msra.mxu0 %v1246
      %1267 = vmatmul.f32.gmra.mxu0 %v1249
      %v1268 = vpop.f32.mrf.mxu0
      %v1269 = vadd.f32 0.0, %v1268
      %1270 = vdwg.mxu0
      %1271 = vrot.lane.b32.xlu0 %v1167, 64
      %v1272 = vpop.permute.xlu0 %1271
      %v1275 = vsel %vm302, %v1244, 0
      %1277 = vmatpush.msra.mxu0 0.0
      %1278 = vmatpush.msra.mxu0 0.0
      %1279 = vmatpush.msra.mxu0 0.0
      %1280 = vmatpush.msra.mxu0 0.0
      %1281 = vmatpush.msra.mxu0 0.0
      %1282 = vmatpush.msra.mxu0 0.0
      %1283 = vmatpush.msra.mxu0 0.0
      %1284 = vmatpush.msra.mxu0 0.0
      %1285 = vmatpush.msra.mxu0 0.0
      %1286 = vmatpush.msra.mxu0 0.0
      %1287 = vmatpush.msra.mxu0 0.0
      %1288 = vmatpush.msra.mxu0 0.0
      %1289 = vmatpush.msra.mxu0 0.0
      %1290 = vmatpush.msra.mxu0 0.0
      %1291 = vmatpush.msra.mxu0 0.0
      %1292 = vmatpush.msra.mxu0 %v1272
      %1293 = vmatmul.f32.gmra.mxu0 %v1275
      %v1294 = vpop.f32.mrf.mxu0
      %v1295 = vadd.f32 0.0, %v1294
      %1296 = vdwg.mxu0
      %1297 = vrot.lane.b32.xlu0 %v1164, 120
      %v1298 = vpop.permute.xlu0 %1297
      %1299 = vrot.lane.b32.xlu0 %v1164, 88
      %v1300 = vpop.permute.xlu0 %1299
      %v1301 = vsel %vm302, %v1298, 0
      %v1303 = vsel %vm302, %v1300, 0
      %1305 = vmatpush.xpose.msra.mxu0 0.0
      %1306 = vmatpush.xpose.msra.mxu0 0.0
      %1307 = vmatpush.xpose.msra.mxu0 0.0
      %1308 = vmatpush.xpose.msra.mxu0 0.0
      %1309 = vmatpush.xpose.msra.mxu0 0.0
      %1310 = vmatpush.xpose.msra.mxu0 0.0
      %1311 = vmatpush.xpose.msra.mxu0 0.0
      %1312 = vmatpush.xpose.msra.mxu0 0.0
      %1313 = vmatpush.xpose.msra.mxu0 0.0
      %1314 = vmatpush.xpose.msra.mxu0 0.0
      %1315 = vmatpush.xpose.msra.mxu0 0.0
      %1316 = vmatpush.xpose.msra.mxu0 0.0
      %1317 = vmatpush.xpose.msra.mxu0 0.0
      %1318 = vmatpush.xpose.msra.mxu0 0.0
      %1319 = vmatpush.xpose.msra.mxu0 0.0
      %1320 = vmatpush.xpose.msra.mxu0 %v1303
      %1321 = vmatmul.f32.gmra.mxu0 %v1301
      %v1322 = vpop.f32.mrf.mxu0
      %v1323 = vadd.f32 0.0, %v1322
      %1324 = vdwg.mxu0
      %1325 = vrot.lane.b32.xlu0 %v1167, 120
      %v1326 = vpop.permute.xlu0 %1325
      %1327 = vrot.lane.b32.xlu0 %v1167, 88
      %v1328 = vpop.permute.xlu0 %1327
      %v1329 = vsel %vm302, %v1326, 0
      %v1331 = vsel %vm302, %v1328, 0
      %1333 = vmatpush.xpose.msra.mxu0 0.0
      %1334 = vmatpush.xpose.msra.mxu0 0.0
      %1335 = vmatpush.xpose.msra.mxu0 0.0
      %1336 = vmatpush.xpose.msra.mxu0 0.0
      %1337 = vmatpush.xpose.msra.mxu0 0.0
      %1338 = vmatpush.xpose.msra.mxu0 0.0
      %1339 = vmatpush.xpose.msra.mxu0 0.0
      %1340 = vmatpush.xpose.msra.mxu0 0.0
      %1341 = vmatpush.xpose.msra.mxu0 0.0
      %1342 = vmatpush.xpose.msra.mxu0 0.0
      %1343 = vmatpush.xpose.msra.mxu0 0.0
      %1344 = vmatpush.xpose.msra.mxu0 0.0
      %1345 = vmatpush.xpose.msra.mxu0 0.0
      %1346 = vmatpush.xpose.msra.mxu0 0.0
      %1347 = vmatpush.xpose.msra.mxu0 0.0
      %1348 = vmatpush.xpose.msra.mxu0 %v1331
      %1349 = vmatmul.f32.gmra.mxu0 %v1329
      %v1350 = vpop.f32.mrf.mxu0
      %v1351 = vadd.f32 0.0, %v1350
      %1352 = vdwg.mxu0
      %v1353 = vsel %vm302, %v1323, -inf
      %1354 = vmax.xlane.f32.xlu0 %v1353
      %v1355 = vpop.xlane.xlu0 %1354
      %v1356 = vsel %vm302, %v1351, -inf
      %1357 = vmax.xlane.f32.xlu0 %v1356
      %v1358 = vpop.xlane.xlu0 %1357
      %v1359 = vsub.f32 %v1323, %v1355
      %v1360 = vsub.f32 %v1351, %v1358
      %v1361 = vmul.f32 %v1359, 1.442695
      %v1362 = vpow.pop %v1361
      %v1363 = vmul.f32 %v1360, 1.442695
      %v1364 = vpow.pop %v1363
      %v1365 = vsel %vm302, %v1362, 0.0
      %1366 = vadd.xlane.f32.xlu0 %v1365
      %v1367 = vpop.xlane.xlu0 %1366
      %v1368 = vsel %vm302, %v1364, 0.0
      %1369 = vadd.xlane.f32.xlu0 %v1368
      %v1370 = vpop.xlane.xlu0 %1369
      %v1371 = vrcp.pop %v1367
      %v1372 = vrcp.pop %v1370
      %v1373 = vmul.f32 %v1362, %v1371
      %v1374 = vmul.f32 %v1364, %v1372
      %1375 = vrot.lane.b32.xlu0 %v1164, 56
      %v1376 = vpop.permute.xlu0 %1375
      %v1379 = vsel %vm302, %v1373, 0
      %1381 = vmatpush.msra.mxu0 0.0
      %1382 = vmatpush.msra.mxu0 0.0
      %1383 = vmatpush.msra.mxu0 0.0
      %1384 = vmatpush.msra.mxu0 0.0
      %1385 = vmatpush.msra.mxu0 0.0
      %1386 = vmatpush.msra.mxu0 0.0
      %1387 = vmatpush.msra.mxu0 0.0
      %1388 = vmatpush.msra.mxu0 0.0
      %1389 = vmatpush.msra.mxu0 0.0
      %1390 = vmatpush.msra.mxu0 0.0
      %1391 = vmatpush.msra.mxu0 0.0
      %1392 = vmatpush.msra.mxu0 0.0
      %1393 = vmatpush.msra.mxu0 0.0
      %1394 = vmatpush.msra.mxu0 0.0
      %1395 = vmatpush.msra.mxu0 0.0
      %1396 = vmatpush.msra.mxu0 %v1376
      %1397 = vmatmul.f32.gmra.mxu0 %v1379
      %v1398 = vpop.f32.mrf.mxu0
      %v1399 = vadd.f32 0.0, %v1398
      %1400 = vdwg.mxu0
      %1401 = vrot.lane.b32.xlu0 %v1167, 56
      %v1402 = vpop.permute.xlu0 %1401
      %v1405 = vsel %vm302, %v1374, 0
      %1407 = vmatpush.msra.mxu0 0.0
      %1408 = vmatpush.msra.mxu0 0.0
      %1409 = vmatpush.msra.mxu0 0.0
      %1410 = vmatpush.msra.mxu0 0.0
      %1411 = vmatpush.msra.mxu0 0.0
      %1412 = vmatpush.msra.mxu0 0.0
      %1413 = vmatpush.msra.mxu0 0.0
      %1414 = vmatpush.msra.mxu0 0.0
      %1415 = vmatpush.msra.mxu0 0.0
      %1416 = vmatpush.msra.mxu0 0.0
      %1417 = vmatpush.msra.mxu0 0.0
      %1418 = vmatpush.msra.mxu0 0.0
      %1419 = vmatpush.msra.mxu0 0.0
      %1420 = vmatpush.msra.mxu0 0.0
      %1421 = vmatpush.msra.mxu0 0.0
      %1422 = vmatpush.msra.mxu0 %v1402
      %1423 = vmatmul.f32.gmra.mxu0 %v1405
      %v1424 = vpop.f32.mrf.mxu0
      %v1425 = vadd.f32 0.0, %v1424
      %1426 = vdwg.mxu0
      %1427 = vrot.lane.b32.xlu0 %v1164, 112
      %v1428 = vpop.permute.xlu0 %1427
      %1429 = vrot.lane.b32.xlu0 %v1164, 80
      %v1430 = vpop.permute.xlu0 %1429
      %v1431 = vsel %vm302, %v1428, 0
      %v1433 = vsel %vm302, %v1430, 0
      %1435 = vmatpush.xpose.msra.mxu0 0.0
      %1436 = vmatpush.xpose.msra.mxu0 0.0
      %1437 = vmatpush.xpose.msra.mxu0 0.0
      %1438 = vmatpush.xpose.msra.mxu0 0.0
      %1439 = vmatpush.xpose.msra.mxu0 0.0
      %1440 = vmatpush.xpose.msra.mxu0 0.0
      %1441 = vmatpush.xpose.msra.mxu0 0.0
      %1442 = vmatpush.xpose.msra.mxu0 0.0
      %1443 = vmatpush.xpose.msra.mxu0 0.0
      %1444 = vmatpush.xpose.msra.mxu0 0.0
      %1445 = vmatpush.xpose.msra.mxu0 0.0
      %1446 = vmatpush.xpose.msra.mxu0 0.0
      %1447 = vmatpush.xpose.msra.mxu0 0.0
      %1448 = vmatpush.xpose.msra.mxu0 0.0
      %1449 = vmatpush.xpose.msra.mxu0 0.0
      %1450 = vmatpush.xpose.msra.mxu0 %v1433
      %1451 = vmatmul.f32.gmra.mxu0 %v1431
      %v1452 = vpop.f32.mrf.mxu0
      %v1453 = vadd.f32 0.0, %v1452
      %1454 = vdwg.mxu0
      %1455 = vrot.lane.b32.xlu0 %v1167, 112
      %v1456 = vpop.permute.xlu0 %1455
      %1457 = vrot.lane.b32.xlu0 %v1167, 80
      %v1458 = vpop.permute.xlu0 %1457
      %v1459 = vsel %vm302, %v1456, 0
      %v1461 = vsel %vm302, %v1458, 0
      %1463 = vmatpush.xpose.msra.mxu0 0.0
      %1464 = vmatpush.xpose.msra.mxu0 0.0
      %1465 = vmatpush.xpose.msra.mxu0 0.0
      %1466 = vmatpush.xpose.msra.mxu0 0.0
      %1467 = vmatpush.xpose.msra.mxu0 0.0
      %1468 = vmatpush.xpose.msra.mxu0 0.0
      %1469 = vmatpush.xpose.msra.mxu0 0.0
      %1470 = vmatpush.xpose.msra.mxu0 0.0
      %1471 = vmatpush.xpose.msra.mxu0 0.0
      %1472 = vmatpush.xpose.msra.mxu0 0.0
      %1473 = vmatpush.xpose.msra.mxu0 0.0
      %1474 = vmatpush.xpose.msra.mxu0 0.0
      %1475 = vmatpush.xpose.msra.mxu0 0.0
      %1476 = vmatpush.xpose.msra.mxu0 0.0
      %1477 = vmatpush.xpose.msra.mxu0 0.0
      %1478 = vmatpush.xpose.msra.mxu0 %v1461
      %1479 = vmatmul.f32.gmra.mxu0 %v1459
      %v1480 = vpop.f32.mrf.mxu0
      %v1481 = vadd.f32 0.0, %v1480
      %1482 = vdwg.mxu0
      %v1483 = vsel %vm302, %v1453, -inf
      %1484 = vmax.xlane.f32.xlu0 %v1483
      %v1485 = vpop.xlane.xlu0 %1484
      %v1486 = vsel %vm302, %v1481, -inf
      %1487 = vmax.xlane.f32.xlu0 %v1486
      %v1488 = vpop.xlane.xlu0 %1487
      %v1489 = vsub.f32 %v1453, %v1485
      %v1490 = vsub.f32 %v1481, %v1488
      %v1491 = vmul.f32 %v1489, 1.442695
      %v1492 = vpow.pop %v1491
      %v1493 = vmul.f32 %v1490, 1.442695
      %v1494 = vpow.pop %v1493
      %v1495 = vsel %vm302, %v1492, 0.0
      %1496 = vadd.xlane.f32.xlu0 %v1495
      %v1497 = vpop.xlane.xlu0 %1496
      %v1498 = vsel %vm302, %v1494, 0.0
      %1499 = vadd.xlane.f32.xlu0 %v1498
      %v1500 = vpop.xlane.xlu0 %1499
      %v1501 = vrcp.pop %v1497
      %v1502 = vrcp.pop %v1500
      %v1503 = vmul.f32 %v1492, %v1501
      %v1504 = vmul.f32 %v1494, %v1502
      %1505 = vrot.lane.b32.xlu0 %v1164, 48
      %v1506 = vpop.permute.xlu0 %1505
      %v1509 = vsel %vm302, %v1503, 0
      %1511 = vmatpush.msra.mxu0 0.0
      %1512 = vmatpush.msra.mxu0 0.0
      %1513 = vmatpush.msra.mxu0 0.0
      %1514 = vmatpush.msra.mxu0 0.0
      %1515 = vmatpush.msra.mxu0 0.0
      %1516 = vmatpush.msra.mxu0 0.0
      %1517 = vmatpush.msra.mxu0 0.0
      %1518 = vmatpush.msra.mxu0 0.0
      %1519 = vmatpush.msra.mxu0 0.0
      %1520 = vmatpush.msra.mxu0 0.0
      %1521 = vmatpush.msra.mxu0 0.0
      %1522 = vmatpush.msra.mxu0 0.0
      %1523 = vmatpush.msra.mxu0 0.0
      %1524 = vmatpush.msra.mxu0 0.0
      %1525 = vmatpush.msra.mxu0 0.0
      %1526 = vmatpush.msra.mxu0 %v1506
      %1527 = vmatmul.f32.gmra.mxu0 %v1509
      %v1528 = vpop.f32.mrf.mxu0
      %v1529 = vadd.f32 0.0, %v1528
      %1530 = vdwg.mxu0
      %1531 = vrot.lane.b32.xlu0 %v1167, 48
      %v1532 = vpop.permute.xlu0 %1531
      %v1535 = vsel %vm302, %v1504, 0
      %1537 = vmatpush.msra.mxu0 0.0
      %1538 = vmatpush.msra.mxu0 0.0
      %1539 = vmatpush.msra.mxu0 0.0
      %1540 = vmatpush.msra.mxu0 0.0
      %1541 = vmatpush.msra.mxu0 0.0
      %1542 = vmatpush.msra.mxu0 0.0
      %1543 = vmatpush.msra.mxu0 0.0
      %1544 = vmatpush.msra.mxu0 0.0
      %1545 = vmatpush.msra.mxu0 0.0
      %1546 = vmatpush.msra.mxu0 0.0
      %1547 = vmatpush.msra.mxu0 0.0
      %1548 = vmatpush.msra.mxu0 0.0
      %1549 = vmatpush.msra.mxu0 0.0
      %1550 = vmatpush.msra.mxu0 0.0
      %1551 = vmatpush.msra.mxu0 0.0
      %1552 = vmatpush.msra.mxu0 %v1532
      %1553 = vmatmul.f32.gmra.mxu0 %v1535
      %v1554 = vpop.f32.mrf.mxu0
      %v1555 = vadd.f32 0.0, %v1554
      %1556 = vdwg.mxu0
      %1557 = vrot.lane.b32.xlu0 %v1164, 104
      %v1558 = vpop.permute.xlu0 %1557
      %1559 = vrot.lane.b32.xlu0 %v1164, 72
      %v1560 = vpop.permute.xlu0 %1559
      %v1561 = vsel %vm302, %v1558, 0
      %v1563 = vsel %vm302, %v1560, 0
      %1565 = vmatpush.xpose.msra.mxu0 0.0
      %1566 = vmatpush.xpose.msra.mxu0 0.0
      %1567 = vmatpush.xpose.msra.mxu0 0.0
      %1568 = vmatpush.xpose.msra.mxu0 0.0
      %1569 = vmatpush.xpose.msra.mxu0 0.0
      %1570 = vmatpush.xpose.msra.mxu0 0.0
      %1571 = vmatpush.xpose.msra.mxu0 0.0
      %1572 = vmatpush.xpose.msra.mxu0 0.0
      %1573 = vmatpush.xpose.msra.mxu0 0.0
      %1574 = vmatpush.xpose.msra.mxu0 0.0
      %1575 = vmatpush.xpose.msra.mxu0 0.0
      %1576 = vmatpush.xpose.msra.mxu0 0.0
      %1577 = vmatpush.xpose.msra.mxu0 0.0
      %1578 = vmatpush.xpose.msra.mxu0 0.0
      %1579 = vmatpush.xpose.msra.mxu0 0.0
      %1580 = vmatpush.xpose.msra.mxu0 %v1563
      %1581 = vmatmul.f32.gmra.mxu0 %v1561
      %v1582 = vpop.f32.mrf.mxu0
      %v1583 = vadd.f32 0.0, %v1582
      %1584 = vdwg.mxu0
      %1585 = vrot.lane.b32.xlu0 %v1167, 104
      %v1586 = vpop.permute.xlu0 %1585
      %1587 = vrot.lane.b32.xlu0 %v1167, 72
      %v1588 = vpop.permute.xlu0 %1587
      %v1589 = vsel %vm302, %v1586, 0
      %v1591 = vsel %vm302, %v1588, 0
      %1593 = vmatpush.xpose.msra.mxu0 0.0
      %1594 = vmatpush.xpose.msra.mxu0 0.0
      %1595 = vmatpush.xpose.msra.mxu0 0.0
      %1596 = vmatpush.xpose.msra.mxu0 0.0
      %1597 = vmatpush.xpose.msra.mxu0 0.0
      %1598 = vmatpush.xpose.msra.mxu0 0.0
      %1599 = vmatpush.xpose.msra.mxu0 0.0
      %1600 = vmatpush.xpose.msra.mxu0 0.0
      %1601 = vmatpush.xpose.msra.mxu0 0.0
      %1602 = vmatpush.xpose.msra.mxu0 0.0
      %1603 = vmatpush.xpose.msra.mxu0 0.0
      %1604 = vmatpush.xpose.msra.mxu0 0.0
      %1605 = vmatpush.xpose.msra.mxu0 0.0
      %1606 = vmatpush.xpose.msra.mxu0 0.0
      %1607 = vmatpush.xpose.msra.mxu0 0.0
      %1608 = vmatpush.xpose.msra.mxu0 %v1591
      %1609 = vmatmul.f32.gmra.mxu0 %v1589
      %v1610 = vpop.f32.mrf.mxu0
      %v1611 = vadd.f32 0.0, %v1610
      %1612 = vdwg.mxu0
      %v1613 = vsel %vm302, %v1583, -inf
      %1614 = vmax.xlane.f32.xlu0 %v1613
      %v1615 = vpop.xlane.xlu0 %1614
      %v1616 = vsel %vm302, %v1611, -inf
      %1617 = vmax.xlane.f32.xlu0 %v1616
      %v1618 = vpop.xlane.xlu0 %1617
      %v1619 = vsub.f32 %v1583, %v1615
      %v1620 = vsub.f32 %v1611, %v1618
      %v1621 = vmul.f32 %v1619, 1.442695
      %v1622 = vpow.pop %v1621
      %v1623 = vmul.f32 %v1620, 1.442695
      %v1624 = vpow.pop %v1623
      %v1625 = vsel %vm302, %v1622, 0.0
      %1626 = vadd.xlane.f32.xlu0 %v1625
      %v1627 = vpop.xlane.xlu0 %1626
      %v1628 = vsel %vm302, %v1624, 0.0
      %1629 = vadd.xlane.f32.xlu0 %v1628
      %v1630 = vpop.xlane.xlu0 %1629
      %v1631 = vrcp.pop %v1627
      %v1632 = vrcp.pop %v1630
      %v1633 = vmul.f32 %v1622, %v1631
      %v1634 = vmul.f32 %v1624, %v1632
      %1635 = vrot.lane.b32.xlu0 %v1164, 40
      %v1636 = vpop.permute.xlu0 %1635
      %v1639 = vsel %vm302, %v1633, 0
      %1641 = vmatpush.msra.mxu0 0.0
      %1642 = vmatpush.msra.mxu0 0.0
      %1643 = vmatpush.msra.mxu0 0.0
      %1644 = vmatpush.msra.mxu0 0.0
      %1645 = vmatpush.msra.mxu0 0.0
      %1646 = vmatpush.msra.mxu0 0.0
      %1647 = vmatpush.msra.mxu0 0.0
      %1648 = vmatpush.msra.mxu0 0.0
      %1649 = vmatpush.msra.mxu0 0.0
      %1650 = vmatpush.msra.mxu0 0.0
      %1651 = vmatpush.msra.mxu0 0.0
      %1652 = vmatpush.msra.mxu0 0.0
      %1653 = vmatpush.msra.mxu0 0.0
      %1654 = vmatpush.msra.mxu0 0.0
      %1655 = vmatpush.msra.mxu0 0.0
      %1656 = vmatpush.msra.mxu0 %v1636
      %1657 = vmatmul.f32.gmra.mxu0 %v1639
      %v1658 = vpop.f32.mrf.mxu0
      %v1659 = vadd.f32 0.0, %v1658
      %1660 = vdwg.mxu0
      %1661 = vrot.lane.b32.xlu0 %v1167, 40
      %v1662 = vpop.permute.xlu0 %1661
      %v1665 = vsel %vm302, %v1634, 0
      %1667 = vmatpush.msra.mxu0 0.0
      %1668 = vmatpush.msra.mxu0 0.0
      %1669 = vmatpush.msra.mxu0 0.0
      %1670 = vmatpush.msra.mxu0 0.0
      %1671 = vmatpush.msra.mxu0 0.0
      %1672 = vmatpush.msra.mxu0 0.0
      %1673 = vmatpush.msra.mxu0 0.0
      %1674 = vmatpush.msra.mxu0 0.0
      %1675 = vmatpush.msra.mxu0 0.0
      %1676 = vmatpush.msra.mxu0 0.0
      %1677 = vmatpush.msra.mxu0 0.0
      %1678 = vmatpush.msra.mxu0 0.0
      %1679 = vmatpush.msra.mxu0 0.0
      %1680 = vmatpush.msra.mxu0 0.0
      %1681 = vmatpush.msra.mxu0 0.0
      %1682 = vmatpush.msra.mxu0 %v1662
      %1683 = vmatmul.f32.gmra.mxu0 %v1665
      %v1684 = vpop.f32.mrf.mxu0
      %v1685 = vadd.f32 0.0, %v1684
      %1686 = vdwg.mxu0
      %1689 = vrot.lane.b32.xlu0 %v1399, 8
      %v1690 = vpop.permute.xlu0 %1689
      %1691 = vrot.lane.b32.xlu0 %v1425, 8
      %v1692 = vpop.permute.xlu0 %1691
      %1697 = vrot.lane.b32.xlu0 %v1529, 16
      %v1698 = vpop.permute.xlu0 %1697
      %1699 = vrot.lane.b32.xlu0 %v1555, 16
      %v1700 = vpop.permute.xlu0 %1699
      %1705 = vrot.lane.b32.xlu0 %v1659, 24
      %v1706 = vpop.permute.xlu0 %1705
      %1707 = vrot.lane.b32.xlu0 %v1685, 24
      %v1708 = vpop.permute.xlu0 %1707
      %v1711 = vsel %vm302, %v1269, %v1690
      %v1712 = vsel %vm302, %v1295, %v1692
      %v1713 = vsel %vm358, %v1711, %v1698
      %v1714 = vsel %vm358, %v1712, %v1700
      %v1715 = vsel %vm887, %v1713, %v1706
      %v1716 = vsel %vm887, %v1714, %v1708
      %v1717 = vperm.slane %v1130, 1
      %v1719 = vsel %vm233, %v1715, 0
      %v1722 = vsel %vm233, %v1716, 0
      %1724 = vmatpush.msra.mxu0 0.0
      %1725 = vmatpush.msra.mxu0 0.0
      %1726 = vmatpush.msra.mxu0 0.0
      %1727 = vmatpush.msra.mxu0 0.0
      %1728 = vmatpush.msra.mxu0 0.0
      %1729 = vmatpush.msra.mxu0 0.0
      %1730 = vmatpush.msra.mxu0 0.0
      %1731 = vmatpush.msra.mxu0 0.0
      %1732 = vmatpush.msra.mxu0 0.0
      %1733 = vmatpush.msra.mxu0 0.0
      %1734 = vmatpush.msra.mxu0 0.0
      %1735 = vmatpush.msra.mxu0 0.0
      %1736 = vmatpush.msra.mxu0 %v1117
      %1737 = vmatpush.msra.mxu0 %v1116
      %1738 = vmatpush.msra.mxu0 %v1115
      %1739 = vmatpush.msra.mxu0 %v1114
      %1740 = vmatmul.f32.gmra.mxu0 %v1719
      %v1741 = vpop.f32.mrf.mxu0
      %v1742 = vadd.f32 %v1717, %v1741
      %1743 = vmatmul.f32.gmra.mxu0 %v1722
      %v1744 = vpop.f32.mrf.mxu0
      %v1745 = vadd.f32 %v1717, %v1744
      %1746 = vdwg.mxu0
      %v1747 = vadd.f32 %v1137, %v1742
      %v1748 = vadd.f32 %v1138, %v1745
      %v1749 = vsel %vm233, %v1747, 0.0
      %1750 = vadd.xlane.f32.xlu0 %v1749
      %v1751 = vpop.xlane.xlu0 %1750
      %v1752 = vsel %vm233, %v1748, 0.0
      %1753 = vadd.xlane.f32.xlu0 %v1752
      %v1754 = vpop.xlane.xlu0 %1753
      %v1755 = vmul.f32 %v1751, %v934
      %v1756 = vmul.f32 %v1754, %v934
      %v1757 = vsub.f32 %v1747, %v1755
      %v1758 = vsub.f32 %v1748, %v1756
      %v1759 = vmul.f32 %v1757, %v1757
      %v1760 = vmul.f32 %v1758, %v1758
      %v1761 = vsel %vm233, %v1759, 0.0
      %1762 = vadd.xlane.f32.xlu0 %v1761
      %v1763 = vpop.xlane.xlu0 %1762
      %v1764 = vsel %vm233, %v1760, 0.0
      %1765 = vadd.xlane.f32.xlu0 %v1764
      %v1766 = vpop.xlane.xlu0 %1765
      %v1767 = vmul.f32 %v1763, %v934
      %v1768 = vmul.f32 %v1766, %v934
      %v1769 = vadd.f32 %v1767, 1e-05
      %v1770 = vadd.f32 %v1768, 1e-05
      %v1771 = vrsqrt.pop %v1769
      %v1772 = vmul.f32 %v1771, %v1769
      %v1773 = vmul.f32 %v1772, %v1771
      %v1774 = vmul.f32 0.5, %v1773
      %v1775 = vsub.f32 1.5, %v1774
      %v1776 = vmul.f32 %v1771, %v1775
      %vm1777 = vweird.f32 %v1769
      %vm1778 = vweird.f32 %v1771
      %vm1779 = vmor %vm1777, %vm1778
      %v1780 = vsel %vm1779, %v1771, %v1776
      %v1781 = vrsqrt.pop %v1770
      %v1782 = vmul.f32 %v1781, %v1770
      %v1783 = vmul.f32 %v1782, %v1781
      %v1784 = vmul.f32 0.5, %v1783
      %v1785 = vsub.f32 1.5, %v1784
      %v1786 = vmul.f32 %v1781, %v1785
      %vm1787 = vweird.f32 %v1770
      %vm1788 = vweird.f32 %v1781
      %vm1789 = vmor %vm1787, %vm1788
      %v1790 = vsel %vm1789, %v1781, %v1786
      %v1791 = vmul.f32 %v1757, %v1780
      %v1792 = vmul.f32 %v1758, %v1790
      %v1793 = vperm.slane %v1130, 2
      %v1794 = vmul.f32 %v1791, %v1793
      %v1795 = vmul.f32 %v1792, %v1793
      %v1796 = vperm.slane %v1130, 3
      %v1797 = vadd.f32 %v1794, %v1796
      %v1798 = vadd.f32 %v1795, %v1796
      %v1799 = vperm.slane %v1130, 4
      %v1801 = vsel %vm233, %v1797, 0
      %v1804 = vsel %vm233, %v1798, 0
      %1806 = vmatpush.msra.mxu0 0.0
      %1807 = vmatpush.msra.mxu0 0.0
      %1808 = vmatpush.msra.mxu0 0.0
      %1809 = vmatpush.msra.mxu0 0.0
      %1810 = vmatpush.msra.mxu0 0.0
      %1811 = vmatpush.msra.mxu0 0.0
      %1812 = vmatpush.msra.mxu0 0.0
      %1813 = vmatpush.msra.mxu0 0.0
      %1814 = vmatpush.msra.mxu0 0.0
      %1815 = vmatpush.msra.mxu0 0.0
      %1816 = vmatpush.msra.mxu0 0.0
      %1817 = vmatpush.msra.mxu0 0.0
      %1818 = vmatpush.msra.mxu0 %v1121
      %1819 = vmatpush.msra.mxu0 %v1120
      %1820 = vmatpush.msra.mxu0 %v1119
      %1821 = vmatpush.msra.mxu0 %v1118
      %1822 = vmatmul.f32.gmra.mxu0 %v1801
      %v1823 = vpop.f32.mrf.mxu0
      %v1824 = vadd.f32 %v1799, %v1823
      %1825 = vmatmul.f32.gmra.mxu0 %v1804
      %v1826 = vpop.f32.mrf.mxu0
      %v1827 = vadd.f32 %v1799, %v1826
      %1828 = vdwg.mxu0
      %v1829 = vmul.f32 %v1824, 0.5
      %v1830 = vmul.f32 %v1827, 0.5
      %v1831 = vmul.f32 %v1824, 0.044715
      %v1832 = vmul.f32 %v1827, 0.044715
      %v1833 = vmul.f32 %v1831, %v1824
      %v1834 = vmul.f32 %v1832, %v1827
      %v1835 = vmul.f32 %v1833, %v1824
      %v1836 = vmul.f32 %v1834, %v1827
      %v1837 = vadd.f32 %v1824, %v1835
      %v1838 = vadd.f32 %v1827, %v1836
      %v1839 = vmul.f32 %v1837, 0.7978846
      %v1840 = vmul.f32 %v1838, 0.7978846
      %v1841 = vtanh.pop %v1839
      %v1842 = vtanh.pop %v1840
      %v1843 = vadd.f32 %v1841, 1.0
      %v1844 = vadd.f32 %v1842, 1.0
      %v1845 = vmul.f32 %v1829, %v1843
      %v1846 = vmul.f32 %v1830, %v1844
      %v1847 = vperm.slane %v1130, 5
      %v1849 = vsel %vm1028, %v1845, 0
      %v1852 = vsel %vm1028, %v1846, 0
      %1854 = vmatpush.msra.mxu0 0.0
      %1855 = vmatpush.msra.mxu0 0.0
      %1856 = vmatpush.msra.mxu0 0.0
      %1857 = vmatpush.msra.mxu0 0.0
      %1858 = vmatpush.msra.mxu0 0.0
      %1859 = vmatpush.msra.mxu0 0.0
      %1860 = vmatpush.msra.mxu0 0.0
      %1861 = vmatpush.msra.mxu0 0.0
      %1862 = vmatpush.msra.mxu0 %v1129
      %1863 = vmatpush.msra.mxu0 %v1128
      %1864 = vmatpush.msra.mxu0 %v1127
      %1865 = vmatpush.msra.mxu0 %v1126
      %1866 = vmatpush.msra.mxu0 %v1125
      %1867 = vmatpush.msra.mxu0 %v1124
      %1868 = vmatpush.msra.mxu0 %v1123
      %1869 = vmatpush.msra.mxu0 %v1122
      %1870 = vmatmul.f32.gmra.mxu0 %v1849
      %v1871 = vpop.f32.mrf.mxu0
      %v1872 = vadd.f32 %v1847, %v1871
      %1873 = vmatmul.f32.gmra.mxu0 %v1852
      %v1874 = vpop.f32.mrf.mxu0
      %v1875 = vadd.f32 %v1847, %v1874
      %1876 = vdwg.mxu0
      %v1877 = vadd.f32 %v1797, %v1872
      %v1878 = vadd.f32 %v1798, %v1875
      %v1879 = vsel %vm233, %v1877, 0.0
      %1880 = vadd.xlane.f32.xlu0 %v1879
      %v1881 = vpop.xlane.xlu0 %1880
      %v1882 = vsel %vm233, %v1878, 0.0
      %1883 = vadd.xlane.f32.xlu0 %v1882
      %v1884 = vpop.xlane.xlu0 %1883
      %v1885 = vmul.f32 %v1881, %v934
      %v1886 = vmul.f32 %v1884, %v934
      %v1887 = vsub.f32 %v1877, %v1885
      %v1888 = vsub.f32 %v1878, %v1886
      %v1889 = vmul.f32 %v1887, %v1887
      %v1890 = vmul.f32 %v1888, %v1888
      %v1891 = vsel %vm233, %v1889, 0.0
      %1892 = vadd.xlane.f32.xlu0 %v1891
      %v1893 = vpop.xlane.xlu0 %1892
      %v1894 = vsel %vm233, %v1890, 0.0
      %1895 = vadd.xlane.f32.xlu0 %v1894
      %v1896 = vpop.xlane.xlu0 %1895
      %v1897 = vmul.f32 %v1893, %v934
      %v1898 = vmul.f32 %v1896, %v934
      %v1899 = vadd.f32 %v1897, 1e-05
      %v1900 = vadd.f32 %v1898, 1e-05
      %v1901 = vrsqrt.pop %v1899
      %v1902 = vmul.f32 %v1901, %v1899
      %v1903 = vmul.f32 %v1902, %v1901
      %v1904 = vmul.f32 0.5, %v1903
      %v1905 = vsub.f32 1.5, %v1904
      %v1906 = vmul.f32 %v1901, %v1905
      %vm1907 = vweird.f32 %v1899
      %vm1908 = vweird.f32 %v1901
      %vm1909 = vmor %vm1907, %vm1908
      %v1910 = vsel %vm1909, %v1901, %v1906
      %v1911 = vrsqrt.pop %v1900
      %v1912 = vmul.f32 %v1911, %v1900
      %v1913 = vmul.f32 %v1912, %v1911
      %v1914 = vmul.f32 0.5, %v1913
      %v1915 = vsub.f32 1.5, %v1914
      %v1916 = vmul.f32 %v1911, %v1915
      %vm1917 = vweird.f32 %v1900
      %vm1918 = vweird.f32 %v1911
      %vm1919 = vmor %vm1917, %vm1918
      %v1920 = vsel %vm1919, %v1911, %v1916
      %v1921 = vmul.f32 %v1887, %v1910
      %v1922 = vmul.f32 %v1888, %v1920
      %v1923 = vperm.slane %v1130, 6
      %v1924 = vmul.f32 %v1921, %v1923
      %v1925 = vmul.f32 %v1922, %v1923
      %v1926 = vperm.slane %v1130, 7
      %v1927 = vadd.f32 %v1924, %v1926
      %v1928 = vadd.f32 %v1925, %v1926
    $region126: #{perceiver_io_forward.1} parent=1 // loop_footer
      %s1136 = sadd.s32 1, %s1132
    $region127: #{perceiver_io_forward.1} parent=1 // loop_footer_branch
      %1131 = sbr.rel target = $region123
    $region128: #{perceiver_io_forward.1} parent=1 // loop_exit
      _
    %v1929 = vld [vmem:[%s19] sm:$0xff]
    %v1930 = vld [vmem:[%s19 + $0x8] sm:$0x1]
    %v1931 = vld [vmem:[#allocation11] sm:$0xff]
    %v1932 = vld [vmem:[#allocation11 + $0x8] sm:$0xff]
    %v1933 = vld [vmem:[#allocation11 + $0x10] sm:$0xff]
    %v1934 = vld [vmem:[#allocation11 + $0x18] sm:$0xff]
    %v1935 = vld [vmem:[#allocation13] sm:$0xff]
    %v1936 = vld [vmem:[#allocation13 + $0x8] sm:$0xff]
    %v1937 = vld [vmem:[#allocation13 + $0x10] sm:$0xff]
    %v1938 = vld [vmem:[#allocation13 + $0x18] sm:$0xff]
    %v1939 = vld [vmem:[#allocation14] sm:$0xff]
    %v1940 = vld [vmem:[#allocation14 + $0x8] sm:$0xff]
    %v1941 = vld [vmem:[#allocation14 + $0x10] sm:$0xff]
    %v1942 = vld [vmem:[#allocation14 + $0x18] sm:$0xff]
    %v1943 = vld [vmem:[#allocation16] sm:$0xff]
    %v1944 = vld [vmem:[#allocation16 + $0x8] sm:$0xff]
    %v1945 = vld [vmem:[#allocation16 + $0x10] sm:$0xff]
    %v1946 = vld [vmem:[#allocation16 + $0x18] sm:$0xff]
    %v1947 = vld [vmem:[%s18] sm:$0xff]
    %v1948 = vld [vmem:[%s18 + $0x8] sm:$0xff]
    %v1949 = vld [vmem:[%s18 + $0x10] sm:$0xff]
    %v1950 = vld [vmem:[%s18 + $0x18] sm:$0xff]
    %v1951 = vld [vmem:[%s18 + $0x20] sm:$0xff]
    %v1952 = vld [vmem:[%s18 + $0x28] sm:$0xff]
    %v1953 = vld [vmem:[%s18 + $0x30] sm:$0xff]
    %v1954 = vld [vmem:[%s18 + $0x38] sm:$0xff]
    %v1955 = vperm.slane %v1929, 0
    %v1957 = vsel %vm233, %v206, 0
    %1959 = vmatpush.msra.mxu0 0.0
    %1960 = vmatpush.msra.mxu0 0.0
    %1961 = vmatpush.msra.mxu0 0.0
    %1962 = vmatpush.msra.mxu0 0.0
    %1963 = vmatpush.msra.mxu0 0.0
    %1964 = vmatpush.msra.mxu0 0.0
    %1965 = vmatpush.msra.mxu0 0.0
    %1966 = vmatpush.msra.mxu0 0.0
    %1967 = vmatpush.msra.mxu0 0.0
    %1968 = vmatpush.msra.mxu0 0.0
    %1969 = vmatpush.msra.mxu0 0.0
    %1970 = vmatpush.msra.mxu0 0.0
    %1971 = vmatpush.msra.mxu0 %v1934
    %1972 = vmatpush.msra.mxu0 %v1933
    %1973 = vmatpush.msra.mxu0 %v1932
    %1974 = vmatpush.msra.mxu0 %v1931
    %1975 = vmatmul.f32.gmra.mxu0 %v1957
    %v1976 = vpop.f32.mrf.mxu0
    %v1977 = vadd.f32 %v1955, %v1976
    %1978 = vdwg.mxu0
    %1980 = vrot.lane.b32.xlu0 %v1955, 96
    %v1981 = vpop.permute.xlu0 %1980
    %v1984 = vsel %vm233, %v1137, 0
    %v1987 = vsel %vm233, %v1138, 0
    %1989 = vmatpush.msra.mxu0 0.0
    %1990 = vmatpush.msra.mxu0 0.0
    %1991 = vmatpush.msra.mxu0 0.0
    %1992 = vmatpush.msra.mxu0 0.0
    %1993 = vmatpush.msra.mxu0 0.0
    %1994 = vmatpush.msra.mxu0 0.0
    %1995 = vmatpush.msra.mxu0 0.0
    %1996 = vmatpush.msra.mxu0 0.0
    %1997 = vmatpush.msra.mxu0 0.0
    %1998 = vmatpush.msra.mxu0 0.0
    %1999 = vmatpush.msra.mxu0 0.0
    %2000 = vmatpush.msra.mxu0 0.0
    %2001 = vmatpush.msra.mxu0 %v1938
    %2002 = vmatpush.msra.mxu0 %v1937
    %2003 = vmatpush.msra.mxu0 %v1936
    %2004 = vmatpush.msra.mxu0 %v1935
    %2005 = vmatmul.f32.gmra.mxu0 %v1984
    %v2006 = vpop.f32.mrf.mxu0
    %v2007 = vadd.f32 %v1981, %v2006
    %2008 = vmatmul.f32.gmra.mxu0 %v1987
    %v2009 = vpop.f32.mrf.mxu0
    %v2010 = vadd.f32 %v1981, %v2009
    %2011 = vdwg.mxu0
    %v2013 = vsel %vm302, %v1977, 0
    %v2016 = vsel %vm302, %v2007, 0
    %2018 = vmatpush.xpose.msra.mxu0 0.0
    %2019 = vmatpush.xpose.msra.mxu0 0.0
    %2020 = vmatpush.xpose.msra.mxu0 0.0
    %2021 = vmatpush.xpose.msra.mxu0 0.0
    %2022 = vmatpush.xpose.msra.mxu0 0.0
    %2023 = vmatpush.xpose.msra.mxu0 0.0
    %2024 = vmatpush.xpose.msra.mxu0 0.0
    %2025 = vmatpush.xpose.msra.mxu0 0.0
    %2026 = vmatpush.xpose.msra.mxu0 0.0
    %2027 = vmatpush.xpose.msra.mxu0 0.0
    %2028 = vmatpush.xpose.msra.mxu0 0.0
    %2029 = vmatpush.xpose.msra.mxu0 0.0
    %2030 = vmatpush.xpose.msra.mxu0 0.0
    %2031 = vmatpush.xpose.msra.mxu0 0.0
    %2032 = vmatpush.xpose.msra.mxu0 0.0
    %2033 = vmatpush.xpose.msra.mxu0 %v2016
    %2034 = vmatmul.f32.gmra.mxu0 %v2013
    %v2035 = vpop.f32.mrf.mxu0
    %v2036 = vadd.f32 0.0, %v2035
    %2037 = vdwg.mxu0
    %v2039 = vsel %vm302, %v2010, 0
    %2041 = vmatpush.xpose.msra.mxu0 0.0
    %2042 = vmatpush.xpose.msra.mxu0 0.0
    %2043 = vmatpush.xpose.msra.mxu0 0.0
    %2044 = vmatpush.xpose.msra.mxu0 0.0
    %2045 = vmatpush.xpose.msra.mxu0 0.0
    %2046 = vmatpush.xpose.msra.mxu0 0.0
    %2047 = vmatpush.xpose.msra.mxu0 0.0
    %2048 = vmatpush.xpose.msra.mxu0 0.0
    %2049 = vmatpush.xpose.msra.mxu0 0.0
    %2050 = vmatpush.xpose.msra.mxu0 0.0
    %2051 = vmatpush.xpose.msra.mxu0 0.0
    %2052 = vmatpush.xpose.msra.mxu0 0.0
    %2053 = vmatpush.xpose.msra.mxu0 0.0
    %2054 = vmatpush.xpose.msra.mxu0 0.0
    %2055 = vmatpush.xpose.msra.mxu0 0.0
    %2056 = vmatpush.xpose.msra.mxu0 %v2039
    %2057 = vmatmul.f32.gmra.mxu0 %v2013
    %v2058 = vpop.f32.mrf.mxu0
    %v2059 = vadd.f32 0.0, %v2058
    %2060 = vdwg.mxu0
    %v2061 = vsel %vm302, %v2036, -inf
    %2062 = vmax.xlane.f32.xlu0 %v2061
    %v2063 = vpop.xlane.xlu0 %2062
    %v2064 = vsel %vm302, %v2059, -inf
    %2065 = vmax.xlane.f32.xlu0 %v2064
    %v2066 = vpop.xlane.xlu0 %2065
    %v2067 = vsub.f32 %v2036, %v2063
    %v2068 = vsub.f32 %v2059, %v2066
    %v2069 = vmul.f32 %v2067, 1.442695
    %v2070 = vpow.pop %v2069
    %v2071 = vmul.f32 %v2068, 1.442695
    %v2072 = vpow.pop %v2071
    %v2073 = vsel %vm302, %v2070, 0.0
    %2074 = vadd.xlane.f32.xlu0 %v2073
    %v2075 = vpop.xlane.xlu0 %2074
    %v2076 = vsel %vm302, %v2072, 0.0
    %2077 = vadd.xlane.f32.xlu0 %v2076
    %v2078 = vpop.xlane.xlu0 %2077
    %v2079 = vrcp.pop %v2075
    %v2080 = vrcp.pop %v2078
    %v2081 = vmul.f32 %v2070, %v2079
    %v2082 = vmul.f32 %v2072, %v2080
    %2083 = vrot.lane.b32.xlu0 %v2007, 96
    %v2084 = vpop.permute.xlu0 %2083
    %v2087 = vsel %vm302, %v2081, 0
    %2089 = vmatpush.msra.mxu0 0.0
    %2090 = vmatpush.msra.mxu0 0.0
    %2091 = vmatpush.msra.mxu0 0.0
    %2092 = vmatpush.msra.mxu0 0.0
    %2093 = vmatpush.msra.mxu0 0.0
    %2094 = vmatpush.msra.mxu0 0.0
    %2095 = vmatpush.msra.mxu0 0.0
    %2096 = vmatpush.msra.mxu0 0.0
    %2097 = vmatpush.msra.mxu0 0.0
    %2098 = vmatpush.msra.mxu0 0.0
    %2099 = vmatpush.msra.mxu0 0.0
    %2100 = vmatpush.msra.mxu0 0.0
    %2101 = vmatpush.msra.mxu0 0.0
    %2102 = vmatpush.msra.mxu0 0.0
    %2103 = vmatpush.msra.mxu0 0.0
    %2104 = vmatpush.msra.mxu0 %v2084
    %2105 = vmatmul.f32.gmra.mxu0 %v2087
    %v2106 = vpop.f32.mrf.mxu0
    %v2107 = vadd.f32 0.0, %v2106
    %2108 = vdwg.mxu0
    %2109 = vrot.lane.b32.xlu0 %v2010, 96
    %v2110 = vpop.permute.xlu0 %2109
    %v2113 = vsel %vm302, %v2082, 0
    %2115 = vmatpush.msra.mxu0 0.0
    %2116 = vmatpush.msra.mxu0 0.0
    %2117 = vmatpush.msra.mxu0 0.0
    %2118 = vmatpush.msra.mxu0 0.0
    %2119 = vmatpush.msra.mxu0 0.0
    %2120 = vmatpush.msra.mxu0 0.0
    %2121 = vmatpush.msra.mxu0 0.0
    %2122 = vmatpush.msra.mxu0 0.0
    %2123 = vmatpush.msra.mxu0 0.0
    %2124 = vmatpush.msra.mxu0 0.0
    %2125 = vmatpush.msra.mxu0 0.0
    %2126 = vmatpush.msra.mxu0 0.0
    %2127 = vmatpush.msra.mxu0 0.0
    %2128 = vmatpush.msra.mxu0 0.0
    %2129 = vmatpush.msra.mxu0 0.0
    %2130 = vmatpush.msra.mxu0 %v2110
    %2131 = vmatmul.f32.gmra.mxu0 %v2113
    %v2132 = vpop.f32.mrf.mxu0
    %v2133 = vadd.f32 0.0, %v2132
    %2134 = vdwg.mxu0
    %2135 = vrot.lane.b32.xlu0 %v1977, 120
    %v2136 = vpop.permute.xlu0 %2135
    %2137 = vrot.lane.b32.xlu0 %v2007, 120
    %v2138 = vpop.permute.xlu0 %2137
    %v2139 = vsel %vm302, %v2136, 0
    %v2141 = vsel %vm302, %v2138, 0
    %2143 = vmatpush.xpose.msra.mxu0 0.0
    %2144 = vmatpush.xpose.msra.mxu0 0.0
    %2145 = vmatpush.xpose.msra.mxu0 0.0
    %2146 = vmatpush.xpose.msra.mxu0 0.0
    %2147 = vmatpush.xpose.msra.mxu0 0.0
    %2148 = vmatpush.xpose.msra.mxu0 0.0
    %2149 = vmatpush.xpose.msra.mxu0 0.0
    %2150 = vmatpush.xpose.msra.mxu0 0.0
    %2151 = vmatpush.xpose.msra.mxu0 0.0
    %2152 = vmatpush.xpose.msra.mxu0 0.0
    %2153 = vmatpush.xpose.msra.mxu0 0.0
    %2154 = vmatpush.xpose.msra.mxu0 0.0
    %2155 = vmatpush.xpose.msra.mxu0 0.0
    %2156 = vmatpush.xpose.msra.mxu0 0.0
    %2157 = vmatpush.xpose.msra.mxu0 0.0
    %2158 = vmatpush.xpose.msra.mxu0 %v2141
    %2159 = vmatmul.f32.gmra.mxu0 %v2139
    %v2160 = vpop.f32.mrf.mxu0
    %v2161 = vadd.f32 0.0, %v2160
    %2162 = vdwg.mxu0
    %2163 = vrot.lane.b32.xlu0 %v2010, 120
    %v2164 = vpop.permute.xlu0 %2163
    %v2165 = vsel %vm302, %v2164, 0
    %2167 = vmatpush.xpose.msra.mxu0 0.0
    %2168 = vmatpush.xpose.msra.mxu0 0.0
    %2169 = vmatpush.xpose.msra.mxu0 0.0
    %2170 = vmatpush.xpose.msra.mxu0 0.0
    %2171 = vmatpush.xpose.msra.mxu0 0.0
    %2172 = vmatpush.xpose.msra.mxu0 0.0
    %2173 = vmatpush.xpose.msra.mxu0 0.0
    %2174 = vmatpush.xpose.msra.mxu0 0.0
    %2175 = vmatpush.xpose.msra.mxu0 0.0
    %2176 = vmatpush.xpose.msra.mxu0 0.0
    %2177 = vmatpush.xpose.msra.mxu0 0.0
    %2178 = vmatpush.xpose.msra.mxu0 0.0
    %2179 = vmatpush.xpose.msra.mxu0 0.0
    %2180 = vmatpush.xpose.msra.mxu0 0.0
    %2181 = vmatpush.xpose.msra.mxu0 0.0
    %2182 = vmatpush.xpose.msra.mxu0 %v2165
    %2183 = vmatmul.f32.gmra.mxu0 %v2139
    %v2184 = vpop.f32.mrf.mxu0
    %v2185 = vadd.f32 0.0, %v2184
    %2186 = vdwg.mxu0
    %v2187 = vsel %vm302, %v2161, -inf
    %2188 = vmax.xlane.f32.xlu0 %v2187
    %v2189 = vpop.xlane.xlu0 %2188
    %v2190 = vsel %vm302, %v2185, -inf
    %2191 = vmax.xlane.f32.xlu0 %v2190
    %v2192 = vpop.xlane.xlu0 %2191
    %v2193 = vsub.f32 %v2161, %v2189
    %v2194 = vsub.f32 %v2185, %v2192
    %v2195 = vmul.f32 %v2193, 1.442695
    %v2196 = vpow.pop %v2195
    %v2197 = vmul.f32 %v2194, 1.442695
    %v2198 = vpow.pop %v2197
    %v2199 = vsel %vm302, %v2196, 0.0
    %2200 = vadd.xlane.f32.xlu0 %v2199
    %v2201 = vpop.xlane.xlu0 %2200
    %v2202 = vsel %vm302, %v2198, 0.0
    %2203 = vadd.xlane.f32.xlu0 %v2202
    %v2204 = vpop.xlane.xlu0 %2203
    %v2205 = vrcp.pop %v2201
    %v2206 = vrcp.pop %v2204
    %v2207 = vmul.f32 %v2196, %v2205
    %v2208 = vmul.f32 %v2198, %v2206
    %2209 = vrot.lane.b32.xlu0 %v2007, 88
    %v2210 = vpop.permute.xlu0 %2209
    %v2213 = vsel %vm302, %v2207, 0
    %2215 = vmatpush.msra.mxu0 0.0
    %2216 = vmatpush.msra.mxu0 0.0
    %2217 = vmatpush.msra.mxu0 0.0
    %2218 = vmatpush.msra.mxu0 0.0
    %2219 = vmatpush.msra.mxu0 0.0
    %2220 = vmatpush.msra.mxu0 0.0
    %2221 = vmatpush.msra.mxu0 0.0
    %2222 = vmatpush.msra.mxu0 0.0
    %2223 = vmatpush.msra.mxu0 0.0
    %2224 = vmatpush.msra.mxu0 0.0
    %2225 = vmatpush.msra.mxu0 0.0
    %2226 = vmatpush.msra.mxu0 0.0
    %2227 = vmatpush.msra.mxu0 0.0
    %2228 = vmatpush.msra.mxu0 0.0
    %2229 = vmatpush.msra.mxu0 0.0
    %2230 = vmatpush.msra.mxu0 %v2210
    %2231 = vmatmul.f32.gmra.mxu0 %v2213
    %v2232 = vpop.f32.mrf.mxu0
    %v2233 = vadd.f32 0.0, %v2232
    %2234 = vdwg.mxu0
    %2235 = vrot.lane.b32.xlu0 %v2010, 88
    %v2236 = vpop.permute.xlu0 %2235
    %v2239 = vsel %vm302, %v2208, 0
    %2241 = vmatpush.msra.mxu0 0.0
    %2242 = vmatpush.msra.mxu0 0.0
    %2243 = vmatpush.msra.mxu0 0.0
    %2244 = vmatpush.msra.mxu0 0.0
    %2245 = vmatpush.msra.mxu0 0.0
    %2246 = vmatpush.msra.mxu0 0.0
    %2247 = vmatpush.msra.mxu0 0.0
    %2248 = vmatpush.msra.mxu0 0.0
    %2249 = vmatpush.msra.mxu0 0.0
    %2250 = vmatpush.msra.mxu0 0.0
    %2251 = vmatpush.msra.mxu0 0.0
    %2252 = vmatpush.msra.mxu0 0.0
    %2253 = vmatpush.msra.mxu0 0.0
    %2254 = vmatpush.msra.mxu0 0.0
    %2255 = vmatpush.msra.mxu0 0.0
    %2256 = vmatpush.msra.mxu0 %v2236
    %2257 = vmatmul.f32.gmra.mxu0 %v2239
    %v2258 = vpop.f32.mrf.mxu0
    %v2259 = vadd.f32 0.0, %v2258
    %2260 = vdwg.mxu0
    %2261 = vrot.lane.b32.xlu0 %v1977, 112
    %v2262 = vpop.permute.xlu0 %2261
    %2263 = vrot.lane.b32.xlu0 %v2007, 112
    %v2264 = vpop.permute.xlu0 %2263
    %v2265 = vsel %vm302, %v2262, 0
    %v2267 = vsel %vm302, %v2264, 0
    %2269 = vmatpush.xpose.msra.mxu0 0.0
    %2270 = vmatpush.xpose.msra.mxu0 0.0
    %2271 = vmatpush.xpose.msra.mxu0 0.0
    %2272 = vmatpush.xpose.msra.mxu0 0.0
    %2273 = vmatpush.xpose.msra.mxu0 0.0
    %2274 = vmatpush.xpose.msra.mxu0 0.0
    %2275 = vmatpush.xpose.msra.mxu0 0.0
    %2276 = vmatpush.xpose.msra.mxu0 0.0
    %2277 = vmatpush.xpose.msra.mxu0 0.0
    %2278 = vmatpush.xpose.msra.mxu0 0.0
    %2279 = vmatpush.xpose.msra.mxu0 0.0
    %2280 = vmatpush.xpose.msra.mxu0 0.0
    %2281 = vmatpush.xpose.msra.mxu0 0.0
    %2282 = vmatpush.xpose.msra.mxu0 0.0
    %2283 = vmatpush.xpose.msra.mxu0 0.0
    %2284 = vmatpush.xpose.msra.mxu0 %v2267
    %2285 = vmatmul.f32.gmra.mxu0 %v2265
    %v2286 = vpop.f32.mrf.mxu0
    %v2287 = vadd.f32 0.0, %v2286
    %2288 = vdwg.mxu0
    %2289 = vrot.lane.b32.xlu0 %v2010, 112
    %v2290 = vpop.permute.xlu0 %2289
    %v2291 = vsel %vm302, %v2290, 0
    %2293 = vmatpush.xpose.msra.mxu0 0.0
    %2294 = vmatpush.xpose.msra.mxu0 0.0
    %2295 = vmatpush.xpose.msra.mxu0 0.0
    %2296 = vmatpush.xpose.msra.mxu0 0.0
    %2297 = vmatpush.xpose.msra.mxu0 0.0
    %2298 = vmatpush.xpose.msra.mxu0 0.0
    %2299 = vmatpush.xpose.msra.mxu0 0.0
    %2300 = vmatpush.xpose.msra.mxu0 0.0
    %2301 = vmatpush.xpose.msra.mxu0 0.0
    %2302 = vmatpush.xpose.msra.mxu0 0.0
    %2303 = vmatpush.xpose.msra.mxu0 0.0
    %2304 = vmatpush.xpose.msra.mxu0 0.0
    %2305 = vmatpush.xpose.msra.mxu0 0.0
    %2306 = vmatpush.xpose.msra.mxu0 0.0
    %2307 = vmatpush.xpose.msra.mxu0 0.0
    %2308 = vmatpush.xpose.msra.mxu0 %v2291
    %2309 = vmatmul.f32.gmra.mxu0 %v2265
    %v2310 = vpop.f32.mrf.mxu0
    %v2311 = vadd.f32 0.0, %v2310
    %2312 = vdwg.mxu0
    %v2313 = vsel %vm302, %v2287, -inf
    %2314 = vmax.xlane.f32.xlu0 %v2313
    %v2315 = vpop.xlane.xlu0 %2314
    %v2316 = vsel %vm302, %v2311, -inf
    %2317 = vmax.xlane.f32.xlu0 %v2316
    %v2318 = vpop.xlane.xlu0 %2317
    %v2319 = vsub.f32 %v2287, %v2315
    %v2320 = vsub.f32 %v2311, %v2318
    %v2321 = vmul.f32 %v2319, 1.442695
    %v2322 = vpow.pop %v2321
    %v2323 = vmul.f32 %v2320, 1.442695
    %v2324 = vpow.pop %v2323
    %v2325 = vsel %vm302, %v2322, 0.0
    %2326 = vadd.xlane.f32.xlu0 %v2325
    %v2327 = vpop.xlane.xlu0 %2326
    %v2328 = vsel %vm302, %v2324, 0.0
    %2329 = vadd.xlane.f32.xlu0 %v2328
    %v2330 = vpop.xlane.xlu0 %2329
    %v2331 = vrcp.pop %v2327
    %v2332 = vrcp.pop %v2330
    %v2333 = vmul.f32 %v2322, %v2331
    %v2334 = vmul.f32 %v2324, %v2332
    %2335 = vrot.lane.b32.xlu0 %v2007, 80
    %v2336 = vpop.permute.xlu0 %2335
    %v2339 = vsel %vm302, %v2333, 0
    %2341 = vmatpush.msra.mxu0 0.0
    %2342 = vmatpush.msra.mxu0 0.0
    %2343 = vmatpush.msra.mxu0 0.0
    %2344 = vmatpush.msra.mxu0 0.0
    %2345 = vmatpush.msra.mxu0 0.0
    %2346 = vmatpush.msra.mxu0 0.0
    %2347 = vmatpush.msra.mxu0 0.0
    %2348 = vmatpush.msra.mxu0 0.0
    %2349 = vmatpush.msra.mxu0 0.0
    %2350 = vmatpush.msra.mxu0 0.0
    %2351 = vmatpush.msra.mxu0 0.0
    %2352 = vmatpush.msra.mxu0 0.0
    %2353 = vmatpush.msra.mxu0 0.0
    %2354 = vmatpush.msra.mxu0 0.0
    %2355 = vmatpush.msra.mxu0 0.0
    %2356 = vmatpush.msra.mxu0 %v2336
    %2357 = vmatmul.f32.gmra.mxu0 %v2339
    %v2358 = vpop.f32.mrf.mxu0
    %v2359 = vadd.f32 0.0, %v2358
    %2360 = vdwg.mxu0
    %2361 = vrot.lane.b32.xlu0 %v2010, 80
    %v2362 = vpop.permute.xlu0 %2361
    %v2365 = vsel %vm302, %v2334, 0
    %2367 = vmatpush.msra.mxu0 0.0
    %2368 = vmatpush.msra.mxu0 0.0
    %2369 = vmatpush.msra.mxu0 0.0
    %2370 = vmatpush.msra.mxu0 0.0
    %2371 = vmatpush.msra.mxu0 0.0
    %2372 = vmatpush.msra.mxu0 0.0
    %2373 = vmatpush.msra.mxu0 0.0
    %2374 = vmatpush.msra.mxu0 0.0
    %2375 = vmatpush.msra.mxu0 0.0
    %2376 = vmatpush.msra.mxu0 0.0
    %2377 = vmatpush.msra.mxu0 0.0
    %2378 = vmatpush.msra.mxu0 0.0
    %2379 = vmatpush.msra.mxu0 0.0
    %2380 = vmatpush.msra.mxu0 0.0
    %2381 = vmatpush.msra.mxu0 0.0
    %2382 = vmatpush.msra.mxu0 %v2362
    %2383 = vmatmul.f32.gmra.mxu0 %v2365
    %v2384 = vpop.f32.mrf.mxu0
    %v2385 = vadd.f32 0.0, %v2384
    %2386 = vdwg.mxu0
    %2387 = vrot.lane.b32.xlu0 %v1977, 104
    %v2388 = vpop.permute.xlu0 %2387
    %2389 = vrot.lane.b32.xlu0 %v2007, 104
    %v2390 = vpop.permute.xlu0 %2389
    %v2391 = vsel %vm302, %v2388, 0
    %v2393 = vsel %vm302, %v2390, 0
    %2395 = vmatpush.xpose.msra.mxu0 0.0
    %2396 = vmatpush.xpose.msra.mxu0 0.0
    %2397 = vmatpush.xpose.msra.mxu0 0.0
    %2398 = vmatpush.xpose.msra.mxu0 0.0
    %2399 = vmatpush.xpose.msra.mxu0 0.0
    %2400 = vmatpush.xpose.msra.mxu0 0.0
    %2401 = vmatpush.xpose.msra.mxu0 0.0
    %2402 = vmatpush.xpose.msra.mxu0 0.0
    %2403 = vmatpush.xpose.msra.mxu0 0.0
    %2404 = vmatpush.xpose.msra.mxu0 0.0
    %2405 = vmatpush.xpose.msra.mxu0 0.0
    %2406 = vmatpush.xpose.msra.mxu0 0.0
    %2407 = vmatpush.xpose.msra.mxu0 0.0
    %2408 = vmatpush.xpose.msra.mxu0 0.0
    %2409 = vmatpush.xpose.msra.mxu0 0.0
    %2410 = vmatpush.xpose.msra.mxu0 %v2393
    %2411 = vmatmul.f32.gmra.mxu0 %v2391
    %v2412 = vpop.f32.mrf.mxu0
    %v2413 = vadd.f32 0.0, %v2412
    %2414 = vdwg.mxu0
    %2415 = vrot.lane.b32.xlu0 %v2010, 104
    %v2416 = vpop.permute.xlu0 %2415
    %v2417 = vsel %vm302, %v2416, 0
    %2419 = vmatpush.xpose.msra.mxu0 0.0
    %2420 = vmatpush.xpose.msra.mxu0 0.0
    %2421 = vmatpush.xpose.msra.mxu0 0.0
    %2422 = vmatpush.xpose.msra.mxu0 0.0
    %2423 = vmatpush.xpose.msra.mxu0 0.0
    %2424 = vmatpush.xpose.msra.mxu0 0.0
    %2425 = vmatpush.xpose.msra.mxu0 0.0
    %2426 = vmatpush.xpose.msra.mxu0 0.0
    %2427 = vmatpush.xpose.msra.mxu0 0.0
    %2428 = vmatpush.xpose.msra.mxu0 0.0
    %2429 = vmatpush.xpose.msra.mxu0 0.0
    %2430 = vmatpush.xpose.msra.mxu0 0.0
    %2431 = vmatpush.xpose.msra.mxu0 0.0
    %2432 = vmatpush.xpose.msra.mxu0 0.0
    %2433 = vmatpush.xpose.msra.mxu0 0.0
    %2434 = vmatpush.xpose.msra.mxu0 %v2417
    %2435 = vmatmul.f32.gmra.mxu0 %v2391
    %v2436 = vpop.f32.mrf.mxu0
    %v2437 = vadd.f32 0.0, %v2436
    %2438 = vdwg.mxu0
    %v2439 = vsel %vm302, %v2413, -inf
    %2440 = vmax.xlane.f32.xlu0 %v2439
    %v2441 = vpop.xlane.xlu0 %2440
    %v2442 = vsel %vm302, %v2437, -inf
    %2443 = vmax.xlane.f32.xlu0 %v2442
    %v2444 = vpop.xlane.xlu0 %2443
    %v2445 = vsub.f32 %v2413, %v2441
    %v2446 = vsub.f32 %v2437, %v2444
    %v2447 = vmul.f32 %v2445, 1.442695
    %v2448 = vpow.pop %v2447
    %v2449 = vmul.f32 %v2446, 1.442695
    %v2450 = vpow.pop %v2449
    %v2451 = vsel %vm302, %v2448, 0.0
    %2452 = vadd.xlane.f32.xlu0 %v2451
    %v2453 = vpop.xlane.xlu0 %2452
    %v2454 = vsel %vm302, %v2450, 0.0
    %2455 = vadd.xlane.f32.xlu0 %v2454
    %v2456 = vpop.xlane.xlu0 %2455
    %v2457 = vrcp.pop %v2453
    %v2458 = vrcp.pop %v2456
    %v2459 = vmul.f32 %v2448, %v2457
    %v2460 = vmul.f32 %v2450, %v2458
    %2461 = vrot.lane.b32.xlu0 %v2007, 72
    %v2462 = vpop.permute.xlu0 %2461
    %v2465 = vsel %vm302, %v2459, 0
    %2467 = vmatpush.msra.mxu0 0.0
    %2468 = vmatpush.msra.mxu0 0.0
    %2469 = vmatpush.msra.mxu0 0.0
    %2470 = vmatpush.msra.mxu0 0.0
    %2471 = vmatpush.msra.mxu0 0.0
    %2472 = vmatpush.msra.mxu0 0.0
    %2473 = vmatpush.msra.mxu0 0.0
    %2474 = vmatpush.msra.mxu0 0.0
    %2475 = vmatpush.msra.mxu0 0.0
    %2476 = vmatpush.msra.mxu0 0.0
    %2477 = vmatpush.msra.mxu0 0.0
    %2478 = vmatpush.msra.mxu0 0.0
    %2479 = vmatpush.msra.mxu0 0.0
    %2480 = vmatpush.msra.mxu0 0.0
    %2481 = vmatpush.msra.mxu0 0.0
    %2482 = vmatpush.msra.mxu0 %v2462
    %2483 = vmatmul.f32.gmra.mxu0 %v2465
    %v2484 = vpop.f32.mrf.mxu0
    %v2485 = vadd.f32 0.0, %v2484
    %2486 = vdwg.mxu0
    %2487 = vrot.lane.b32.xlu0 %v2010, 72
    %v2488 = vpop.permute.xlu0 %2487
    %v2491 = vsel %vm302, %v2460, 0
    %2493 = vmatpush.msra.mxu0 0.0
    %2494 = vmatpush.msra.mxu0 0.0
    %2495 = vmatpush.msra.mxu0 0.0
    %2496 = vmatpush.msra.mxu0 0.0
    %2497 = vmatpush.msra.mxu0 0.0
    %2498 = vmatpush.msra.mxu0 0.0
    %2499 = vmatpush.msra.mxu0 0.0
    %2500 = vmatpush.msra.mxu0 0.0
    %2501 = vmatpush.msra.mxu0 0.0
    %2502 = vmatpush.msra.mxu0 0.0
    %2503 = vmatpush.msra.mxu0 0.0
    %2504 = vmatpush.msra.mxu0 0.0
    %2505 = vmatpush.msra.mxu0 0.0
    %2506 = vmatpush.msra.mxu0 0.0
    %2507 = vmatpush.msra.mxu0 0.0
    %2508 = vmatpush.msra.mxu0 %v2488
    %2509 = vmatmul.f32.gmra.mxu0 %v2491
    %v2510 = vpop.f32.mrf.mxu0
    %v2511 = vadd.f32 0.0, %v2510
    %2512 = vdwg.mxu0
    %2515 = vrot.lane.b32.xlu0 %v2233, 8
    %v2516 = vpop.permute.xlu0 %2515
    %2517 = vrot.lane.b32.xlu0 %v2259, 8
    %v2518 = vpop.permute.xlu0 %2517
    %2523 = vrot.lane.b32.xlu0 %v2359, 16
    %v2524 = vpop.permute.xlu0 %2523
    %2525 = vrot.lane.b32.xlu0 %v2385, 16
    %v2526 = vpop.permute.xlu0 %2525
    %2531 = vrot.lane.b32.xlu0 %v2485, 24
    %v2532 = vpop.permute.xlu0 %2531
    %2533 = vrot.lane.b32.xlu0 %v2511, 24
    %v2534 = vpop.permute.xlu0 %2533
    %v2537 = vsel %vm302, %v2107, %v2516
    %v2538 = vsel %vm302, %v2133, %v2518
    %v2539 = vsel %vm358, %v2537, %v2524
    %v2540 = vsel %vm358, %v2538, %v2526
    %v2541 = vsel %vm887, %v2539, %v2532
    %v2542 = vsel %vm887, %v2540, %v2534
    %v2543 = vperm.slane %v1929, 1
    %v2545 = vsel %vm233, %v2541, 0
    %v2548 = vsel %vm233, %v2542, 0
    %2550 = vmatpush.msra.mxu0 0.0
    %2551 = vmatpush.msra.mxu0 0.0
    %2552 = vmatpush.msra.mxu0 0.0
    %2553 = vmatpush.msra.mxu0 0.0
    %2554 = vmatpush.msra.mxu0 0.0
    %2555 = vmatpush.msra.mxu0 0.0
    %2556 = vmatpush.msra.mxu0 0.0
    %2557 = vmatpush.msra.mxu0 0.0
    %2558 = vmatpush.msra.mxu0 0.0
    %2559 = vmatpush.msra.mxu0 0.0
    %2560 = vmatpush.msra.mxu0 0.0
    %2561 = vmatpush.msra.mxu0 0.0
    %2562 = vmatpush.msra.mxu0 %v1942
    %2563 = vmatpush.msra.mxu0 %v1941
    %2564 = vmatpush.msra.mxu0 %v1940
    %2565 = vmatpush.msra.mxu0 %v1939
    %2566 = vmatmul.f32.gmra.mxu0 %v2545
    %v2567 = vpop.f32.mrf.mxu0
    %v2568 = vadd.f32 %v2543, %v2567
    %2569 = vmatmul.f32.gmra.mxu0 %v2548
    %v2570 = vpop.f32.mrf.mxu0
    %v2571 = vadd.f32 %v2543, %v2570
    %2572 = vdwg.mxu0
    %v2573 = vadd.f32 %v206, %v2568
    %v2574 = vadd.f32 %v206, %v2571
    %v2575 = vsel %vm233, %v2573, 0.0
    %2576 = vadd.xlane.f32.xlu0 %v2575
    %v2577 = vpop.xlane.xlu0 %2576
    %v2578 = vsel %vm233, %v2574, 0.0
    %2579 = vadd.xlane.f32.xlu0 %v2578
    %v2580 = vpop.xlane.xlu0 %2579
    %v2581 = vmul.f32 %v2577, %v934
    %v2582 = vmul.f32 %v2580, %v934
    %v2583 = vsub.f32 %v2573, %v2581
    %v2584 = vsub.f32 %v2574, %v2582
    %v2585 = vmul.f32 %v2583, %v2583
    %v2586 = vmul.f32 %v2584, %v2584
    %v2587 = vsel %vm233, %v2585, 0.0
    %2588 = vadd.xlane.f32.xlu0 %v2587
    %v2589 = vpop.xlane.xlu0 %2588
    %v2590 = vsel %vm233, %v2586, 0.0
    %2591 = vadd.xlane.f32.xlu0 %v2590
    %v2592 = vpop.xlane.xlu0 %2591
    %v2593 = vmul.f32 %v2589, %v934
    %v2594 = vmul.f32 %v2592, %v934
    %v2595 = vadd.f32 %v2593, 1e-05
    %v2596 = vadd.f32 %v2594, 1e-05
    %v2597 = vrsqrt.pop %v2595
    %v2598 = vmul.f32 %v2597, %v2595
    %v2599 = vmul.f32 %v2598, %v2597
    %v2600 = vmul.f32 0.5, %v2599
    %v2601 = vsub.f32 1.5, %v2600
    %v2602 = vmul.f32 %v2597, %v2601
    %vm2603 = vweird.f32 %v2595
    %vm2604 = vweird.f32 %v2597
    %vm2605 = vmor %vm2603, %vm2604
    %v2606 = vsel %vm2605, %v2597, %v2602
    %v2607 = vrsqrt.pop %v2596
    %v2608 = vmul.f32 %v2607, %v2596
    %v2609 = vmul.f32 %v2608, %v2607
    %v2610 = vmul.f32 0.5, %v2609
    %v2611 = vsub.f32 1.5, %v2610
    %v2612 = vmul.f32 %v2607, %v2611
    %vm2613 = vweird.f32 %v2596
    %vm2614 = vweird.f32 %v2607
    %vm2615 = vmor %vm2613, %vm2614
    %v2616 = vsel %vm2615, %v2607, %v2612
    %v2617 = vmul.f32 %v2583, %v2606
    %v2618 = vmul.f32 %v2584, %v2616
    %v2619 = vperm.slane %v1929, 2
    %v2620 = vmul.f32 %v2617, %v2619
    %v2621 = vmul.f32 %v2618, %v2619
    %v2622 = vperm.slane %v1929, 3
    %v2623 = vadd.f32 %v2620, %v2622
    %v2624 = vadd.f32 %v2621, %v2622
    %v2625 = vperm.slane %v1929, 4
    %v2627 = vsel %vm233, %v2623, 0
    %v2630 = vsel %vm233, %v2624, 0
    %2632 = vmatpush.msra.mxu0 0.0
    %2633 = vmatpush.msra.mxu0 0.0
    %2634 = vmatpush.msra.mxu0 0.0
    %2635 = vmatpush.msra.mxu0 0.0
    %2636 = vmatpush.msra.mxu0 0.0
    %2637 = vmatpush.msra.mxu0 0.0
    %2638 = vmatpush.msra.mxu0 0.0
    %2639 = vmatpush.msra.mxu0 0.0
    %2640 = vmatpush.msra.mxu0 0.0
    %2641 = vmatpush.msra.mxu0 0.0
    %2642 = vmatpush.msra.mxu0 0.0
    %2643 = vmatpush.msra.mxu0 0.0
    %2644 = vmatpush.msra.mxu0 %v1946
    %2645 = vmatpush.msra.mxu0 %v1945
    %2646 = vmatpush.msra.mxu0 %v1944
    %2647 = vmatpush.msra.mxu0 %v1943
    %2648 = vmatmul.f32.gmra.mxu0 %v2627
    %v2649 = vpop.f32.mrf.mxu0
    %v2650 = vadd.f32 %v2625, %v2649
    %2651 = vmatmul.f32.gmra.mxu0 %v2630
    %v2652 = vpop.f32.mrf.mxu0
    %v2653 = vadd.f32 %v2625, %v2652
    %2654 = vdwg.mxu0
    %v2655 = vmul.f32 %v2650, 0.5
    %v2656 = vmul.f32 %v2653, 0.5
    %v2657 = vmul.f32 %v2650, 0.044715
    %v2658 = vmul.f32 %v2653, 0.044715
    %v2659 = vmul.f32 %v2657, %v2650
    %v2660 = vmul.f32 %v2658, %v2653
    %v2661 = vmul.f32 %v2659, %v2650
    %v2662 = vmul.f32 %v2660, %v2653
    %v2663 = vadd.f32 %v2650, %v2661
    %v2664 = vadd.f32 %v2653, %v2662
    %v2665 = vmul.f32 %v2663, 0.7978846
    %v2666 = vmul.f32 %v2664, 0.7978846
    %v2667 = vtanh.pop %v2665
    %v2668 = vtanh.pop %v2666
    %v2669 = vadd.f32 %v2667, 1.0
    %v2670 = vadd.f32 %v2668, 1.0
    %v2671 = vmul.f32 %v2655, %v2669
    %v2672 = vmul.f32 %v2656, %v2670
    %v2673 = vperm.slane %v1929, 5
    %v2675 = vsel %vm1028, %v2671, 0
    %v2678 = vsel %vm1028, %v2672, 0
    %2680 = vmatpush.msra.mxu0 0.0
    %2681 = vmatpush.msra.mxu0 0.0
    %2682 = vmatpush.msra.mxu0 0.0
    %2683 = vmatpush.msra.mxu0 0.0
    %2684 = vmatpush.msra.mxu0 0.0
    %2685 = vmatpush.msra.mxu0 0.0
    %2686 = vmatpush.msra.mxu0 0.0
    %2687 = vmatpush.msra.mxu0 0.0
    %2688 = vmatpush.msra.mxu0 %v1954
    %2689 = vmatpush.msra.mxu0 %v1953
    %2690 = vmatpush.msra.mxu0 %v1952
    %2691 = vmatpush.msra.mxu0 %v1951
    %2692 = vmatpush.msra.mxu0 %v1950
    %2693 = vmatpush.msra.mxu0 %v1949
    %2694 = vmatpush.msra.mxu0 %v1948
    %2695 = vmatpush.msra.mxu0 %v1947
    %2696 = vmatmul.f32.gmra.mxu0 %v2675
    %v2697 = vpop.f32.mrf.mxu0
    %v2698 = vadd.f32 %v2673, %v2697
    %2699 = vmatmul.f32.gmra.mxu0 %v2678
    %v2700 = vpop.f32.mrf.mxu0
    %v2701 = vadd.f32 %v2673, %v2700
    %2702 = vdwg.mxu0
    %v2703 = vadd.f32 %v2623, %v2698
    %v2704 = vadd.f32 %v2624, %v2701
    %v2705 = vsel %vm233, %v2703, 0.0
    %2706 = vadd.xlane.f32.xlu0 %v2705
    %v2707 = vpop.xlane.xlu0 %2706
    %v2708 = vsel %vm233, %v2704, 0.0
    %2709 = vadd.xlane.f32.xlu0 %v2708
    %v2710 = vpop.xlane.xlu0 %2709
    %v2711 = vmul.f32 %v2707, %v934
    %v2712 = vmul.f32 %v2710, %v934
    %v2713 = vsub.f32 %v2703, %v2711
    %v2714 = vsub.f32 %v2704, %v2712
    %v2715 = vmul.f32 %v2713, %v2713
    %v2716 = vmul.f32 %v2714, %v2714
    %v2717 = vsel %vm233, %v2715, 0.0
    %2718 = vadd.xlane.f32.xlu0 %v2717
    %v2719 = vpop.xlane.xlu0 %2718
    %v2720 = vsel %vm233, %v2716, 0.0
    %2721 = vadd.xlane.f32.xlu0 %v2720
    %v2722 = vpop.xlane.xlu0 %2721
    %v2723 = vmul.f32 %v2719, %v934
    %v2724 = vmul.f32 %v2722, %v934
    %v2725 = vadd.f32 %v2723, 1e-05
    %v2726 = vadd.f32 %v2724, 1e-05
    %v2727 = vrsqrt.pop %v2725
    %v2728 = vmul.f32 %v2727, %v2725
    %v2729 = vmul.f32 %v2728, %v2727
    %v2730 = vmul.f32 0.5, %v2729
    %v2731 = vsub.f32 1.5, %v2730
    %v2732 = vmul.f32 %v2727, %v2731
    %vm2733 = vweird.f32 %v2725
    %vm2734 = vweird.f32 %v2727
    %vm2735 = vmor %vm2733, %vm2734
    %v2736 = vsel %vm2735, %v2727, %v2732
    %v2737 = vrsqrt.pop %v2726
    %v2738 = vmul.f32 %v2737, %v2726
    %v2739 = vmul.f32 %v2738, %v2737
    %v2740 = vmul.f32 0.5, %v2739
    %v2741 = vsub.f32 1.5, %v2740
    %v2742 = vmul.f32 %v2737, %v2741
    %vm2743 = vweird.f32 %v2726
    %vm2744 = vweird.f32 %v2737
    %vm2745 = vmor %vm2743, %vm2744
    %v2746 = vsel %vm2745, %v2737, %v2742
    %v2747 = vmul.f32 %v2713, %v2736
    %v2748 = vmul.f32 %v2714, %v2746
    %v2749 = vperm.slane %v1929, 6
    %v2750 = vmul.f32 %v2747, %v2749
    %v2751 = vmul.f32 %v2748, %v2749
    %v2752 = vperm.slane %v1929, 7
    %v2753 = vadd.f32 %v2750, %v2752
    %v2754 = vadd.f32 %v2751, %v2752
    %v2755 = vld [vmem:[%s20] sm:$0xff]
    %v2756 = vld [vmem:[%s20 + $0x8] sm:$0xff]
    %v2757 = vld [vmem:[%s20 + $0x10] sm:$0xff]
    %v2758 = vld [vmem:[%s20 + $0x18] sm:$0xff]
    %v2759 = vperm.slane %v1930, 0
    %v2761 = vsel %vm233, %v2753, 0
    %v2764 = vsel %vm233, %v2754, 0
    %2766 = vmatpush.msra.mxu0 0.0
    %2767 = vmatpush.msra.mxu0 0.0
    %2768 = vmatpush.msra.mxu0 0.0
    %2769 = vmatpush.msra.mxu0 0.0
    %2770 = vmatpush.msra.mxu0 0.0
    %2771 = vmatpush.msra.mxu0 0.0
    %2772 = vmatpush.msra.mxu0 0.0
    %2773 = vmatpush.msra.mxu0 0.0
    %2774 = vmatpush.msra.mxu0 0.0
    %2775 = vmatpush.msra.mxu0 0.0
    %2776 = vmatpush.msra.mxu0 0.0
    %2777 = vmatpush.msra.mxu0 0.0
    %2778 = vmatpush.msra.mxu0 %v2758
    %2779 = vmatpush.msra.mxu0 %v2757
    %2780 = vmatpush.msra.mxu0 %v2756
    %2781 = vmatpush.msra.mxu0 %v2755
    %2782 = vmatmul.f32.gmra.mxu0 %v2761
    %v2783 = vpop.f32.mrf.mxu0
    %v2784 = vadd.f32 %v2759, %v2783
    %2785 = vmatmul.f32.gmra.mxu0 %v2764
    %v2786 = vpop.f32.mrf.mxu0
    %v2787 = vadd.f32 %v2759, %v2786
    %2788 = vdwg.mxu0
    %2789 = vst.msk [vmem:[#allocation17] sm:$0xff] %vm358, %v2784
    %2790 = vst.msk [vmem:[#allocation17 + $0x8] sm:$0xff] %vm358, %v2787
    // Predicated region
    $region129: #{perceiver_io_forward.1} parent=1 // pred_check
      _
    $region130: #{perceiver_io_forward.1} parent=1 // pred_check_branch
      %2792 = sbr.rel (0) target = $region132
    $region131: #{perceiver_io_forward.1} parent=1 // pred_region
      %2794 = vsyncadd [#allocation4], 0
      %s2795 = sshll.u32 [#allocation17], 4
      %s2796 = int_to_ptr.vmem [resolvable:$true] %s2795
      %s2797 = sshll.u32 %s21, 4
      %s2798 = int_to_ptr.hbm [resolvable:$true] %s2797
      %2803 = dma.vmem_to_hbm [thread:$0]  %s2796, 256, %s2798, [#allocation4], 128, 128, 8
    $region132: #{perceiver_io_forward.1} parent=1 // pred_fallthru
      _
    // Predicated region
    $region133: #{perceiver_io_forward.1} parent=1 // pred_check
      _
    $region134: #{perceiver_io_forward.1} parent=1 // pred_check_branch
      %2805 = sbr.rel (0) target = $region136
    $region135: #{perceiver_io_forward.1} parent=1 // pred_region
      %2807 = dma.done [#allocation4], 256
    $region136: #{perceiver_io_forward.1} parent=1 // pred_fallthru
      _
    %2808 = vsyncpa [#allocation3], 1
    %2809 = vsyncpa [#allocation6], 1
    %2810 = vsyncpa [#allocation9], 1
    %2811 = vsyncpa [#allocation12], 1
    %2812 = vsyncpa [#allocation15], 1
    %2813 = vsyncpa [#allocation4], 1

</llo_original>
